<compile_context>
chip_gen: v5e
topology: v5e:2x2
jax: 0.10.0
libtpu: 0.0.40
codegen_flags: <defaults>
</compile_context>

<pallas_src>
import functools

import jax
import jax.numpy as jnp
from jax import lax
from jax.experimental import pallas as pl
from jax.experimental.pallas import tpu as pltpu

EPS = 1e-6
NUM_GROUPS = 32
HIGHEST = jax.lax.Precision.HIGHEST

# Above this im2col-slab size (bf16 bytes) the conv switches to the accumulating
# per-ky form (3 matmuls of K=3C) so the (HW, 9C) patch matrix never exists.
IM2COL_SLAB_LIMIT_BYTES = 12 * 1024 * 1024


def _swish(v):
    return v * jax.nn.sigmoid(v)


def _use_single_im2col(HW, C):
    return HW * 9 * C * 2 <= IM2COL_SLAB_LIMIT_BYTES


def _conv_slab_bytes(HW, C):
    return HW * (9 if _use_single_im2col(HW, C) else 3) * C * 2


def _resnet_block_kernel(mode, *refs):
    if mode == "identity":
        (x_ref, proj_ref, gA1_ref, gB1_ref, g1_ref, be1_ref, w1_ref, b1_ref,
         gA2_ref, gB2_ref, g2_ref, be2_ref, w2_ref, b2_ref, o_ref) = refs
        sw_ref = sb_ref = None
    else:
        (x_ref, proj_ref, gA1_ref, gB1_ref, g1_ref, be1_ref, w1_ref, b1_ref,
         gA2_ref, gB2_ref, g2_ref, be2_ref, w2_ref, b2_ref,
         sw_ref, sb_ref, o_ref) = refs

    H, W, Cin = x_ref.shape[1], x_ref.shape[2], x_ref.shape[3]
    Cout = w1_ref.shape[1]
    Cpad = o_ref.shape[3]
    HW = H * W

    def gn_swish(h2d, A, B, gamma, beta):
        # GroupNorm(32, eps=1e-6, affine=True) + swish.  Two-pass centered stats in
        # f32; group reduce / broadcast-back are tiny (1,C)@(C,G) / (1,G)@(G,C) dots
        # on hoisted 0/1 membership matrices (no lane reshapes).
        C = h2d.shape[1]
        inv_gsz = 1.0 / (C // NUM_GROUPS)
        mean_c = jnp.mean(h2d, axis=0, keepdims=True)                       # (1, C)
        mean_g = jnp.dot(mean_c, A,
                         preferred_element_type=jnp.float32) * inv_gsz      # (1, G)
        mean_bc = jnp.dot(mean_g, B, preferred_element_type=jnp.float32)    # (1, C)
        d = h2d - mean_bc                                                   # reused
        var_c = jnp.mean(d * d, axis=0, keepdims=True)                      # (1, C)
        var_g = jnp.dot(var_c, A,
                        preferred_element_type=jnp.float32) * inv_gsz       # (1, G)
        inv_g = lax.rsqrt(var_g + EPS)
        inv_bc = jnp.dot(inv_g, B, preferred_element_type=jnp.float32)      # (1, C)
        y = d * (inv_bc * gamma) + beta
        return _swish(y)

    def conv3x3(img, w_ref, bias):
        # 3x3 stride-1 "same" conv.  img: (H, W, C); cast to bf16 BEFORE building
        # the taps.  w_ref: (9*C, Co) bf16, rows ordered (ky, kx, ci).  f32 acc.
        C = img.shape[2]
        Co = w_ref.shape[1]
        img = img.astype(jnp.bfloat16)
        zrow = jnp.zeros((1, W, C), jnp.bfloat16)
        zcol = jnp.zeros((H + 2, 1, C), jnp.bfloat16)
        hp = jnp.concatenate([zrow, img, zrow], axis=0)          # (H+2, W,   C)
        hp = jnp.concatenate([zcol, hp, zcol], axis=1)           # (H+2, W+2, C)

        def row_patch(ky):                                        # (H, W, 3*C)
            return jnp.concatenate(
                [hp[ky:ky + H, kx:kx + W, :] for kx in range(3)], axis=-1)

        if _use_single_im2col(HW, C):
            col = jnp.concatenate([row_patch(ky) for ky in range(3)],
                                  axis=-1).reshape(HW, 9 * C)
            out = jnp.dot(col, w_ref[...], preferred_element_type=jnp.float32)
        else:
            # Accumulating per-ky form: 3 matmuls of K=3C, no (HW, 9C) slab.
            out = jnp.zeros((HW, Co), jnp.float32)
            for ky in range(3):
                col = row_patch(ky).reshape(HW, 3 * C)
                out = out + jnp.dot(col, w_ref[ky * 3 * C:(ky + 1) * 3 * C, :],
                                    preferred_element_type=jnp.float32)
        return out + bias

    x_bf = x_ref[0]                                  # (H, W, Cin) bf16
    x2d = x_bf.astype(jnp.float32).reshape(HW, Cin)  # f32 for stats / residual

    # h = conv1(swish(norm1(x)))
    h = gn_swish(x2d, gA1_ref[...], gB1_ref[...], g1_ref[...], be1_ref[...])
    h = conv3x3(h.reshape(H, W, Cin), w1_ref, b1_ref[...])       # (HW, Cout) f32

    # h = h + temb_proj(swish(temb))  (projection hoisted to the wrapper)
    h = h + proj_ref[0]

    # h = conv2(dropout(swish(norm2(h)))); dropout is identity at inference.
    h = gn_swish(h, gA2_ref[...], gB2_ref[...], g2_ref[...], be2_ref[...])
    h = conv3x3(h.reshape(H, W, Cout), w2_ref, b2_ref[...])      # (HW, Cpad) f32

    # shortcut on the ORIGINAL x.
    if mode == "identity":
        if Cpad > Cin:
            # add x into the first Cin columns only (no zero-padded xs copy).
            o2d = jnp.concatenate([h[:, :Cin] + x2d, h[:, Cin:]], axis=1)
        else:
            o2d = h + x2d
    elif mode == "nin":
        xs = jnp.dot(x_bf.reshape(HW, Cin), sw_ref[...],
                     preferred_element_type=jnp.float32) + sb_ref[...]
        o2d = h + xs
    else:  # "conv": 3x3 conv_shortcut
        o2d = h + conv3x3(x_bf, sw_ref, sb_ref[...])

    o_ref[...] = o2d.reshape(1, H, W, Cpad).astype(o_ref.dtype)


def _group_matrices(C):
    g = C // NUM_GROUPS
    ch_grp = jnp.arange(C, dtype=jnp.int32) // g
    grp = jnp.arange(NUM_GROUPS, dtype=jnp.int32)
    A = (ch_grp[:, None] == grp[None, :]).astype(jnp.float32)    # (C, G)
    return A, A.T                                                 # (C,G), (G,C)


def _vmem_limit_bytes(H, W, Cin, Cout, Cpad, mode):
    # Rough live-set estimate: double-buffered x / out blocks, (double-buffered)
    # bf16 weights, largest conv slab, and an f32 working set for gn / conv acc /
    # residual.  Clamped: >=32 MiB floor, <=112 MiB (v5e/v6e physical headroom;
    # v7x configs are kept small by the per-ky conv path).
    HW = H * W
    x_blk = HW * Cin * 2
    out_blk = HW * Cpad * 2
    weights = (9 * Cin * Cout + 9 * Cout * Cpad) * 2
    if mode == "nin":
        weights += Cin * Cpad * 2
    elif mode == "conv":
        weights += 9 * Cin * Cpad * 2
    slab = max(_conv_slab_bytes(HW, Cin), _conv_slab_bytes(HW, Cout))
    live_f32 = HW * max(Cin, Cpad) * 4 * 4
    est = 2 * (x_blk + out_blk) + 2 * weights + slab + live_f32 + (4 << 20)
    return int(min(max(est, 32 << 20), 112 << 20))


def resnet_block_forward_nhwc(x_nhwc, temb, params, ll=None, hl=None, lh=None, hh=None):
    """Fused ResnetBlock forward; x is NHWC (preferred layout). Returns bf16.

    ll/hl/lh/hh are only consumed by the (unavailable) Mfdm incep branch; ignored.
    """
    N, H, W, Cin = x_nhwc.shape
    Cout = params["conv1_w"].shape[0]
    assert Cin % NUM_GROUPS == 0 and Cout % NUM_GROUPS == 0, \
        "GroupNorm(32) requires channel counts divisible by 32"
    Cpad = ((Cout + 127) // 128) * 128            # lane-dense output store

    if Cin == Cout:
        mode = "identity"
    elif "conv_shortcut_w" in params:
        mode = "conv"
    else:
        mode = "nin"

    f32, bf16 = jnp.float32, jnp.bfloat16

    def pad_cols(a2d):
        return jnp.pad(a2d, ((0, 0), (0, Cpad - a2d.shape[1])))

    def w_col(w_oihw):                            # OIHW -> (k*k*Ci, Co), rows (ky,kx,ci)
        co, ci, k, _ = w_oihw.shape
        return jnp.transpose(w_oihw, (2, 3, 1, 0)).reshape(k * k * ci, co)

    x_b = x_nhwc.astype(bf16)
    # temb projection hoisted out of the kernel (an M=1 matmul wastes the MXU).
    proj = _swish(temb.astype(f32)) @ params["temb_w"].astype(f32).T \
        + params["temb_b"].astype(f32)
    proj = proj[:, None, :]                                          # (N, 1, Cout)

    gA1, gB1 = _group_matrices(Cin)
    gA2, gB2 = _group_matrices(Cout)
    g1 = params["norm1_g"].reshape(1, Cin).astype(f32)
    be1 = params["norm1_b"].reshape(1, Cin).astype(f32)
    w1 = w_col(params["conv1_w"]).astype(bf16)                       # (9*Cin, Cout)
    b1 = params["conv1_b"].reshape(1, Cout).astype(f32)
    g2 = params["norm2_g"].reshape(1, Cout).astype(f32)
    be2 = params["norm2_b"].reshape(1, Cout).astype(f32)
    w2 = pad_cols(w_col(params["conv2_w"]).astype(f32)).astype(bf16)  # (9*Cout, Cpad)
    b2 = pad_cols(params["conv2_b"].reshape(1, Cout).astype(f32))

    fix2 = lambda n: (0, 0)
    in_specs = [
        pl.BlockSpec((1, H, W, Cin), lambda n: (n, 0, 0, 0)),        # x (NHWC, bf16)
        pl.BlockSpec((1, 1, Cout), lambda n: (n, 0, 0)),             # temb projection
        pl.BlockSpec((Cin, NUM_GROUPS), fix2),                       # norm1 group A
        pl.BlockSpec((NUM_GROUPS, Cin), fix2),                       # norm1 group B
        pl.BlockSpec((1, Cin), fix2),                                # norm1 gamma
        pl.BlockSpec((1, Cin), fix2),                                # norm1 beta
        pl.BlockSpec((9 * Cin, Cout), fix2),                         # conv1 w (im2col)
        pl.BlockSpec((1, Cout), fix2),                               # conv1 b
        pl.BlockSpec((Cout, NUM_GROUPS), fix2),                      # norm2 group A
        pl.BlockSpec((NUM_GROUPS, Cout), fix2),                      # norm2 group B
        pl.BlockSpec((1, Cout), fix2),                               # norm2 gamma
        pl.BlockSpec((1, Cout), fix2),                               # norm2 beta
        pl.BlockSpec((9 * Cout, Cpad), fix2),                        # conv2 w (im2col)
        pl.BlockSpec((1, Cpad), fix2),                               # conv2 b
    ]
    args = [x_b, proj, gA1, gB1, g1, be1, w1, b1, gA2, gB2, g2, be2, w2, b2]

    if mode == "nin":
        sw = pad_cols(params["nin_w"][:, :, 0, 0].T.astype(f32)).astype(bf16)
        sb = pad_cols(params["nin_b"].reshape(1, Cout).astype(f32))
        in_specs += [pl.BlockSpec((Cin, Cpad), fix2), pl.BlockSpec((1, Cpad), fix2)]
        args += [sw, sb]
    elif mode == "conv":
        sw = pad_cols(w_col(params["conv_shortcut_w"]).astype(f32)).astype(bf16)
        sb = pad_cols(params["conv_shortcut_b"].reshape(1, Cout).astype(f32))
        in_specs += [pl.BlockSpec((9 * Cin, Cpad), fix2), pl.BlockSpec((1, Cpad), fix2)]
        args += [sw, sb]

    out = pl.pallas_call(
        functools.partial(_resnet_block_kernel, mode),
        out_shape=jax.ShapeDtypeStruct((N, H, W, Cpad), jnp.bfloat16),
        grid_spec=pltpu.PrefetchScalarGridSpec(
            num_scalar_prefetch=0,
            grid=(N,),
            in_specs=in_specs,
            out_specs=pl.BlockSpec((1, H, W, Cpad), lambda n: (n, 0, 0, 0)),
        ),
        compiler_params=pltpu.CompilerParams(
            dimension_semantics=("parallel",),
            vmem_limit_bytes=_vmem_limit_bytes(H, W, Cin, Cout, Cpad, mode),
        ),
    )(*args)
    return out[..., :Cout]


def resnet_block_forward(x_nchw, temb, params, ll=None, hl=None, lh=None, hh=None):
    # PyTorch-parity NCHW entry point.  The two transposes are a full HBM round
    # trip; prefer resnet_block_forward_nhwc when the surrounding model is NHWC.
    x_nhwc = jnp.transpose(x_nchw, (0, 2, 3, 1))
    out = resnet_block_forward_nhwc(x_nhwc, temb, params, ll, hl, lh, hh)
    return jnp.transpose(out, (0, 3, 1, 2))


# ---------------- pure-JAX reference (mirrors the PyTorch module) ----------------
def _group_norm_ref(h, gamma, beta):
    N, C, H, W = h.shape
    g = C // NUM_GROUPS
    hr = h.reshape(N, NUM_GROUPS, g * H * W)
    mean = hr.mean(axis=2, keepdims=True)
    var = ((hr - mean) ** 2).mean(axis=2, keepdims=True)
    hn = ((hr - mean) / jnp.sqrt(var + EPS)).reshape(N, C, H, W)
    return hn * gamma[None, :, None, None] + beta[None, :, None, None]


def _conv_ref(x, w, b):
    y = lax.conv_general_dilated(
        x, w, window_strides=(1, 1), padding="SAME",
        dimension_numbers=("NCHW", "OIHW", "NCHW"), precision=HIGHEST)
    return y + b[None, :, None, None]


def resnet_block_ref(x, temb, params):
    Cin = x.shape[1]
    Cout = params["conv1_w"].shape[0]
    h = _swish(_group_norm_ref(x, params["norm1_g"], params["norm1_b"]))
    h = _conv_ref(h, params["conv1_w"], params["conv1_b"])
    proj = _swish(temb) @ params["temb_w"].T + params["temb_b"]
    h = h + proj[:, :, None, None]
    h = _swish(_group_norm_ref(h, params["norm2_g"], params["norm2_b"]))
    h = _conv_ref(h, params["conv2_w"], params["conv2_b"])
    if Cin != Cout:
        if "conv_shortcut_w" in params:
            x = _conv_ref(x, params["conv_shortcut_w"], params["conv_shortcut_b"])
        else:
            x = _conv_ref(x, params["nin_w"], params["nin_b"])
    return x + h


def _make_params(key, Cin, Cout, T, with_nin):
    keys = jax.random.split(key, 12)
    p = {
        "norm1_g": 1.0 + 0.1 * jax.random.normal(keys[0], (Cin,), jnp.float32),
        "norm1_b": 0.1 * jax.random.normal(keys[1], (Cin,), jnp.float32),
        "conv1_w": 0.05 * jax.random.normal(keys[2], (Cout, Cin, 3, 3), jnp.float32),
        "conv1_b": 0.05 * jax.random.normal(keys[3], (Cout,), jnp.float32),
        "temb_w": 0.05 * jax.random.normal(keys[4], (Cout, T), jnp.float32),
        "temb_b": 0.05 * jax.random.normal(keys[5], (Cout,), jnp.float32),
        "norm2_g": 1.0 + 0.1 * jax.random.normal(keys[6], (Cout,), jnp.float32),
        "norm2_b": 0.1 * jax.random.normal(keys[7], (Cout,), jnp.float32),
        "conv2_w": 0.05 * jax.random.normal(keys[8], (Cout, Cout, 3, 3), jnp.float32),
        "conv2_b": 0.05 * jax.random.normal(keys[9], (Cout,), jnp.float32),
    }
    if with_nin:
        p["nin_w"] = 0.1 * jax.random.normal(keys[10], (Cout, Cin, 1, 1), jnp.float32)
        p["nin_b"] = 0.05 * jax.random.normal(keys[11], (Cout,), jnp.float32)
    return p


if __name__ == "__main__":
    key = jax.random.PRNGKey(0)
    k1, k2, k3, k4, k5 = jax.random.split(key, 5)

    # Case 1: Cin != Cout -> nin_shortcut (1x1 conv) path.
    N, Cin, Cout, H, W, T = 2, 32, 64, 16, 16, 128
    params = _make_params(k1, Cin, Cout, T, with_nin=True)
    x = jax.random.normal(k2, (N, Cin, H, W), jnp.float32)
    temb = jax.random.normal(k3, (N, T), jnp.float32)
    # wavelet sub-bands consumed only by the (unavailable) Mfdm branch; unused here.
    ll = hl = lh = hh = jnp.zeros((N, Cout, H, W), jnp.float32)

    out = jax.block_until_ready(resnet_block_forward(x, temb, params, ll, hl, lh, hh))
    ref = resnet_block_ref(x, temb, params)
    err = float(jnp.max(jnp.abs(out.astype(jnp.float32) - ref)))
    assert out.shape == (N, Cout, H, W)
    # bf16 MXU operands (f32 accumulation), bf16 input/output storage and default-
    # precision tiny GroupNorm dots vs the all-f32 HIGHEST reference through two
    # stacked 3x3 convs -> allow ~1e-1 absolute.
    assert err < 1.5e-1, f"nin-shortcut case: max abs error {err}"

    # Case 2: Cin == Cout -> identity shortcut path.
    N2, C2, H2, W2, T2 = 1, 32, 8, 8, 64
    params2 = _make_params(k4, C2, C2, T2, with_nin=False)
    x2 = jax.random.normal(k5, (N2, C2, H2, W2), jnp.float32)
    temb2 = jax.random.normal(k3, (N2, T2), jnp.float32)

    out2 = jax.block_until_ready(resnet_block_forward(x2, temb2, params2))
    ref2 = resnet_block_ref(x2, temb2, params2)
    err2 = float(jnp.max(jnp.abs(out2.astype(jnp.float32) - ref2)))
    assert out2.shape == (N2, C2, H2, W2)
    assert err2 < 1.5e-1, f"identity-shortcut case: max abs error {err2}"

    print("KERNEL_OK")
</pallas_src>

<mosaic_0001>
module attributes {stable_mosaic.version = 11 : i64} {
  func.func @_resnet_block_kernel(%arg0: i32, %arg1: memref<1x16x16x32xbf16, #tpu.memory_space<vmem>>, %arg2: memref<1x1x64xf32, #tpu.memory_space<vmem>>, %arg3: memref<32x32xf32, #tpu.memory_space<vmem>>, %arg4: memref<32x32xf32, #tpu.memory_space<vmem>>, %arg5: memref<1x32xf32, #tpu.memory_space<vmem>>, %arg6: memref<1x32xf32, #tpu.memory_space<vmem>>, %arg7: memref<288x64xbf16, #tpu.memory_space<vmem>>, %arg8: memref<1x64xf32, #tpu.memory_space<vmem>>, %arg9: memref<64x32xf32, #tpu.memory_space<vmem>>, %arg10: memref<32x64xf32, #tpu.memory_space<vmem>>, %arg11: memref<1x64xf32, #tpu.memory_space<vmem>>, %arg12: memref<1x64xf32, #tpu.memory_space<vmem>>, %arg13: memref<576x128xbf16, #tpu.memory_space<vmem>>, %arg14: memref<1x128xf32, #tpu.memory_space<vmem>>, %arg15: memref<32x128xbf16, #tpu.memory_space<vmem>>, %arg16: memref<1x128xf32, #tpu.memory_space<vmem>>, %arg17: memref<1x16x16x128xbf16, #tpu.memory_space<vmem>>) attributes {dimension_semantics = [#tpu.dimension_semantics<parallel>], iteration_bounds = array<i64: 2>, scalar_prefetch = 0 : i64, scratch_operands = 0 : i64, tpu.core_type = #tpu.core_type<tc>, window_params = [{transform_indices = @transform_0, window_bounds = array<i64: 1, 16, 16, 32>}, {transform_indices = @transform_1, window_bounds = array<i64: 1, 1, 64>}, {pipeline_mode = #tpu.pipeline_mode<synchronous>, transform_indices = @transform_2, window_bounds = array<i64: 32, 32>}, {pipeline_mode = #tpu.pipeline_mode<synchronous>, transform_indices = @transform_3, window_bounds = array<i64: 32, 32>}, {pipeline_mode = #tpu.pipeline_mode<synchronous>, transform_indices = @transform_4, window_bounds = array<i64: 1, 32>}, {pipeline_mode = #tpu.pipeline_mode<synchronous>, transform_indices = @transform_5, window_bounds = array<i64: 1, 32>}, {pipeline_mode = #tpu.pipeline_mode<synchronous>, transform_indices = @transform_6, window_bounds = array<i64: 288, 64>}, {pipeline_mode = #tpu.pipeline_mode<synchronous>, transform_indices = @transform_7, window_bounds = array<i64: 1, 64>}, {pipeline_mode = #tpu.pipeline_mode<synchronous>, transform_indices = @transform_8, window_bounds = array<i64: 64, 32>}, {pipeline_mode = #tpu.pipeline_mode<synchronous>, transform_indices = @transform_9, window_bounds = array<i64: 32, 64>}, {pipeline_mode = #tpu.pipeline_mode<synchronous>, transform_indices = @transform_10, window_bounds = array<i64: 1, 64>}, {pipeline_mode = #tpu.pipeline_mode<synchronous>, transform_indices = @transform_11, window_bounds = array<i64: 1, 64>}, {pipeline_mode = #tpu.pipeline_mode<synchronous>, transform_indices = @transform_12, window_bounds = array<i64: 576, 128>}, {pipeline_mode = #tpu.pipeline_mode<synchronous>, transform_indices = @transform_13, window_bounds = array<i64: 1, 128>}, {pipeline_mode = #tpu.pipeline_mode<synchronous>, transform_indices = @transform_14, window_bounds = array<i64: 32, 128>}, {pipeline_mode = #tpu.pipeline_mode<synchronous>, transform_indices = @transform_15, window_bounds = array<i64: 1, 128>}, {transform_indices = @transform_16, window_bounds = array<i64: 1, 16, 16, 128>}]} {
    %c0 = arith.constant 0 : index
    %c0_0 = arith.constant 0 : index
    %c0_1 = arith.constant 0 : index
    %c0_2 = arith.constant 0 : index
    %0 = vector.load %arg1[%c0, %c0_0, %c0_1, %c0_2] : memref<1x16x16x32xbf16, #tpu.memory_space<vmem>>, vector<1x16x16x32xbf16>
    %1 = vector.shape_cast %0 : vector<1x16x16x32xbf16> to vector<16x16x32xbf16>
    %2 = arith.extf %1 : vector<16x16x32xbf16> to vector<16x16x32xf32>
    %3 = vector.shape_cast %2 : vector<16x16x32xf32> to vector<256x32xf32>
    %c0_3 = arith.constant 0 : index
    %c0_4 = arith.constant 0 : index
    %4 = vector.load %arg3[%c0_3, %c0_4] : memref<32x32xf32, #tpu.memory_space<vmem>>, vector<32x32xf32>
    %c0_5 = arith.constant 0 : index
    %c0_6 = arith.constant 0 : index
    %5 = vector.load %arg4[%c0_5, %c0_6] : memref<32x32xf32, #tpu.memory_space<vmem>>, vector<32x32xf32>
    %c0_7 = arith.constant 0 : index
    %c0_8 = arith.constant 0 : index
    %6 = vector.load %arg5[%c0_7, %c0_8] : memref<1x32xf32, #tpu.memory_space<vmem>>, vector<1x32xf32>
    %c0_9 = arith.constant 0 : index
    %c0_10 = arith.constant 0 : index
    %7 = vector.load %arg6[%c0_9, %c0_10] : memref<1x32xf32, #tpu.memory_space<vmem>>, vector<1x32xf32>
    %cst = arith.constant dense<0.000000e+00> : vector<32xf32>
    %8 = vector.multi_reduction <add>, %3, %cst [0] : vector<256x32xf32> to vector<32xf32>
    %9 = vector.shape_cast %8 : vector<32xf32> to vector<1x32xf32>
    %cst_11 = arith.constant 2.560000e+02 : f32
    %10 = vector.broadcast %cst_11 : f32 to vector<1x32xf32>
    %11 = arith.divf %9, %10 : vector<1x32xf32>
    %cst_12 = arith.constant dense<0.000000e+00> : vector<1x32xf32>
    %12 = tpu.matmul %11, %4, %cst_12 {dimension_numbers = #tpu.dot_dimension_numbers<[1], [0], [0], [1], [0, 0, 1, 1], [], []>} : vector<1x32xf32>, vector<32x32xf32>, vector<1x32xf32> -> vector<1x32xf32>
    %cst_13 = arith.constant 1.000000e+00 : f32
    %13 = vector.broadcast %cst_13 : f32 to vector<1x32xf32>
    %14 = arith.mulf %12, %13 : vector<1x32xf32>
    %cst_14 = arith.constant dense<0.000000e+00> : vector<1x32xf32>
    %15 = tpu.matmul %14, %5, %cst_14 {dimension_numbers = #tpu.dot_dimension_numbers<[1], [0], [0], [1], [0, 0, 1, 1], [], []>} : vector<1x32xf32>, vector<32x32xf32>, vector<1x32xf32> -> vector<1x32xf32>
    %16 = vector.broadcast %15 : vector<1x32xf32> to vector<256x32xf32>
    %17 = arith.subf %3, %16 : vector<256x32xf32>
    %18 = arith.mulf %17, %17 : vector<256x32xf32>
    %cst_15 = arith.constant dense<0.000000e+00> : vector<32xf32>
    %19 = vector.multi_reduction <add>, %18, %cst_15 [0] : vector<256x32xf32> to vector<32xf32>
    %20 = vector.shape_cast %19 : vector<32xf32> to vector<1x32xf32>
    %cst_16 = arith.constant 2.560000e+02 : f32
    %21 = vector.broadcast %cst_16 : f32 to vector<1x32xf32>
    %22 = arith.divf %20, %21 : vector<1x32xf32>
    %cst_17 = arith.constant dense<0.000000e+00> : vector<1x32xf32>
    %23 = tpu.matmul %22, %4, %cst_17 {dimension_numbers = #tpu.dot_dimension_numbers<[1], [0], [0], [1], [0, 0, 1, 1], [], []>} : vector<1x32xf32>, vector<32x32xf32>, vector<1x32xf32> -> vector<1x32xf32>
    %cst_18 = arith.constant 1.000000e+00 : f32
    %24 = vector.broadcast %cst_18 : f32 to vector<1x32xf32>
    %25 = arith.mulf %23, %24 : vector<1x32xf32>
    %cst_19 = arith.constant 9.99999997E-7 : f32
    %26 = vector.broadcast %cst_19 : f32 to vector<1x32xf32>
    %27 = arith.addf %25, %26 : vector<1x32xf32>
    %28 = math.rsqrt %27 : vector<1x32xf32>
    %cst_20 = arith.constant dense<0.000000e+00> : vector<1x32xf32>
    %29 = tpu.matmul %28, %5, %cst_20 {dimension_numbers = #tpu.dot_dimension_numbers<[1], [0], [0], [1], [0, 0, 1, 1], [], []>} : vector<1x32xf32>, vector<32x32xf32>, vector<1x32xf32> -> vector<1x32xf32>
    %30 = arith.mulf %29, %6 : vector<1x32xf32>
    %31 = vector.broadcast %30 : vector<1x32xf32> to vector<256x32xf32>
    %32 = arith.mulf %17, %31 : vector<256x32xf32>
    %33 = vector.broadcast %7 : vector<1x32xf32> to vector<256x32xf32>
    %34 = arith.addf %32, %33 : vector<256x32xf32>
    %35 = arith.negf %34 : vector<256x32xf32>
    %36 = math.exp %35 : vector<256x32xf32>
    %cst_21 = arith.constant 1.000000e+00 : f32
    %37 = vector.broadcast %cst_21 : f32 to vector<256x32xf32>
    %38 = arith.addf %37, %36 : vector<256x32xf32>
    %39 = arith.divf %37, %38 : vector<256x32xf32>
    %40 = arith.mulf %34, %39 : vector<256x32xf32>
    %41 = vector.shape_cast %40 : vector<256x32xf32> to vector<16x16x32xf32>
    %c0_22 = arith.constant 0 : index
    %c0_23 = arith.constant 0 : index
    %42 = vector.load %arg8[%c0_22, %c0_23] : memref<1x64xf32, #tpu.memory_space<vmem>>, vector<1x64xf32>
    %43 = arith.truncf %41 : vector<16x16x32xf32> to vector<16x16x32xbf16>
    %cst_24 = arith.constant 0.000000e+00 : bf16
    %44 = vector.broadcast %cst_24 : bf16 to vector<1x16x32xbf16>
    %cst_25 = arith.constant 0.000000e+00 : bf16
    %45 = vector.broadcast %cst_25 : bf16 to vector<18x1x32xbf16>
    %46 = tpu.concatenate %44, %43, %44 in 0 : vector<1x16x32xbf16>, vector<16x16x32xbf16>, vector<1x16x32xbf16> -> vector<18x16x32xbf16>
    %47 = tpu.concatenate %45, %46, %45 in 1 : vector<18x1x32xbf16>, vector<18x16x32xbf16>, vector<18x1x32xbf16> -> vector<18x18x32xbf16>
    %48 = vector.extract_strided_slice %47 {offsets = [0, 0, 0], sizes = [16, 16, 32], strides = [1, 1, 1]} : vector<18x18x32xbf16> to vector<16x16x32xbf16>
    %49 = vector.extract_strided_slice %47 {offsets = [0, 1, 0], sizes = [16, 16, 32], strides = [1, 1, 1]} : vector<18x18x32xbf16> to vector<16x16x32xbf16>
    %50 = vector.extract_strided_slice %47 {offsets = [0, 2, 0], sizes = [16, 16, 32], strides = [1, 1, 1]} : vector<18x18x32xbf16> to vector<16x16x32xbf16>
    %51 = tpu.concatenate %48, %49, %50 in 2 : vector<16x16x32xbf16>, vector<16x16x32xbf16>, vector<16x16x32xbf16> -> vector<16x16x96xbf16>
    %52 = vector.extract_strided_slice %47 {offsets = [1, 0, 0], sizes = [16, 16, 32], strides = [1, 1, 1]} : vector<18x18x32xbf16> to vector<16x16x32xbf16>
    %53 = vector.extract_strided_slice %47 {offsets = [1, 1, 0], sizes = [16, 16, 32], strides = [1, 1, 1]} : vector<18x18x32xbf16> to vector<16x16x32xbf16>
    %54 = vector.extract_strided_slice %47 {offsets = [1, 2, 0], sizes = [16, 16, 32], strides = [1, 1, 1]} : vector<18x18x32xbf16> to vector<16x16x32xbf16>
    %55 = tpu.concatenate %52, %53, %54 in 2 : vector<16x16x32xbf16>, vector<16x16x32xbf16>, vector<16x16x32xbf16> -> vector<16x16x96xbf16>
    %56 = vector.extract_strided_slice %47 {offsets = [2, 0, 0], sizes = [16, 16, 32], strides = [1, 1, 1]} : vector<18x18x32xbf16> to vector<16x16x32xbf16>
    %57 = vector.extract_strided_slice %47 {offsets = [2, 1, 0], sizes = [16, 16, 32], strides = [1, 1, 1]} : vector<18x18x32xbf16> to vector<16x16x32xbf16>
    %58 = vector.extract_strided_slice %47 {offsets = [2, 2, 0], sizes = [16, 16, 32], strides = [1, 1, 1]} : vector<18x18x32xbf16> to vector<16x16x32xbf16>
    %59 = tpu.concatenate %56, %57, %58 in 2 : vector<16x16x32xbf16>, vector<16x16x32xbf16>, vector<16x16x32xbf16> -> vector<16x16x96xbf16>
    %60 = tpu.concatenate %51, %55, %59 in 2 : vector<16x16x96xbf16>, vector<16x16x96xbf16>, vector<16x16x96xbf16> -> vector<16x16x288xbf16>
    %61 = vector.shape_cast %60 : vector<16x16x288xbf16> to vector<256x288xbf16>
    %c0_26 = arith.constant 0 : index
    %c0_27 = arith.constant 0 : index
    %62 = vector.load %arg7[%c0_26, %c0_27] : memref<288x64xbf16, #tpu.memory_space<vmem>>, vector<288x64xbf16>
    %cst_28 = arith.constant dense<0.000000e+00> : vector<256x64xf32>
    %63 = tpu.matmul %61, %62, %cst_28 {dimension_numbers = #tpu.dot_dimension_numbers<[1], [0], [0], [1], [0, 0, 1, 1], [], []>} : vector<256x288xbf16>, vector<288x64xbf16>, vector<256x64xf32> -> vector<256x64xf32>
    %64 = vector.broadcast %42 : vector<1x64xf32> to vector<256x64xf32>
    %65 = arith.addf %63, %64 : vector<256x64xf32>
    %c0_29 = arith.constant 0 : index
    %c0_30 = arith.constant 0 : index
    %c0_31 = arith.constant 0 : index
    %66 = vector.load %arg2[%c0_29, %c0_30, %c0_31] : memref<1x1x64xf32, #tpu.memory_space<vmem>>, vector<1x1x64xf32>
    %67 = vector.shape_cast %66 : vector<1x1x64xf32> to vector<1x64xf32>
    %68 = vector.broadcast %67 : vector<1x64xf32> to vector<256x64xf32>
    %69 = arith.addf %65, %68 : vector<256x64xf32>
    %c0_32 = arith.constant 0 : index
    %c0_33 = arith.constant 0 : index
    %70 = vector.load %arg9[%c0_32, %c0_33] : memref<64x32xf32, #tpu.memory_space<vmem>>, vector<64x32xf32>
    %c0_34 = arith.constant 0 : index
    %c0_35 = arith.constant 0 : index
    %71 = vector.load %arg10[%c0_34, %c0_35] : memref<32x64xf32, #tpu.memory_space<vmem>>, vector<32x64xf32>
    %c0_36 = arith.constant 0 : index
    %c0_37 = arith.constant 0 : index
    %72 = vector.load %arg11[%c0_36, %c0_37] : memref<1x64xf32, #tpu.memory_space<vmem>>, vector<1x64xf32>
    %c0_38 = arith.constant 0 : index
    %c0_39 = arith.constant 0 : index
    %73 = vector.load %arg12[%c0_38, %c0_39] : memref<1x64xf32, #tpu.memory_space<vmem>>, vector<1x64xf32>
    %cst_40 = arith.constant dense<0.000000e+00> : vector<64xf32>
    %74 = vector.multi_reduction <add>, %69, %cst_40 [0] : vector<256x64xf32> to vector<64xf32>
    %75 = vector.shape_cast %74 : vector<64xf32> to vector<1x64xf32>
    %cst_41 = arith.constant 2.560000e+02 : f32
    %76 = vector.broadcast %cst_41 : f32 to vector<1x64xf32>
    %77 = arith.divf %75, %76 : vector<1x64xf32>
    %cst_42 = arith.constant dense<0.000000e+00> : vector<1x32xf32>
    %78 = tpu.matmul %77, %70, %cst_42 {dimension_numbers = #tpu.dot_dimension_numbers<[1], [0], [0], [1], [0, 0, 1, 1], [], []>} : vector<1x64xf32>, vector<64x32xf32>, vector<1x32xf32> -> vector<1x32xf32>
    %cst_43 = arith.constant 5.000000e-01 : f32
    %79 = vector.broadcast %cst_43 : f32 to vector<1x32xf32>
    %80 = arith.mulf %78, %79 : vector<1x32xf32>
    %cst_44 = arith.constant dense<0.000000e+00> : vector<1x64xf32>
    %81 = tpu.matmul %80, %71, %cst_44 {dimension_numbers = #tpu.dot_dimension_numbers<[1], [0], [0], [1], [0, 0, 1, 1], [], []>} : vector<1x32xf32>, vector<32x64xf32>, vector<1x64xf32> -> vector<1x64xf32>
    %82 = vector.broadcast %81 : vector<1x64xf32> to vector<256x64xf32>
    %83 = arith.subf %69, %82 : vector<256x64xf32>
    %84 = arith.mulf %83, %83 : vector<256x64xf32>
    %cst_45 = arith.constant dense<0.000000e+00> : vector<64xf32>
    %85 = vector.multi_reduction <add>, %84, %cst_45 [0] : vector<256x64xf32> to vector<64xf32>
    %86 = vector.shape_cast %85 : vector<64xf32> to vector<1x64xf32>
    %cst_46 = arith.constant 2.560000e+02 : f32
    %87 = vector.broadcast %cst_46 : f32 to vector<1x64xf32>
    %88 = arith.divf %86, %87 : vector<1x64xf32>
    %cst_47 = arith.constant dense<0.000000e+00> : vector<1x32xf32>
    %89 = tpu.matmul %88, %70, %cst_47 {dimension_numbers = #tpu.dot_dimension_numbers<[1], [0], [0], [1], [0, 0, 1, 1], [], []>} : vector<1x64xf32>, vector<64x32xf32>, vector<1x32xf32> -> vector<1x32xf32>
    %cst_48 = arith.constant 5.000000e-01 : f32
    %90 = vector.broadcast %cst_48 : f32 to vector<1x32xf32>
    %91 = arith.mulf %89, %90 : vector<1x32xf32>
    %cst_49 = arith.constant 9.99999997E-7 : f32
    %92 = vector.broadcast %cst_49 : f32 to vector<1x32xf32>
    %93 = arith.addf %91, %92 : vector<1x32xf32>
    %94 = math.rsqrt %93 : vector<1x32xf32>
    %cst_50 = arith.constant dense<0.000000e+00> : vector<1x64xf32>
    %95 = tpu.matmul %94, %71, %cst_50 {dimension_numbers = #tpu.dot_dimension_numbers<[1], [0], [0], [1], [0, 0, 1, 1], [], []>} : vector<1x32xf32>, vector<32x64xf32>, vector<1x64xf32> -> vector<1x64xf32>
    %96 = arith.mulf %95, %72 : vector<1x64xf32>
    %97 = vector.broadcast %96 : vector<1x64xf32> to vector<256x64xf32>
    %98 = arith.mulf %83, %97 : vector<256x64xf32>
    %99 = vector.broadcast %73 : vector<1x64xf32> to vector<256x64xf32>
    %100 = arith.addf %98, %99 : vector<256x64xf32>
    %101 = arith.negf %100 : vector<256x64xf32>
    %102 = math.exp %101 : vector<256x64xf32>
    %cst_51 = arith.constant 1.000000e+00 : f32
    %103 = vector.broadcast %cst_51 : f32 to vector<256x64xf32>
    %104 = arith.addf %103, %102 : vector<256x64xf32>
    %105 = arith.divf %103, %104 : vector<256x64xf32>
    %106 = arith.mulf %100, %105 : vector<256x64xf32>
    %107 = vector.shape_cast %106 : vector<256x64xf32> to vector<16x16x64xf32>
    %c0_52 = arith.constant 0 : index
    %c0_53 = arith.constant 0 : index
    %108 = vector.load %arg14[%c0_52, %c0_53] : memref<1x128xf32, #tpu.memory_space<vmem>>, vector<1x128xf32>
    %109 = arith.truncf %107 : vector<16x16x64xf32> to vector<16x16x64xbf16>
    %cst_54 = arith.constant 0.000000e+00 : bf16
    %110 = vector.broadcast %cst_54 : bf16 to vector<1x16x64xbf16>
    %cst_55 = arith.constant 0.000000e+00 : bf16
    %111 = vector.broadcast %cst_55 : bf16 to vector<18x1x64xbf16>
    %112 = tpu.concatenate %110, %109, %110 in 0 : vector<1x16x64xbf16>, vector<16x16x64xbf16>, vector<1x16x64xbf16> -> vector<18x16x64xbf16>
    %113 = tpu.concatenate %111, %112, %111 in 1 : vector<18x1x64xbf16>, vector<18x16x64xbf16>, vector<18x1x64xbf16> -> vector<18x18x64xbf16>
    %114 = vector.extract_strided_slice %113 {offsets = [0, 0, 0], sizes = [16, 16, 64], strides = [1, 1, 1]} : vector<18x18x64xbf16> to vector<16x16x64xbf16>
    %115 = vector.extract_strided_slice %113 {offsets = [0, 1, 0], sizes = [16, 16, 64], strides = [1, 1, 1]} : vector<18x18x64xbf16> to vector<16x16x64xbf16>
    %116 = vector.extract_strided_slice %113 {offsets = [0, 2, 0], sizes = [16, 16, 64], strides = [1, 1, 1]} : vector<18x18x64xbf16> to vector<16x16x64xbf16>
    %117 = tpu.concatenate %114, %115, %116 in 2 : vector<16x16x64xbf16>, vector<16x16x64xbf16>, vector<16x16x64xbf16> -> vector<16x16x192xbf16>
    %118 = vector.extract_strided_slice %113 {offsets = [1, 0, 0], sizes = [16, 16, 64], strides = [1, 1, 1]} : vector<18x18x64xbf16> to vector<16x16x64xbf16>
    %119 = vector.extract_strided_slice %113 {offsets = [1, 1, 0], sizes = [16, 16, 64], strides = [1, 1, 1]} : vector<18x18x64xbf16> to vector<16x16x64xbf16>
    %120 = vector.extract_strided_slice %113 {offsets = [1, 2, 0], sizes = [16, 16, 64], strides = [1, 1, 1]} : vector<18x18x64xbf16> to vector<16x16x64xbf16>
    %121 = tpu.concatenate %118, %119, %120 in 2 : vector<16x16x64xbf16>, vector<16x16x64xbf16>, vector<16x16x64xbf16> -> vector<16x16x192xbf16>
    %122 = vector.extract_strided_slice %113 {offsets = [2, 0, 0], sizes = [16, 16, 64], strides = [1, 1, 1]} : vector<18x18x64xbf16> to vector<16x16x64xbf16>
    %123 = vector.extract_strided_slice %113 {offsets = [2, 1, 0], sizes = [16, 16, 64], strides = [1, 1, 1]} : vector<18x18x64xbf16> to vector<16x16x64xbf16>
    %124 = vector.extract_strided_slice %113 {offsets = [2, 2, 0], sizes = [16, 16, 64], strides = [1, 1, 1]} : vector<18x18x64xbf16> to vector<16x16x64xbf16>
    %125 = tpu.concatenate %122, %123, %124 in 2 : vector<16x16x64xbf16>, vector<16x16x64xbf16>, vector<16x16x64xbf16> -> vector<16x16x192xbf16>
    %126 = tpu.concatenate %117, %121, %125 in 2 : vector<16x16x192xbf16>, vector<16x16x192xbf16>, vector<16x16x192xbf16> -> vector<16x16x576xbf16>
    %127 = vector.shape_cast %126 : vector<16x16x576xbf16> to vector<256x576xbf16>
    %c0_56 = arith.constant 0 : index
    %c0_57 = arith.constant 0 : index
    %128 = vector.load %arg13[%c0_56, %c0_57] : memref<576x128xbf16, #tpu.memory_space<vmem>>, vector<576x128xbf16>
    %cst_58 = arith.constant dense<0.000000e+00> : vector<256x128xf32>
    %129 = tpu.matmul %127, %128, %cst_58 {dimension_numbers = #tpu.dot_dimension_numbers<[1], [0], [0], [1], [0, 0, 1, 1], [], []>} : vector<256x576xbf16>, vector<576x128xbf16>, vector<256x128xf32> -> vector<256x128xf32>
    %130 = vector.broadcast %108 : vector<1x128xf32> to vector<256x128xf32>
    %131 = arith.addf %129, %130 : vector<256x128xf32>
    %132 = vector.shape_cast %1 : vector<16x16x32xbf16> to vector<256x32xbf16>
    %c0_59 = arith.constant 0 : index
    %c0_60 = arith.constant 0 : index
    %133 = vector.load %arg15[%c0_59, %c0_60] : memref<32x128xbf16, #tpu.memory_space<vmem>>, vector<32x128xbf16>
    %cst_61 = arith.constant dense<0.000000e+00> : vector<256x128xf32>
    %134 = tpu.matmul %132, %133, %cst_61 {dimension_numbers = #tpu.dot_dimension_numbers<[1], [0], [0], [1], [0, 0, 1, 1], [], []>} : vector<256x32xbf16>, vector<32x128xbf16>, vector<256x128xf32> -> vector<256x128xf32>
    %c0_62 = arith.constant 0 : index
    %c0_63 = arith.constant 0 : index
    %135 = vector.load %arg16[%c0_62, %c0_63] : memref<1x128xf32, #tpu.memory_space<vmem>>, vector<1x128xf32>
    %136 = vector.broadcast %135 : vector<1x128xf32> to vector<256x128xf32>
    %137 = arith.addf %134, %136 : vector<256x128xf32>
    %138 = arith.addf %131, %137 : vector<256x128xf32>
    %139 = vector.shape_cast %138 : vector<256x128xf32> to vector<1x16x16x128xf32>
    %140 = arith.truncf %139 : vector<1x16x16x128xf32> to vector<1x16x16x128xbf16>
    %c0_64 = arith.constant 0 : index
    %c0_65 = arith.constant 0 : index
    %c0_66 = arith.constant 0 : index
    %c0_67 = arith.constant 0 : index
    %141 = vector.load %arg17[%c0_64, %c0_65, %c0_66, %c0_67] : memref<1x16x16x128xbf16, #tpu.memory_space<vmem>>, vector<1x16x16x128xbf16>
    tpu.vector_store %arg17[%c0_64, %c0_65, %c0_66, %c0_67], %140 {strides = array<i32>} : memref<1x16x16x128xbf16, #tpu.memory_space<vmem>>, vector<1x16x16x128xbf16>,
    return
  }
  func.func @transform_0(%arg0: i32) -> (i32, i32, i32, i32) {
    %c0_i32 = arith.constant 0 : i32
    %c0_i32_0 = arith.constant 0 : i32
    %c0_i32_1 = arith.constant 0 : i32
    %c0_i32_2 = arith.constant 0 : i32
    return %arg0, %c0_i32, %c0_i32_0, %c0_i32_1 : i32, i32, i32, i32
  }
  func.func @transform_1(%arg0: i32) -> (i32, i32, i32) {
    %c0_i32 = arith.constant 0 : i32
    %c0_i32_0 = arith.constant 0 : i32
    %c0_i32_1 = arith.constant 0 : i32
    return %arg0, %c0_i32, %c0_i32_0 : i32, i32, i32
  }
  func.func @transform_2(%arg0: i32) -> (i32, i32) {
    %c0_i32 = arith.constant 0 : i32
    %c0_i32_0 = arith.constant 0 : i32
    %c0_i32_1 = arith.constant 0 : i32
    return %c0_i32, %c0_i32_0 : i32, i32
  }
  func.func @transform_3(%arg0: i32) -> (i32, i32) {
    %c0_i32 = arith.constant 0 : i32
    %c0_i32_0 = arith.constant 0 : i32
    %c0_i32_1 = arith.constant 0 : i32
    return %c0_i32, %c0_i32_0 : i32, i32
  }
  func.func @transform_4(%arg0: i32) -> (i32, i32) {
    %c0_i32 = arith.constant 0 : i32
    %c0_i32_0 = arith.constant 0 : i32
    %c0_i32_1 = arith.constant 0 : i32
    return %c0_i32, %c0_i32_0 : i32, i32
  }
  func.func @transform_5(%arg0: i32) -> (i32, i32) {
    %c0_i32 = arith.constant 0 : i32
    %c0_i32_0 = arith.constant 0 : i32
    %c0_i32_1 = arith.constant 0 : i32
    return %c0_i32, %c0_i32_0 : i32, i32
  }
  func.func @transform_6(%arg0: i32) -> (i32, i32) {
    %c0_i32 = arith.constant 0 : i32
    %c0_i32_0 = arith.constant 0 : i32
    %c0_i32_1 = arith.constant 0 : i32
    return %c0_i32, %c0_i32_0 : i32, i32
  }
  func.func @transform_7(%arg0: i32) -> (i32, i32) {
    %c0_i32 = arith.constant 0 : i32
    %c0_i32_0 = arith.constant 0 : i32
    %c0_i32_1 = arith.constant 0 : i32
    return %c0_i32, %c0_i32_0 : i32, i32
  }
  func.func @transform_8(%arg0: i32) -> (i32, i32) {
    %c0_i32 = arith.constant 0 : i32
    %c0_i32_0 = arith.constant 0 : i32
    %c0_i32_1 = arith.constant 0 : i32
    return %c0_i32, %c0_i32_0 : i32, i32
  }
  func.func @transform_9(%arg0: i32) -> (i32, i32) {
    %c0_i32 = arith.constant 0 : i32
    %c0_i32_0 = arith.constant 0 : i32
    %c0_i32_1 = arith.constant 0 : i32
    return %c0_i32, %c0_i32_0 : i32, i32
  }
  func.func @transform_10(%arg0: i32) -> (i32, i32) {
    %c0_i32 = arith.constant 0 : i32
    %c0_i32_0 = arith.constant 0 : i32
    %c0_i32_1 = arith.constant 0 : i32
    return %c0_i32, %c0_i32_0 : i32, i32
  }
  func.func @transform_11(%arg0: i32) -> (i32, i32) {
    %c0_i32 = arith.constant 0 : i32
    %c0_i32_0 = arith.constant 0 : i32
    %c0_i32_1 = arith.constant 0 : i32
    return %c0_i32, %c0_i32_0 : i32, i32
  }
  func.func @transform_12(%arg0: i32) -> (i32, i32) {
    %c0_i32 = arith.constant 0 : i32
    %c0_i32_0 = arith.constant 0 : i32
    %c0_i32_1 = arith.constant 0 : i32
    return %c0_i32, %c0_i32_0 : i32, i32
  }
  func.func @transform_13(%arg0: i32) -> (i32, i32) {
    %c0_i32 = arith.constant 0 : i32
    %c0_i32_0 = arith.constant 0 : i32
    %c0_i32_1 = arith.constant 0 : i32
    return %c0_i32, %c0_i32_0 : i32, i32
  }
  func.func @transform_14(%arg0: i32) -> (i32, i32) {
    %c0_i32 = arith.constant 0 : i32
    %c0_i32_0 = arith.constant 0 : i32
    %c0_i32_1 = arith.constant 0 : i32
    return %c0_i32, %c0_i32_0 : i32, i32
  }
  func.func @transform_15(%arg0: i32) -> (i32, i32) {
    %c0_i32 = arith.constant 0 : i32
    %c0_i32_0 = arith.constant 0 : i32
    %c0_i32_1 = arith.constant 0 : i32
    return %c0_i32, %c0_i32_0 : i32, i32
  }
  func.func @transform_16(%arg0: i32) -> (i32, i32, i32, i32) {
    %c0_i32 = arith.constant 0 : i32
    %c0_i32_0 = arith.constant 0 : i32
    %c0_i32_1 = arith.constant 0 : i32
    %c0_i32_2 = arith.constant 0 : i32
    return %arg0, %c0_i32, %c0_i32_0, %c0_i32_1 : i32, i32, i32, i32
  }
}

</mosaic_0001>

<llo_original>
// kernel: tpu_custom_call.1
$region0: #{tpu_custom_call.1}
  #allocation0 [shape = 'u32[]', space=smem, size = 0x4, offset = 0x4, fixed_abs, tag = 'smem constant byte address 0x4 - core index']
  #allocation1 [shape = 'u32[72,128]{1,0:T(1,128)}', space=vmem, size = 0x9000, scoped, tag = 'internal scratch']
  %s0 = inlined_call_operand.hbm [shape: bf16[2,16,16,32], index: 0, kind: input, shape index: {}]
  %s1 = inlined_call_operand.vmem [shape: f32[2,1,64], index: 1, kind: input, shape index: {}]
  %s2 = inlined_call_operand.vmem [shape: f32[32,32], index: 2, kind: input, shape index: {}]
  %s3 = inlined_call_operand.vmem [shape: f32[32,32], index: 3, kind: input, shape index: {}]
  %s4 = inlined_call_operand.vmem [shape: f32[1,32], index: 4, kind: input, shape index: {}]
  %s5 = inlined_call_operand.vmem [shape: f32[1,32], index: 5, kind: input, shape index: {}]
  %s6 = inlined_call_operand.vmem [shape: bf16[288,64], index: 6, kind: input, shape index: {}]
  %s7 = inlined_call_operand.vmem [shape: f32[1,64], index: 7, kind: input, shape index: {}]
  %s8 = inlined_call_operand.vmem [shape: f32[64,32], index: 8, kind: input, shape index: {}]
  %s9 = inlined_call_operand.vmem [shape: f32[32,64], index: 9, kind: input, shape index: {}]
  %s10 = inlined_call_operand.vmem [shape: f32[1,64], index: 10, kind: input, shape index: {}]
  %s11 = inlined_call_operand.vmem [shape: f32[1,64], index: 11, kind: input, shape index: {}]
  %s12 = inlined_call_operand.hbm [shape: bf16[576,128], index: 12, kind: input, shape index: {}]
  %s13 = inlined_call_operand.vmem [shape: f32[1,128], index: 13, kind: input, shape index: {}]
  %s14 = inlined_call_operand.vmem [shape: bf16[32,128], index: 14, kind: input, shape index: {}]
  %s15 = inlined_call_operand.vmem [shape: f32[1,128], index: 15, kind: input, shape index: {}]
  %s16 = inlined_call_operand.hbm [shape: bf16[2,16,16,128], index: 16, kind: output, shape index: {}]
  %s17 = sld [smem:[#allocation0]]
  $region105: #{tpu_custom_call.1} parent=0
    _
  %s19 = ssub.s32 1, %s17
  %s20 = scalar_select 0, %s19, %s17
  $region1: #{tpu_custom_call.1} parent=0
    #allocation2 [shape = 'u8[131072]{0}', space=vmem, size = 0x20000, scoped, tag = 'input window, operand 0']
    #allocation3 [shape = 's32[2]{0}', space=sflag, size = 0x8, scoped, tag = 'scoped memory for tpu_custom_call.1']
    #allocation4 [shape = 's32[2]{0}', space=sflag, size = 0x8, scoped, tag = 'scoped memory for tpu_custom_call.1']
    #allocation5 [shape = 'u8[147456]{0}', space=vmem, size = 0x24000, scoped, tag = 'input window, operand 12, single buffered']
    #allocation6 [shape = 's32[1]{0}', space=sflag, size = 0x4, scoped, tag = 'scoped memory for tpu_custom_call.1']
    #allocation7 [shape = 'u8[131072]{0}', space=vmem, size = 0x20000, scoped, tag = 'output window, operand 0']
    %21 = vsyncpa [#allocation3], 0
    %s22 = scalar_lea.sflag [#allocation3], 1
    %23 = vsyncpa %s22, 0
    %24 = vsyncpa [#allocation6], 0
    %25 = vsyncpa [#allocation4], 0
    %s26 = scalar_lea.sflag [#allocation4], 1
    %27 = vsyncpa %s26, 0
    loop: start=0, step=1, limit=4
    $region2: #{tpu_custom_call.1} parent=1 // loop_pre_header
      _
    $region3: #{tpu_custom_call.1} parent=1 // loop_header
      %s29 = sphi 0, %s33
      %p30 = scmp.ge.s32.totalorder %s29, 4
      %s39 = sphi 0, %s41
      %s42 = sphi 0, %s39
      %s43 = sphi 0, %s42
      %s59 = sphi 0, %s43
      %s65 = sphi 0, %s67
      %s68 = sphi 0, %s65
      %s69 = sphi 0, %s68
      %s85 = sphi 0, %s69
      %s89 = sphi 0, %s89
      %s91 = sphi 0, %s89
      %s92 = sphi 0, %s91
      %s106 = sphi 0, %s92
      %s110 = sphi 0, %s110
      %s112 = sphi 0, %s110
      %s113 = sphi 0, %s112
      %s127 = sphi 0, %s113
      %s131 = sphi 0, %s131
      %s133 = sphi 0, %s131
      %s134 = sphi 0, %s133
      %s148 = sphi 0, %s134
      %s152 = sphi 0, %s152
      %s154 = sphi 0, %s152
      %s155 = sphi 0, %s154
      %s169 = sphi 0, %s155
      %s173 = sphi 0, %s173
      %s175 = sphi 0, %s173
      %s176 = sphi 0, %s175
      %s190 = sphi 0, %s176
      %s194 = sphi 0, %s194
      %s196 = sphi 0, %s194
      %s197 = sphi 0, %s196
      %s211 = sphi 0, %s197
      %s215 = sphi 0, %s215
      %s217 = sphi 0, %s215
      %s218 = sphi 0, %s217
      %s232 = sphi 0, %s218
      %s236 = sphi 0, %s236
      %s238 = sphi 0, %s236
      %s239 = sphi 0, %s238
      %s253 = sphi 0, %s239
      %s257 = sphi 0, %s257
      %s259 = sphi 0, %s257
      %s260 = sphi 0, %s259
      %s274 = sphi 0, %s260
      %s278 = sphi 0, %s278
      %s280 = sphi 0, %s278
      %s281 = sphi 0, %s280
      %s295 = sphi 0, %s281
      %s299 = sphi 0, %s299
      %s301 = sphi 0, %s299
      %s302 = sphi 0, %s301
      %s316 = sphi 0, %s302
      %s320 = sphi 0, %s320
      %s322 = sphi 0, %s320
      %s323 = sphi 0, %s322
      %s337 = sphi 0, %s323
      %s341 = sphi 0, %s341
      %s343 = sphi 0, %s341
      %s344 = sphi 0, %s343
      %s358 = sphi 0, %s344
      %s362 = sphi 0, %s362
      %s364 = sphi 0, %s362
      %s365 = sphi 0, %s364
      %s379 = sphi 0, %s365
      %s385 = sphi 0, %s387
      %s388 = sphi 0, %s385
      %s389 = sphi 0, %s388
      %s405 = sphi 0, %s389
    $region4: #{tpu_custom_call.1} parent=1 // loop_header_branch
      %32 = sbr.rel (%p30) target = $region8
    $region5: #{tpu_custom_call.1} parent=1 // loop_body
      %s34 = ssub.s32 %s29, 1
      %s35 = ssub.s32 %s29, 2
      %s36 = sadd.s32 %s29, 1
      %s37 = ssub.s32 %s29, %s36
      %p38 = scmp.eq.s32.totalorder %s37, 0
      %s40 = sadd.s32 %s39, 1
      %s41 = scalar_select %p38, %s39, %s40
      %p44 = pneg %p38
      %p45 = scmp.eq.s32.totalorder %s29, 1
      %p46 = por %p44, %p45
      %p47 = scmp.ne.s32.totalorder %s39, %s42
      %p48 = scmp.eq.s32.totalorder %s29, 0
      %p49 = por %p47, %p48
      %p50 = scmp.ne.s32.totalorder %s39, %s42
      %p51 = scmp.eq.s32.totalorder %s34, 1
      %p52 = por %p50, %p51
      %p53 = scmp.ne.s32.totalorder %s42, %s43
      %p54 = scmp.eq.s32.totalorder %s34, 0
      %p55 = por %p53, %p54
      %p56 = scmp.ne.s32.totalorder %s42, %s43
      %p57 = scmp.eq.s32.totalorder %s35, 1
      %p58 = por %p56, %p57
      %p60 = scmp.ne.s32.totalorder %s43, %s59
      %p61 = scmp.eq.s32.totalorder %s35, 0
      %p62 = por %p60, %p61
      %s63 = ssub.s32 %s29, %s36
      %p64 = scmp.eq.s32.totalorder %s63, 0
      %s66 = sadd.s32 %s65, 1
      %s67 = scalar_select %p64, %s65, %s66
      %p70 = pneg %p64
      %p71 = scmp.eq.s32.totalorder %s29, 1
      %p72 = por %p70, %p71
      %p73 = scmp.ne.s32.totalorder %s65, %s68
      %p74 = scmp.eq.s32.totalorder %s29, 0
      %p75 = por %p73, %p74
      %p76 = scmp.ne.s32.totalorder %s65, %s68
      %p77 = scmp.eq.s32.totalorder %s34, 1
      %p78 = por %p76, %p77
      %p79 = scmp.ne.s32.totalorder %s68, %s69
      %p80 = scmp.eq.s32.totalorder %s34, 0
      %p81 = por %p79, %p80
      %p82 = scmp.ne.s32.totalorder %s68, %s69
      %p83 = scmp.eq.s32.totalorder %s35, 1
      %p84 = por %p82, %p83
      %p86 = scmp.ne.s32.totalorder %s69, %s85
      %p87 = scmp.eq.s32.totalorder %s35, 0
      %p88 = por %p86, %p87
      %s90 = sadd.s32 %s89, 1
      %p93 = scmp.eq.s32.totalorder %s29, 1
      %p94 = scmp.ne.s32.totalorder %s89, %s91
      %p95 = scmp.eq.s32.totalorder %s29, 0
      %p96 = por %p94, %p95
      %p97 = scmp.ne.s32.totalorder %s89, %s91
      %p98 = scmp.eq.s32.totalorder %s34, 1
      %p99 = por %p97, %p98
      %p100 = scmp.ne.s32.totalorder %s91, %s92
      %p101 = scmp.eq.s32.totalorder %s34, 0
      %p102 = por %p100, %p101
      %p103 = scmp.ne.s32.totalorder %s91, %s92
      %p104 = scmp.eq.s32.totalorder %s35, 1
      %p105 = por %p103, %p104
      %p107 = scmp.ne.s32.totalorder %s92, %s106
      %p108 = scmp.eq.s32.totalorder %s35, 0
      %p109 = por %p107, %p108
      %s111 = sadd.s32 %s110, 1
      %p114 = scmp.eq.s32.totalorder %s29, 1
      %p115 = scmp.ne.s32.totalorder %s110, %s112
      %p116 = scmp.eq.s32.totalorder %s29, 0
      %p117 = por %p115, %p116
      %p118 = scmp.ne.s32.totalorder %s110, %s112
      %p119 = scmp.eq.s32.totalorder %s34, 1
      %p120 = por %p118, %p119
      %p121 = scmp.ne.s32.totalorder %s112, %s113
      %p122 = scmp.eq.s32.totalorder %s34, 0
      %p123 = por %p121, %p122
      %p124 = scmp.ne.s32.totalorder %s112, %s113
      %p125 = scmp.eq.s32.totalorder %s35, 1
      %p126 = por %p124, %p125
      %p128 = scmp.ne.s32.totalorder %s113, %s127
      %p129 = scmp.eq.s32.totalorder %s35, 0
      %p130 = por %p128, %p129
      %s132 = sadd.s32 %s131, 1
      %p135 = scmp.eq.s32.totalorder %s29, 1
      %p136 = scmp.ne.s32.totalorder %s131, %s133
      %p137 = scmp.eq.s32.totalorder %s29, 0
      %p138 = por %p136, %p137
      %p139 = scmp.ne.s32.totalorder %s131, %s133
      %p140 = scmp.eq.s32.totalorder %s34, 1
      %p141 = por %p139, %p140
      %p142 = scmp.ne.s32.totalorder %s133, %s134
      %p143 = scmp.eq.s32.totalorder %s34, 0
      %p144 = por %p142, %p143
      %p145 = scmp.ne.s32.totalorder %s133, %s134
      %p146 = scmp.eq.s32.totalorder %s35, 1
      %p147 = por %p145, %p146
      %p149 = scmp.ne.s32.totalorder %s134, %s148
      %p150 = scmp.eq.s32.totalorder %s35, 0
      %p151 = por %p149, %p150
      %s153 = sadd.s32 %s152, 1
      %p156 = scmp.eq.s32.totalorder %s29, 1
      %p157 = scmp.ne.s32.totalorder %s152, %s154
      %p158 = scmp.eq.s32.totalorder %s29, 0
      %p159 = por %p157, %p158
      %p160 = scmp.ne.s32.totalorder %s152, %s154
      %p161 = scmp.eq.s32.totalorder %s34, 1
      %p162 = por %p160, %p161
      %p163 = scmp.ne.s32.totalorder %s154, %s155
      %p164 = scmp.eq.s32.totalorder %s34, 0
      %p165 = por %p163, %p164
      %p166 = scmp.ne.s32.totalorder %s154, %s155
      %p167 = scmp.eq.s32.totalorder %s35, 1
      %p168 = por %p166, %p167
      %p170 = scmp.ne.s32.totalorder %s155, %s169
      %p171 = scmp.eq.s32.totalorder %s35, 0
      %p172 = por %p170, %p171
      %s174 = sadd.s32 %s173, 1
      %p177 = scmp.eq.s32.totalorder %s29, 1
      %p178 = scmp.ne.s32.totalorder %s173, %s175
      %p179 = scmp.eq.s32.totalorder %s29, 0
      %p180 = por %p178, %p179
      %p181 = scmp.ne.s32.totalorder %s173, %s175
      %p182 = scmp.eq.s32.totalorder %s34, 1
      %p183 = por %p181, %p182
      %p184 = scmp.ne.s32.totalorder %s175, %s176
      %p185 = scmp.eq.s32.totalorder %s34, 0
      %p186 = por %p184, %p185
      %p187 = scmp.ne.s32.totalorder %s175, %s176
      %p188 = scmp.eq.s32.totalorder %s35, 1
      %p189 = por %p187, %p188
      %p191 = scmp.ne.s32.totalorder %s176, %s190
      %p192 = scmp.eq.s32.totalorder %s35, 0
      %p193 = por %p191, %p192
      %s195 = sadd.s32 %s194, 1
      %p198 = scmp.eq.s32.totalorder %s29, 1
      %p199 = scmp.ne.s32.totalorder %s194, %s196
      %p200 = scmp.eq.s32.totalorder %s29, 0
      %p201 = por %p199, %p200
      %p202 = scmp.ne.s32.totalorder %s194, %s196
      %p203 = scmp.eq.s32.totalorder %s34, 1
      %p204 = por %p202, %p203
      %p205 = scmp.ne.s32.totalorder %s196, %s197
      %p206 = scmp.eq.s32.totalorder %s34, 0
      %p207 = por %p205, %p206
      %p208 = scmp.ne.s32.totalorder %s196, %s197
      %p209 = scmp.eq.s32.totalorder %s35, 1
      %p210 = por %p208, %p209
      %p212 = scmp.ne.s32.totalorder %s197, %s211
      %p213 = scmp.eq.s32.totalorder %s35, 0
      %p214 = por %p212, %p213
      %s216 = sadd.s32 %s215, 1
      %p219 = scmp.eq.s32.totalorder %s29, 1
      %p220 = scmp.ne.s32.totalorder %s215, %s217
      %p221 = scmp.eq.s32.totalorder %s29, 0
      %p222 = por %p220, %p221
      %p223 = scmp.ne.s32.totalorder %s215, %s217
      %p224 = scmp.eq.s32.totalorder %s34, 1
      %p225 = por %p223, %p224
      %p226 = scmp.ne.s32.totalorder %s217, %s218
      %p227 = scmp.eq.s32.totalorder %s34, 0
      %p228 = por %p226, %p227
      %p229 = scmp.ne.s32.totalorder %s217, %s218
      %p230 = scmp.eq.s32.totalorder %s35, 1
      %p231 = por %p229, %p230
      %p233 = scmp.ne.s32.totalorder %s218, %s232
      %p234 = scmp.eq.s32.totalorder %s35, 0
      %p235 = por %p233, %p234
      %s237 = sadd.s32 %s236, 1
      %p240 = scmp.eq.s32.totalorder %s29, 1
      %p241 = scmp.ne.s32.totalorder %s236, %s238
      %p242 = scmp.eq.s32.totalorder %s29, 0
      %p243 = por %p241, %p242
      %p244 = scmp.ne.s32.totalorder %s236, %s238
      %p245 = scmp.eq.s32.totalorder %s34, 1
      %p246 = por %p244, %p245
      %p247 = scmp.ne.s32.totalorder %s238, %s239
      %p248 = scmp.eq.s32.totalorder %s34, 0
      %p249 = por %p247, %p248
      %p250 = scmp.ne.s32.totalorder %s238, %s239
      %p251 = scmp.eq.s32.totalorder %s35, 1
      %p252 = por %p250, %p251
      %p254 = scmp.ne.s32.totalorder %s239, %s253
      %p255 = scmp.eq.s32.totalorder %s35, 0
      %p256 = por %p254, %p255
      %s258 = sadd.s32 %s257, 1
      %p261 = scmp.eq.s32.totalorder %s29, 1
      %p262 = scmp.ne.s32.totalorder %s257, %s259
      %p263 = scmp.eq.s32.totalorder %s29, 0
      %p264 = por %p262, %p263
      %p265 = scmp.ne.s32.totalorder %s257, %s259
      %p266 = scmp.eq.s32.totalorder %s34, 1
      %p267 = por %p265, %p266
      %p268 = scmp.ne.s32.totalorder %s259, %s260
      %p269 = scmp.eq.s32.totalorder %s34, 0
      %p270 = por %p268, %p269
      %p271 = scmp.ne.s32.totalorder %s259, %s260
      %p272 = scmp.eq.s32.totalorder %s35, 1
      %p273 = por %p271, %p272
      %p275 = scmp.ne.s32.totalorder %s260, %s274
      %p276 = scmp.eq.s32.totalorder %s35, 0
      %p277 = por %p275, %p276
      %s279 = sadd.s32 %s278, 1
      %p282 = scmp.eq.s32.totalorder %s29, 1
      %p283 = scmp.ne.s32.totalorder %s278, %s280
      %p284 = scmp.eq.s32.totalorder %s29, 0
      %p285 = por %p283, %p284
      %p286 = scmp.ne.s32.totalorder %s278, %s280
      %p287 = scmp.eq.s32.totalorder %s34, 1
      %p288 = por %p286, %p287
      %p289 = scmp.ne.s32.totalorder %s280, %s281
      %p290 = scmp.eq.s32.totalorder %s34, 0
      %p291 = por %p289, %p290
      %p292 = scmp.ne.s32.totalorder %s280, %s281
      %p293 = scmp.eq.s32.totalorder %s35, 1
      %p294 = por %p292, %p293
      %p296 = scmp.ne.s32.totalorder %s281, %s295
      %p297 = scmp.eq.s32.totalorder %s35, 0
      %p298 = por %p296, %p297
      %s300 = sadd.s32 %s299, 1
      %p303 = scmp.eq.s32.totalorder %s29, 1
      %p304 = scmp.ne.s32.totalorder %s299, %s301
      %p305 = scmp.eq.s32.totalorder %s29, 0
      %p306 = por %p304, %p305
      %p307 = scmp.ne.s32.totalorder %s299, %s301
      %p308 = scmp.eq.s32.totalorder %s34, 1
      %p309 = por %p307, %p308
      %p310 = scmp.ne.s32.totalorder %s301, %s302
      %p311 = scmp.eq.s32.totalorder %s34, 0
      %p312 = por %p310, %p311
      %p313 = scmp.ne.s32.totalorder %s301, %s302
      %p314 = scmp.eq.s32.totalorder %s35, 1
      %p315 = por %p313, %p314
      %p317 = scmp.ne.s32.totalorder %s302, %s316
      %p318 = scmp.eq.s32.totalorder %s35, 0
      %p319 = por %p317, %p318
      %s321 = sadd.s32 %s320, 1
      %p324 = scmp.eq.s32.totalorder %s29, 1
      %p325 = scmp.ne.s32.totalorder %s320, %s322
      %p326 = scmp.eq.s32.totalorder %s29, 0
      %p327 = por %p325, %p326
      %p328 = scmp.ne.s32.totalorder %s320, %s322
      %p329 = scmp.eq.s32.totalorder %s34, 1
      %p330 = por %p328, %p329
      %p331 = scmp.ne.s32.totalorder %s322, %s323
      %p332 = scmp.eq.s32.totalorder %s34, 0
      %p333 = por %p331, %p332
      %p334 = scmp.ne.s32.totalorder %s322, %s323
      %p335 = scmp.eq.s32.totalorder %s35, 1
      %p336 = por %p334, %p335
      %p338 = scmp.ne.s32.totalorder %s323, %s337
      %p339 = scmp.eq.s32.totalorder %s35, 0
      %p340 = por %p338, %p339
      %s342 = sadd.s32 %s341, 1
      %p345 = scmp.eq.s32.totalorder %s29, 1
      %p346 = scmp.ne.s32.totalorder %s341, %s343
      %p347 = scmp.eq.s32.totalorder %s29, 0
      %p348 = por %p346, %p347
      %p349 = scmp.ne.s32.totalorder %s341, %s343
      %p350 = scmp.eq.s32.totalorder %s34, 1
      %p351 = por %p349, %p350
      %p352 = scmp.ne.s32.totalorder %s343, %s344
      %p353 = scmp.eq.s32.totalorder %s34, 0
      %p354 = por %p352, %p353
      %p355 = scmp.ne.s32.totalorder %s343, %s344
      %p356 = scmp.eq.s32.totalorder %s35, 1
      %p357 = por %p355, %p356
      %p359 = scmp.ne.s32.totalorder %s344, %s358
      %p360 = scmp.eq.s32.totalorder %s35, 0
      %p361 = por %p359, %p360
      %s363 = sadd.s32 %s362, 1
      %p366 = scmp.eq.s32.totalorder %s29, 1
      %p367 = scmp.ne.s32.totalorder %s362, %s364
      %p368 = scmp.eq.s32.totalorder %s29, 0
      %p369 = por %p367, %p368
      %p370 = scmp.ne.s32.totalorder %s362, %s364
      %p371 = scmp.eq.s32.totalorder %s34, 1
      %p372 = por %p370, %p371
      %p373 = scmp.ne.s32.totalorder %s364, %s365
      %p374 = scmp.eq.s32.totalorder %s34, 0
      %p375 = por %p373, %p374
      %p376 = scmp.ne.s32.totalorder %s364, %s365
      %p377 = scmp.eq.s32.totalorder %s35, 1
      %p378 = por %p376, %p377
      %p380 = scmp.ne.s32.totalorder %s365, %s379
      %p381 = scmp.eq.s32.totalorder %s35, 0
      %p382 = por %p380, %p381
      %s383 = ssub.s32 %s29, %s36
      %p384 = scmp.eq.s32.totalorder %s383, 0
      %s386 = sadd.s32 %s385, 1
      %s387 = scalar_select %p384, %s385, %s386
      %p390 = pneg %p384
      %p391 = scmp.eq.s32.totalorder %s29, 1
      %p392 = por %p390, %p391
      %p393 = scmp.ne.s32.totalorder %s385, %s388
      %p394 = scmp.eq.s32.totalorder %s29, 0
      %p395 = por %p393, %p394
      %p396 = scmp.ne.s32.totalorder %s385, %s388
      %p397 = scmp.eq.s32.totalorder %s34, 1
      %p398 = por %p396, %p397
      %p399 = scmp.ne.s32.totalorder %s388, %s389
      %p400 = scmp.eq.s32.totalorder %s34, 0
      %p401 = por %p399, %p400
      %p402 = scmp.ne.s32.totalorder %s388, %s389
      %p403 = scmp.eq.s32.totalorder %s35, 1
      %p404 = por %p402, %p403
      %p406 = scmp.ne.s32.totalorder %s389, %s405
      %p407 = scmp.eq.s32.totalorder %s35, 0
      %p408 = por %p406, %p407
      %p409 = scmp.le.s32.totalorder 1, %s29
      %p410 = scmp.lt.s32.totalorder %s29, 3
      %p411 = pnand %p409, %p410
      %p412 = pneg %p411
      // Predicated region
      $region9: #{tpu_custom_call.1} parent=5 // pred_check
        _
      $region10: #{tpu_custom_call.1} parent=5 // pred_check_branch
        %414 = sbr.rel (%p411) target = $region12
      $region11: #{tpu_custom_call.1} parent=5 // pred_region
        %s415 = ssub.s32 %s29, 1
        // Predicated region
        $region13: #{tpu_custom_call.1} parent=11 // pred_check
          %p416 = pneg %p102
        $region14: #{tpu_custom_call.1} parent=11 // pred_check_branch
          %418 = sbr.rel (%p416) target = $region16
        $region15: #{tpu_custom_call.1} parent=11 // pred_region
          _
        $region16: #{tpu_custom_call.1} parent=11 // pred_fallthru
          _
        // Predicated region
        $region17: #{tpu_custom_call.1} parent=11 // pred_check
          %p419 = pneg %p123
        $region18: #{tpu_custom_call.1} parent=11 // pred_check_branch
          %421 = sbr.rel (%p419) target = $region20
        $region19: #{tpu_custom_call.1} parent=11 // pred_region
          _
        $region20: #{tpu_custom_call.1} parent=11 // pred_fallthru
          _
        // Predicated region
        $region21: #{tpu_custom_call.1} parent=11 // pred_check
          %p422 = pneg %p144
        $region22: #{tpu_custom_call.1} parent=11 // pred_check_branch
          %424 = sbr.rel (%p422) target = $region24
        $region23: #{tpu_custom_call.1} parent=11 // pred_region
          _
        $region24: #{tpu_custom_call.1} parent=11 // pred_fallthru
          _
        // Predicated region
        $region25: #{tpu_custom_call.1} parent=11 // pred_check
          %p425 = pneg %p165
        $region26: #{tpu_custom_call.1} parent=11 // pred_check_branch
          %427 = sbr.rel (%p425) target = $region28
        $region27: #{tpu_custom_call.1} parent=11 // pred_region
          _
        $region28: #{tpu_custom_call.1} parent=11 // pred_fallthru
          _
        // Predicated region
        $region29: #{tpu_custom_call.1} parent=11 // pred_check
          %p428 = pneg %p186
        $region30: #{tpu_custom_call.1} parent=11 // pred_check_branch
          %430 = sbr.rel (%p428) target = $region32
        $region31: #{tpu_custom_call.1} parent=11 // pred_region
          _
        $region32: #{tpu_custom_call.1} parent=11 // pred_fallthru
          _
        // Predicated region
        $region33: #{tpu_custom_call.1} parent=11 // pred_check
          %p431 = pneg %p207
        $region34: #{tpu_custom_call.1} parent=11 // pred_check_branch
          %433 = sbr.rel (%p431) target = $region36
        $region35: #{tpu_custom_call.1} parent=11 // pred_region
          _
        $region36: #{tpu_custom_call.1} parent=11 // pred_fallthru
          _
        // Predicated region
        $region37: #{tpu_custom_call.1} parent=11 // pred_check
          %p434 = pneg %p228
        $region38: #{tpu_custom_call.1} parent=11 // pred_check_branch
          %436 = sbr.rel (%p434) target = $region40
        $region39: #{tpu_custom_call.1} parent=11 // pred_region
          _
        $region40: #{tpu_custom_call.1} parent=11 // pred_fallthru
          _
        // Predicated region
        $region41: #{tpu_custom_call.1} parent=11 // pred_check
          %p437 = pneg %p249
        $region42: #{tpu_custom_call.1} parent=11 // pred_check_branch
          %439 = sbr.rel (%p437) target = $region44
        $region43: #{tpu_custom_call.1} parent=11 // pred_region
          _
        $region44: #{tpu_custom_call.1} parent=11 // pred_fallthru
          _
        // Predicated region
        $region45: #{tpu_custom_call.1} parent=11 // pred_check
          %p440 = pneg %p270
        $region46: #{tpu_custom_call.1} parent=11 // pred_check_branch
          %442 = sbr.rel (%p440) target = $region48
        $region47: #{tpu_custom_call.1} parent=11 // pred_region
          _
        $region48: #{tpu_custom_call.1} parent=11 // pred_fallthru
          _
        // Predicated region
        $region49: #{tpu_custom_call.1} parent=11 // pred_check
          %p443 = pneg %p291
        $region50: #{tpu_custom_call.1} parent=11 // pred_check_branch
          %445 = sbr.rel (%p443) target = $region52
        $region51: #{tpu_custom_call.1} parent=11 // pred_region
          _
        $region52: #{tpu_custom_call.1} parent=11 // pred_fallthru
          _
        // Predicated region
        $region53: #{tpu_custom_call.1} parent=11 // pred_check
          %p446 = pneg %p312
        $region54: #{tpu_custom_call.1} parent=11 // pred_check_branch
          %448 = sbr.rel (%p446) target = $region56
        $region55: #{tpu_custom_call.1} parent=11 // pred_region
          %450 = vsyncadd [#allocation6], 0
          %s451 = sshll.u32 %s12, 4
          %s452 = int_to_ptr.hbm [resolvable:$true] %s451
          %s453 = sshll.u32 [#allocation5], 4
          %s454 = int_to_ptr.vmem [resolvable:$true] %s453
          %459 = dma.hbm_to_vmem [thread:$0]  %s452, 4608, %s454, [#allocation6], 64, 64, 4
        $region56: #{tpu_custom_call.1} parent=11 // pred_fallthru
          _
        // Predicated region
        $region57: #{tpu_custom_call.1} parent=11 // pred_check
          %p460 = pneg %p333
        $region58: #{tpu_custom_call.1} parent=11 // pred_check_branch
          %462 = sbr.rel (%p460) target = $region60
        $region59: #{tpu_custom_call.1} parent=11 // pred_region
          _
        $region60: #{tpu_custom_call.1} parent=11 // pred_fallthru
          _
        // Predicated region
        $region61: #{tpu_custom_call.1} parent=11 // pred_check
          %p463 = pneg %p354
        $region62: #{tpu_custom_call.1} parent=11 // pred_check_branch
          %465 = sbr.rel (%p463) target = $region64
        $region63: #{tpu_custom_call.1} parent=11 // pred_region
          _
        $region64: #{tpu_custom_call.1} parent=11 // pred_fallthru
          _
        // Predicated region
        $region65: #{tpu_custom_call.1} parent=11 // pred_check
          %p466 = pneg %p375
        $region66: #{tpu_custom_call.1} parent=11 // pred_check_branch
          %468 = sbr.rel (%p466) target = $region68
        $region67: #{tpu_custom_call.1} parent=11 // pred_region
          _
        $region68: #{tpu_custom_call.1} parent=11 // pred_fallthru
          _
      $region12: #{tpu_custom_call.1} parent=5 // pred_fallthru
        _
      %p469 = scmp.lt.s32.totalorder %s29, 2
      // Predicated region
      $region69: #{tpu_custom_call.1} parent=5 // pred_check
        %p470 = pneg %p469
      $region70: #{tpu_custom_call.1} parent=5 // pred_check_branch
        %472 = sbr.rel (%p470) target = $region72
      $region71: #{tpu_custom_call.1} parent=5 // pred_region
        // Predicated region
        $region73: #{tpu_custom_call.1} parent=71 // pred_check
          %p473 = pneg %p49
        $region74: #{tpu_custom_call.1} parent=71 // pred_check_branch
          %475 = sbr.rel (%p473) target = $region76
        $region75: #{tpu_custom_call.1} parent=71 // pred_region
          %s476 = sand.u32 %s39, 1
          %s477 = scalar_lea.sflag [#allocation3], %s476
          %s478 = sand.u32 %s39, 1
          %s479 = smul.addr %s478, 128
          %s480 = scalar_lea.vmem [#allocation2], %s479
          %482 = vsyncadd %s477, 0
          %s483 = smul.addr %s29, 32
          %s484 = smul.addr %s483, 4
          %s485 = scalar_lea.hbm %s0, %s484
          %s486 = sshll.u32 %s485, 4
          %s487 = int_to_ptr.hbm [resolvable:$true] %s486
          %s488 = sshll.u32 %s480, 4
          %s489 = int_to_ptr.vmem [resolvable:$true] %s488
          %494 = dma.hbm_to_vmem [thread:$0]  %s487, 2048, %s489, %s477, 64, 64, 4
        $region76: #{tpu_custom_call.1} parent=71 // pred_fallthru
          _
        // Predicated region
        $region77: #{tpu_custom_call.1} parent=71 // pred_check
          %p495 = pneg %p75
        $region78: #{tpu_custom_call.1} parent=71 // pred_check_branch
          %497 = sbr.rel (%p495) target = $region80
        $region79: #{tpu_custom_call.1} parent=71 // pred_region
          %p498 = scmp.lt.s32.totalorder %s29, 1
          %s499 = scalar_select %p498, %s29, 1
          %s500 = scalar_lea.vmem %s1, %s499
        $region80: #{tpu_custom_call.1} parent=71 // pred_fallthru
          _
      $region72: #{tpu_custom_call.1} parent=5 // pred_fallthru
        _
      %p501 = scmp.le.s32.totalorder 1, %s29
      %p502 = scmp.lt.s32.totalorder %s29, 3
      %p503 = pnand %p501, %p502
      %p504 = pneg %p503
      // Predicated region
      $region81: #{tpu_custom_call.1} parent=5 // pred_check
        _
      $region82: #{tpu_custom_call.1} parent=5 // pred_check_branch
        %506 = sbr.rel (%p503) target = $region84
      $region83: #{tpu_custom_call.1} parent=5 // pred_region
        %s507 = ssub.s32 %s29, 1
        %s508 = sand.u32 %s42, 1
        %s509 = scalar_lea.sflag [#allocation3], %s508
        %s510 = sand.u32 %s42, 1
        %s511 = smul.addr %s510, 128
        %s512 = scalar_lea.vmem [#allocation2], %s511
        // Predicated region
        $region85: #{tpu_custom_call.1} parent=83 // pred_check
          %p513 = pneg %p55
        $region86: #{tpu_custom_call.1} parent=83 // pred_check_branch
          %515 = sbr.rel (%p513) target = $region88
        $region87: #{tpu_custom_call.1} parent=83 // pred_region
          %517 = dma.done %s509, 2048
        $region88: #{tpu_custom_call.1} parent=83 // pred_fallthru
          _
        // Predicated region
        $region89: #{tpu_custom_call.1} parent=83 // pred_check
          %p518 = pneg %p312
        $region90: #{tpu_custom_call.1} parent=83 // pred_check_branch
          %520 = sbr.rel (%p518) target = $region92
        $region91: #{tpu_custom_call.1} parent=83 // pred_region
          %522 = dma.done [#allocation6], 4608
        $region92: #{tpu_custom_call.1} parent=83 // pred_fallthru
          _
        %s523 = sand.u32 %s42, 1
        %s524 = scalar_lea.sflag [#allocation3], %s523
        %s525 = sand.u32 %s42, 1
        %s526 = smul.addr %s525, 128
        %s527 = scalar_lea.vmem [#allocation2], %s526
        %p528 = pneg %p55
        %p529 = pneg %p52
        %p530 = scmp.lt.s32.totalorder %s34, 1
        %s531 = scalar_select %p530, %s34, 1
        %s532 = scalar_lea.vmem %s1, %s531
        %p533 = pneg %p81
        %p534 = pneg %p78
        %p535 = pneg %p102
        %p536 = pneg %p99
        %p537 = pneg %p123
        %p538 = pneg %p120
        %p539 = pneg %p144
        %p540 = pneg %p141
        %p541 = pneg %p165
        %p542 = pneg %p162
        %p543 = pneg %p186
        %p544 = pneg %p183
        %p545 = pneg %p207
        %p546 = pneg %p204
        %p547 = pneg %p228
        %p548 = pneg %p225
        %p549 = pneg %p249
        %p550 = pneg %p246
        %p551 = pneg %p270
        %p552 = pneg %p267
        %p553 = pneg %p291
        %p554 = pneg %p288
        %p555 = pneg %p312
        %p556 = pneg %p309
        %p557 = pneg %p333
        %p558 = pneg %p330
        %p559 = pneg %p354
        %p560 = pneg %p351
        %p561 = pneg %p375
        %p562 = pneg %p372
        %p563 = pneg %p401
        %p564 = pneg %p398
        %s565 = sand.u32 %s388, 1
        %s566 = scalar_lea.sflag [#allocation4], %s565
        %s567 = sand.u32 %s388, 1
        %s568 = smul.addr %s567, 128
        %s569 = scalar_lea.vmem [#allocation7], %s568
        %p570 = scmp.lt.s32.totalorder %s34, 1
        %s571 = scalar_select %p570, %s34, 1
        %s572 = scalar_lea.vmem %s1, %s571
        %v574 = vld [vmem:[%s512] sm:$0xf]
        %v575 = vld [vmem:[%s512 + $0x4] sm:$0xf]
        %v576 = vld [vmem:[%s512 + $0x8] sm:$0xf]
        %v577 = vld [vmem:[%s512 + $0xc] sm:$0xf]
        %v578 = vld [vmem:[%s512 + $0x10] sm:$0xf]
        %v579 = vld [vmem:[%s512 + $0x14] sm:$0xf]
        %v580 = vld [vmem:[%s512 + $0x18] sm:$0xf]
        %v581 = vld [vmem:[%s512 + $0x1c] sm:$0xf]
        %v582 = vld [vmem:[%s512 + $0x20] sm:$0xf]
        %v583 = vld [vmem:[%s512 + $0x24] sm:$0xf]
        %v584 = vld [vmem:[%s512 + $0x28] sm:$0xf]
        %v585 = vld [vmem:[%s512 + $0x2c] sm:$0xf]
        %v586 = vld [vmem:[%s512 + $0x30] sm:$0xf]
        %v587 = vld [vmem:[%s512 + $0x34] sm:$0xf]
        %v588 = vld [vmem:[%s512 + $0x38] sm:$0xf]
        %v589 = vld [vmem:[%s512 + $0x3c] sm:$0xf]
        %v590 = vld [vmem:[%s512 + $0x40] sm:$0xf]
        %v591 = vld [vmem:[%s512 + $0x44] sm:$0xf]
        %v592 = vld [vmem:[%s512 + $0x48] sm:$0xf]
        %v593 = vld [vmem:[%s512 + $0x4c] sm:$0xf]
        %v594 = vld [vmem:[%s512 + $0x50] sm:$0xf]
        %v595 = vld [vmem:[%s512 + $0x54] sm:$0xf]
        %v596 = vld [vmem:[%s512 + $0x58] sm:$0xf]
        %v597 = vld [vmem:[%s512 + $0x5c] sm:$0xf]
        %v598 = vld [vmem:[%s512 + $0x60] sm:$0xf]
        %v599 = vld [vmem:[%s512 + $0x64] sm:$0xf]
        %v600 = vld [vmem:[%s512 + $0x68] sm:$0xf]
        %v601 = vld [vmem:[%s512 + $0x6c] sm:$0xf]
        %v602 = vld [vmem:[%s512 + $0x70] sm:$0xf]
        %v603 = vld [vmem:[%s512 + $0x74] sm:$0xf]
        %v604 = vld [vmem:[%s512 + $0x78] sm:$0xf]
        %v605 = vld [vmem:[%s512 + $0x7c] sm:$0xf]
        %v606 = vunpack.c.l.bf16 %v574
        %v607 = vunpack.c.l.bf16 %v575
        %v608 = vunpack.c.l.bf16 %v576
        %v609 = vunpack.c.l.bf16 %v577
        %v610 = vunpack.c.l.bf16 %v578
        %v611 = vunpack.c.l.bf16 %v579
        %v612 = vunpack.c.l.bf16 %v580
        %v613 = vunpack.c.l.bf16 %v581
        %v614 = vunpack.c.l.bf16 %v582
        %v615 = vunpack.c.l.bf16 %v583
        %v616 = vunpack.c.l.bf16 %v584
        %v617 = vunpack.c.l.bf16 %v585
        %v618 = vunpack.c.l.bf16 %v586
        %v619 = vunpack.c.l.bf16 %v587
        %v620 = vunpack.c.l.bf16 %v588
        %v621 = vunpack.c.l.bf16 %v589
        %v622 = vunpack.c.l.bf16 %v590
        %v623 = vunpack.c.l.bf16 %v591
        %v624 = vunpack.c.l.bf16 %v592
        %v625 = vunpack.c.l.bf16 %v593
        %v626 = vunpack.c.l.bf16 %v594
        %v627 = vunpack.c.l.bf16 %v595
        %v628 = vunpack.c.l.bf16 %v596
        %v629 = vunpack.c.l.bf16 %v597
        %v630 = vunpack.c.l.bf16 %v598
        %v631 = vunpack.c.l.bf16 %v599
        %v632 = vunpack.c.l.bf16 %v600
        %v633 = vunpack.c.l.bf16 %v601
        %v634 = vunpack.c.l.bf16 %v602
        %v635 = vunpack.c.l.bf16 %v603
        %v636 = vunpack.c.l.bf16 %v604
        %v637 = vunpack.c.l.bf16 %v605
        %v638 = vld [vmem:[%s2] sm:$0xff]
        %v639 = vld [vmem:[%s2 + $0x8] sm:$0xff]
        %v640 = vld [vmem:[%s2 + $0x10] sm:$0xff]
        %v641 = vld [vmem:[%s2 + $0x18] sm:$0xff]
        %v642 = vld [vmem:[%s3] sm:$0xff]
        %v643 = vld [vmem:[%s3 + $0x8] sm:$0xff]
        %v644 = vld [vmem:[%s3 + $0x10] sm:$0xff]
        %v645 = vld [vmem:[%s3 + $0x18] sm:$0xff]
        %v646 = vld [vmem:[%s4] sm:$0x1]
        %v647 = vld [vmem:[%s5] sm:$0x1]
        %vm648 = vcmask 261120
        %v649 = vsel %vm648, %v606, 0.0
        %v650 = vsel %vm648, %v607, 0.0
        %v651 = vadd.f32 %v649, %v650
        %v652 = vsel %vm648, %v608, 0.0
        %v653 = vadd.f32 %v651, %v652
        %v654 = vsel %vm648, %v609, 0.0
        %v655 = vadd.f32 %v653, %v654
        %v656 = vsel %vm648, %v610, 0.0
        %v657 = vadd.f32 %v655, %v656
        %v658 = vsel %vm648, %v611, 0.0
        %v659 = vadd.f32 %v657, %v658
        %v660 = vsel %vm648, %v612, 0.0
        %v661 = vadd.f32 %v659, %v660
        %v662 = vsel %vm648, %v613, 0.0
        %v663 = vadd.f32 %v661, %v662
        %v664 = vsel %vm648, %v614, 0.0
        %v665 = vadd.f32 %v663, %v664
        %v666 = vsel %vm648, %v615, 0.0
        %v667 = vadd.f32 %v665, %v666
        %v668 = vsel %vm648, %v616, 0.0
        %v669 = vadd.f32 %v667, %v668
        %v670 = vsel %vm648, %v617, 0.0
        %v671 = vadd.f32 %v669, %v670
        %v672 = vsel %vm648, %v618, 0.0
        %v673 = vadd.f32 %v671, %v672
        %v674 = vsel %vm648, %v619, 0.0
        %v675 = vadd.f32 %v673, %v674
        %v676 = vsel %vm648, %v620, 0.0
        %v677 = vadd.f32 %v675, %v676
        %v678 = vsel %vm648, %v621, 0.0
        %v679 = vadd.f32 %v677, %v678
        %v680 = vsel %vm648, %v622, 0.0
        %v681 = vadd.f32 %v679, %v680
        %v682 = vsel %vm648, %v623, 0.0
        %v683 = vadd.f32 %v681, %v682
        %v684 = vsel %vm648, %v624, 0.0
        %v685 = vadd.f32 %v683, %v684
        %v686 = vsel %vm648, %v625, 0.0
        %v687 = vadd.f32 %v685, %v686
        %v688 = vsel %vm648, %v626, 0.0
        %v689 = vadd.f32 %v687, %v688
        %v690 = vsel %vm648, %v627, 0.0
        %v691 = vadd.f32 %v689, %v690
        %v692 = vsel %vm648, %v628, 0.0
        %v693 = vadd.f32 %v691, %v692
        %v694 = vsel %vm648, %v629, 0.0
        %v695 = vadd.f32 %v693, %v694
        %v696 = vsel %vm648, %v630, 0.0
        %v697 = vadd.f32 %v695, %v696
        %v698 = vsel %vm648, %v631, 0.0
        %v699 = vadd.f32 %v697, %v698
        %v700 = vsel %vm648, %v632, 0.0
        %v701 = vadd.f32 %v699, %v700
        %v702 = vsel %vm648, %v633, 0.0
        %v703 = vadd.f32 %v701, %v702
        %v704 = vsel %vm648, %v634, 0.0
        %v705 = vadd.f32 %v703, %v704
        %v706 = vsel %vm648, %v635, 0.0
        %v707 = vadd.f32 %v705, %v706
        %v708 = vsel %vm648, %v636, 0.0
        %v709 = vadd.f32 %v707, %v708
        %v710 = vsel %vm648, %v637, 0.0
        %v711 = vadd.f32 %v709, %v710
        %v712 = vrot.slane %v711, 4
        %v713 = vadd.f32 %v711, %v712
        %v714 = vrot.slane %v713, 2
        %v715 = vadd.f32 %v713, %v714
        %v716 = vrot.slane %v715, 1
        %v717 = vadd.f32 %v715, %v716
        %v718 = vrcp.pop 256.0
        %v719 = vmul.f32 256.0, %v718
        %v720 = vsub.f32 1.0, %v719
        %v721 = vmul.f32 %v718, %v720
        %v722 = vadd.f32 %v718, %v721
        %vm723 = vweird.f32 %v718
        %v724 = vsel %vm723, %v718, %v722
        %v725 = vmul.f32 %v717, %v724
        %v727 = vsel %vm648, %v725, 0
        %729 = vmatpush.msra.mxu0 0.0
        %730 = vmatpush.msra.mxu0 0.0
        %731 = vmatpush.msra.mxu0 0.0
        %732 = vmatpush.msra.mxu0 0.0
        %733 = vmatpush.msra.mxu0 0.0
        %734 = vmatpush.msra.mxu0 0.0
        %735 = vmatpush.msra.mxu0 0.0
        %736 = vmatpush.msra.mxu0 0.0
        %737 = vmatpush.msra.mxu0 0.0
        %738 = vmatpush.msra.mxu0 0.0
        %739 = vmatpush.msra.mxu0 0.0
        %740 = vmatpush.msra.mxu0 0.0
        %741 = vmatpush.msra.mxu0 %v641
        %742 = vmatpush.msra.mxu0 %v640
        %743 = vmatpush.msra.mxu0 %v639
        %744 = vmatpush.msra.mxu0 %v638
        %745 = vmatmul.f32.gmra.mxu0 %v727
        %v746 = vpop.f32.mrf.mxu0
        %v747 = vadd.f32 0.0, %v746
        %748 = vdwg.mxu0
        %v750 = vsel %vm648, %v747, 0
        %752 = vmatpush.msra.mxu0 0.0
        %753 = vmatpush.msra.mxu0 0.0
        %754 = vmatpush.msra.mxu0 0.0
        %755 = vmatpush.msra.mxu0 0.0
        %756 = vmatpush.msra.mxu0 0.0
        %757 = vmatpush.msra.mxu0 0.0
        %758 = vmatpush.msra.mxu0 0.0
        %759 = vmatpush.msra.mxu0 0.0
        %760 = vmatpush.msra.mxu0 0.0
        %761 = vmatpush.msra.mxu0 0.0
        %762 = vmatpush.msra.mxu0 0.0
        %763 = vmatpush.msra.mxu0 0.0
        %764 = vmatpush.msra.mxu0 %v645
        %765 = vmatpush.msra.mxu0 %v644
        %766 = vmatpush.msra.mxu0 %v643
        %767 = vmatpush.msra.mxu0 %v642
        %768 = vmatmul.f32.gmra.mxu0 %v750
        %v769 = vpop.f32.mrf.mxu0
        %v770 = vadd.f32 0.0, %v769
        %771 = vdwg.mxu0
        %v772 = vperm.slane %v770, 0
        %v773 = vsub.f32 %v606, %v772
        %v774 = vsub.f32 %v607, %v772
        %v775 = vsub.f32 %v608, %v772
        %v776 = vsub.f32 %v609, %v772
        %v777 = vsub.f32 %v610, %v772
        %v778 = vsub.f32 %v611, %v772
        %v779 = vsub.f32 %v612, %v772
        %v780 = vsub.f32 %v613, %v772
        %v781 = vsub.f32 %v614, %v772
        %v782 = vsub.f32 %v615, %v772
        %v783 = vsub.f32 %v616, %v772
        %v784 = vsub.f32 %v617, %v772
        %v785 = vsub.f32 %v618, %v772
        %v786 = vsub.f32 %v619, %v772
        %v787 = vsub.f32 %v620, %v772
        %v788 = vsub.f32 %v621, %v772
        %v789 = vsub.f32 %v622, %v772
        %v790 = vsub.f32 %v623, %v772
        %v791 = vsub.f32 %v624, %v772
        %v792 = vsub.f32 %v625, %v772
        %v793 = vsub.f32 %v626, %v772
        %v794 = vsub.f32 %v627, %v772
        %v795 = vsub.f32 %v628, %v772
        %v796 = vsub.f32 %v629, %v772
        %v797 = vsub.f32 %v630, %v772
        %v798 = vsub.f32 %v631, %v772
        %v799 = vsub.f32 %v632, %v772
        %v800 = vsub.f32 %v633, %v772
        %v801 = vsub.f32 %v634, %v772
        %v802 = vsub.f32 %v635, %v772
        %v803 = vsub.f32 %v636, %v772
        %v804 = vsub.f32 %v637, %v772
        %v805 = vmul.f32 %v773, %v773
        %v806 = vmul.f32 %v774, %v774
        %v807 = vmul.f32 %v775, %v775
        %v808 = vmul.f32 %v776, %v776
        %v809 = vmul.f32 %v777, %v777
        %v810 = vmul.f32 %v778, %v778
        %v811 = vmul.f32 %v779, %v779
        %v812 = vmul.f32 %v780, %v780
        %v813 = vmul.f32 %v781, %v781
        %v814 = vmul.f32 %v782, %v782
        %v815 = vmul.f32 %v783, %v783
        %v816 = vmul.f32 %v784, %v784
        %v817 = vmul.f32 %v785, %v785
        %v818 = vmul.f32 %v786, %v786
        %v819 = vmul.f32 %v787, %v787
        %v820 = vmul.f32 %v788, %v788
        %v821 = vmul.f32 %v789, %v789
        %v822 = vmul.f32 %v790, %v790
        %v823 = vmul.f32 %v791, %v791
        %v824 = vmul.f32 %v792, %v792
        %v825 = vmul.f32 %v793, %v793
        %v826 = vmul.f32 %v794, %v794
        %v827 = vmul.f32 %v795, %v795
        %v828 = vmul.f32 %v796, %v796
        %v829 = vmul.f32 %v797, %v797
        %v830 = vmul.f32 %v798, %v798
        %v831 = vmul.f32 %v799, %v799
        %v832 = vmul.f32 %v800, %v800
        %v833 = vmul.f32 %v801, %v801
        %v834 = vmul.f32 %v802, %v802
        %v835 = vmul.f32 %v803, %v803
        %v836 = vmul.f32 %v804, %v804
        %v837 = vsel %vm648, %v805, 0.0
        %v838 = vsel %vm648, %v806, 0.0
        %v839 = vadd.f32 %v837, %v838
        %v840 = vsel %vm648, %v807, 0.0
        %v841 = vadd.f32 %v839, %v840
        %v842 = vsel %vm648, %v808, 0.0
        %v843 = vadd.f32 %v841, %v842
        %v844 = vsel %vm648, %v809, 0.0
        %v845 = vadd.f32 %v843, %v844
        %v846 = vsel %vm648, %v810, 0.0
        %v847 = vadd.f32 %v845, %v846
        %v848 = vsel %vm648, %v811, 0.0
        %v849 = vadd.f32 %v847, %v848
        %v850 = vsel %vm648, %v812, 0.0
        %v851 = vadd.f32 %v849, %v850
        %v852 = vsel %vm648, %v813, 0.0
        %v853 = vadd.f32 %v851, %v852
        %v854 = vsel %vm648, %v814, 0.0
        %v855 = vadd.f32 %v853, %v854
        %v856 = vsel %vm648, %v815, 0.0
        %v857 = vadd.f32 %v855, %v856
        %v858 = vsel %vm648, %v816, 0.0
        %v859 = vadd.f32 %v857, %v858
        %v860 = vsel %vm648, %v817, 0.0
        %v861 = vadd.f32 %v859, %v860
        %v862 = vsel %vm648, %v818, 0.0
        %v863 = vadd.f32 %v861, %v862
        %v864 = vsel %vm648, %v819, 0.0
        %v865 = vadd.f32 %v863, %v864
        %v866 = vsel %vm648, %v820, 0.0
        %v867 = vadd.f32 %v865, %v866
        %v868 = vsel %vm648, %v821, 0.0
        %v869 = vadd.f32 %v867, %v868
        %v870 = vsel %vm648, %v822, 0.0
        %v871 = vadd.f32 %v869, %v870
        %v872 = vsel %vm648, %v823, 0.0
        %v873 = vadd.f32 %v871, %v872
        %v874 = vsel %vm648, %v824, 0.0
        %v875 = vadd.f32 %v873, %v874
        %v876 = vsel %vm648, %v825, 0.0
        %v877 = vadd.f32 %v875, %v876
        %v878 = vsel %vm648, %v826, 0.0
        %v879 = vadd.f32 %v877, %v878
        %v880 = vsel %vm648, %v827, 0.0
        %v881 = vadd.f32 %v879, %v880
        %v882 = vsel %vm648, %v828, 0.0
        %v883 = vadd.f32 %v881, %v882
        %v884 = vsel %vm648, %v829, 0.0
        %v885 = vadd.f32 %v883, %v884
        %v886 = vsel %vm648, %v830, 0.0
        %v887 = vadd.f32 %v885, %v886
        %v888 = vsel %vm648, %v831, 0.0
        %v889 = vadd.f32 %v887, %v888
        %v890 = vsel %vm648, %v832, 0.0
        %v891 = vadd.f32 %v889, %v890
        %v892 = vsel %vm648, %v833, 0.0
        %v893 = vadd.f32 %v891, %v892
        %v894 = vsel %vm648, %v834, 0.0
        %v895 = vadd.f32 %v893, %v894
        %v896 = vsel %vm648, %v835, 0.0
        %v897 = vadd.f32 %v895, %v896
        %v898 = vsel %vm648, %v836, 0.0
        %v899 = vadd.f32 %v897, %v898
        %v900 = vrot.slane %v899, 4
        %v901 = vadd.f32 %v899, %v900
        %v902 = vrot.slane %v901, 2
        %v903 = vadd.f32 %v901, %v902
        %v904 = vrot.slane %v903, 1
        %v905 = vadd.f32 %v903, %v904
        %v906 = vmul.f32 %v905, %v724
        %v908 = vsel %vm648, %v906, 0
        %910 = vmatpush.msra.mxu0 0.0
        %911 = vmatpush.msra.mxu0 0.0
        %912 = vmatpush.msra.mxu0 0.0
        %913 = vmatpush.msra.mxu0 0.0
        %914 = vmatpush.msra.mxu0 0.0
        %915 = vmatpush.msra.mxu0 0.0
        %916 = vmatpush.msra.mxu0 0.0
        %917 = vmatpush.msra.mxu0 0.0
        %918 = vmatpush.msra.mxu0 0.0
        %919 = vmatpush.msra.mxu0 0.0
        %920 = vmatpush.msra.mxu0 0.0
        %921 = vmatpush.msra.mxu0 0.0
        %922 = vmatpush.msra.mxu0 %v641
        %923 = vmatpush.msra.mxu0 %v640
        %924 = vmatpush.msra.mxu0 %v639
        %925 = vmatpush.msra.mxu0 %v638
        %926 = vmatmul.f32.gmra.mxu0 %v908
        %v927 = vpop.f32.mrf.mxu0
        %v928 = vadd.f32 1e-06, %v927
        %929 = vdwg.mxu0
        %v930 = vrsqrt.pop %v928
        %v931 = vmul.f32 %v930, %v928
        %v932 = vmul.f32 %v931, %v930
        %v933 = vmul.f32 0.5, %v932
        %v934 = vsub.f32 1.5, %v933
        %v935 = vmul.f32 %v930, %v934
        %vm936 = vweird.f32 %v928
        %vm937 = vweird.f32 %v930
        %vm938 = vmor %vm936, %vm937
        %v939 = vsel %vm938, %v930, %v935
        %v941 = vsel %vm648, %v939, 0
        %943 = vmatpush.msra.mxu0 0.0
        %944 = vmatpush.msra.mxu0 0.0
        %945 = vmatpush.msra.mxu0 0.0
        %946 = vmatpush.msra.mxu0 0.0
        %947 = vmatpush.msra.mxu0 0.0
        %948 = vmatpush.msra.mxu0 0.0
        %949 = vmatpush.msra.mxu0 0.0
        %950 = vmatpush.msra.mxu0 0.0
        %951 = vmatpush.msra.mxu0 0.0
        %952 = vmatpush.msra.mxu0 0.0
        %953 = vmatpush.msra.mxu0 0.0
        %954 = vmatpush.msra.mxu0 0.0
        %955 = vmatpush.msra.mxu0 %v645
        %956 = vmatpush.msra.mxu0 %v644
        %957 = vmatpush.msra.mxu0 %v643
        %958 = vmatpush.msra.mxu0 %v642
        %959 = vmatmul.f32.gmra.mxu0 %v941
        %v960 = vpop.f32.mrf.mxu0
        %v961 = vadd.f32 0.0, %v960
        %962 = vdwg.mxu0
        %v963 = vmul.f32 %v961, %v646
        %v964 = vperm.slane %v963, 0
        %v965 = vmul.f32 %v773, %v964
        %v966 = vmul.f32 %v774, %v964
        %v967 = vmul.f32 %v775, %v964
        %v968 = vmul.f32 %v776, %v964
        %v969 = vmul.f32 %v777, %v964
        %v970 = vmul.f32 %v778, %v964
        %v971 = vmul.f32 %v779, %v964
        %v972 = vmul.f32 %v780, %v964
        %v973 = vmul.f32 %v781, %v964
        %v974 = vmul.f32 %v782, %v964
        %v975 = vmul.f32 %v783, %v964
        %v976 = vmul.f32 %v784, %v964
        %v977 = vmul.f32 %v785, %v964
        %v978 = vmul.f32 %v786, %v964
        %v979 = vmul.f32 %v787, %v964
        %v980 = vmul.f32 %v788, %v964
        %v981 = vmul.f32 %v789, %v964
        %v982 = vmul.f32 %v790, %v964
        %v983 = vmul.f32 %v791, %v964
        %v984 = vmul.f32 %v792, %v964
        %v985 = vmul.f32 %v793, %v964
        %v986 = vmul.f32 %v794, %v964
        %v987 = vmul.f32 %v795, %v964
        %v988 = vmul.f32 %v796, %v964
        %v989 = vmul.f32 %v797, %v964
        %v990 = vmul.f32 %v798, %v964
        %v991 = vmul.f32 %v799, %v964
        %v992 = vmul.f32 %v800, %v964
        %v993 = vmul.f32 %v801, %v964
        %v994 = vmul.f32 %v802, %v964
        %v995 = vmul.f32 %v803, %v964
        %v996 = vmul.f32 %v804, %v964
        %v998 = vperm.slane %v647, 0
        %v1000 = vadd.f32 %v965, %v998
        %v1001 = vadd.f32 %v966, %v998
        %v1002 = vadd.f32 %v967, %v998
        %v1003 = vadd.f32 %v968, %v998
        %v1004 = vadd.f32 %v969, %v998
        %v1005 = vadd.f32 %v970, %v998
        %v1006 = vadd.f32 %v971, %v998
        %v1007 = vadd.f32 %v972, %v998
        %v1008 = vadd.f32 %v973, %v998
        %v1009 = vadd.f32 %v974, %v998
        %v1010 = vadd.f32 %v975, %v998
        %v1011 = vadd.f32 %v976, %v998
        %v1012 = vadd.f32 %v977, %v998
        %v1013 = vadd.f32 %v978, %v998
        %v1014 = vadd.f32 %v979, %v998
        %v1015 = vadd.f32 %v980, %v998
        %v1016 = vadd.f32 %v981, %v998
        %v1017 = vadd.f32 %v982, %v998
        %v1018 = vadd.f32 %v983, %v998
        %v1019 = vadd.f32 %v984, %v998
        %v1020 = vadd.f32 %v985, %v998
        %v1021 = vadd.f32 %v986, %v998
        %v1022 = vadd.f32 %v987, %v998
        %v1023 = vadd.f32 %v988, %v998
        %v1024 = vadd.f32 %v989, %v998
        %v1025 = vadd.f32 %v990, %v998
        %v1026 = vadd.f32 %v991, %v998
        %v1027 = vadd.f32 %v992, %v998
        %v1028 = vadd.f32 %v993, %v998
        %v1029 = vadd.f32 %v994, %v998
        %v1030 = vadd.f32 %v995, %v998
        %v1031 = vadd.f32 %v996, %v998
        %v1032 = vxor.u32 %v1000, 2147483648
        %v1033 = vxor.u32 %v1001, 2147483648
        %v1034 = vxor.u32 %v1002, 2147483648
        %v1035 = vxor.u32 %v1003, 2147483648
        %v1036 = vxor.u32 %v1004, 2147483648
        %v1037 = vxor.u32 %v1005, 2147483648
        %v1038 = vxor.u32 %v1006, 2147483648
        %v1039 = vxor.u32 %v1007, 2147483648
        %v1040 = vxor.u32 %v1008, 2147483648
        %v1041 = vxor.u32 %v1009, 2147483648
        %v1042 = vxor.u32 %v1010, 2147483648
        %v1043 = vxor.u32 %v1011, 2147483648
        %v1044 = vxor.u32 %v1012, 2147483648
        %v1045 = vxor.u32 %v1013, 2147483648
        %v1046 = vxor.u32 %v1014, 2147483648
        %v1047 = vxor.u32 %v1015, 2147483648
        %v1048 = vxor.u32 %v1016, 2147483648
        %v1049 = vxor.u32 %v1017, 2147483648
        %v1050 = vxor.u32 %v1018, 2147483648
        %v1051 = vxor.u32 %v1019, 2147483648
        %v1052 = vxor.u32 %v1020, 2147483648
        %v1053 = vxor.u32 %v1021, 2147483648
        %v1054 = vxor.u32 %v1022, 2147483648
        %v1055 = vxor.u32 %v1023, 2147483648
        %v1056 = vxor.u32 %v1024, 2147483648
        %v1057 = vxor.u32 %v1025, 2147483648
        %v1058 = vxor.u32 %v1026, 2147483648
        %v1059 = vxor.u32 %v1027, 2147483648
        %v1060 = vxor.u32 %v1028, 2147483648
        %v1061 = vxor.u32 %v1029, 2147483648
        %v1062 = vxor.u32 %v1030, 2147483648
        %v1063 = vxor.u32 %v1031, 2147483648
        %v1064 = vmul.f32 %v1032, 1.442695
        %v1065 = vpow.pop %v1064
        %v1066 = vmul.f32 %v1033, 1.442695
        %v1067 = vpow.pop %v1066
        %v1068 = vmul.f32 %v1034, 1.442695
        %v1069 = vpow.pop %v1068
        %v1070 = vmul.f32 %v1035, 1.442695
        %v1071 = vpow.pop %v1070
        %v1072 = vmul.f32 %v1036, 1.442695
        %v1073 = vpow.pop %v1072
        %v1074 = vmul.f32 %v1037, 1.442695
        %v1075 = vpow.pop %v1074
        %v1076 = vmul.f32 %v1038, 1.442695
        %v1077 = vpow.pop %v1076
        %v1078 = vmul.f32 %v1039, 1.442695
        %v1079 = vpow.pop %v1078
        %v1080 = vmul.f32 %v1040, 1.442695
        %v1081 = vpow.pop %v1080
        %v1082 = vmul.f32 %v1041, 1.442695
        %v1083 = vpow.pop %v1082
        %v1084 = vmul.f32 %v1042, 1.442695
        %v1085 = vpow.pop %v1084
        %v1086 = vmul.f32 %v1043, 1.442695
        %v1087 = vpow.pop %v1086
        %v1088 = vmul.f32 %v1044, 1.442695
        %v1089 = vpow.pop %v1088
        %v1090 = vmul.f32 %v1045, 1.442695
        %v1091 = vpow.pop %v1090
        %v1092 = vmul.f32 %v1046, 1.442695
        %v1093 = vpow.pop %v1092
        %v1094 = vmul.f32 %v1047, 1.442695
        %v1095 = vpow.pop %v1094
        %v1096 = vmul.f32 %v1048, 1.442695
        %v1097 = vpow.pop %v1096
        %v1098 = vmul.f32 %v1049, 1.442695
        %v1099 = vpow.pop %v1098
        %v1100 = vmul.f32 %v1050, 1.442695
        %v1101 = vpow.pop %v1100
        %v1102 = vmul.f32 %v1051, 1.442695
        %v1103 = vpow.pop %v1102
        %v1104 = vmul.f32 %v1052, 1.442695
        %v1105 = vpow.pop %v1104
        %v1106 = vmul.f32 %v1053, 1.442695
        %v1107 = vpow.pop %v1106
        %v1108 = vmul.f32 %v1054, 1.442695
        %v1109 = vpow.pop %v1108
        %v1110 = vmul.f32 %v1055, 1.442695
        %v1111 = vpow.pop %v1110
        %v1112 = vmul.f32 %v1056, 1.442695
        %v1113 = vpow.pop %v1112
        %v1114 = vmul.f32 %v1057, 1.442695
        %v1115 = vpow.pop %v1114
        %v1116 = vmul.f32 %v1058, 1.442695
        %v1117 = vpow.pop %v1116
        %v1118 = vmul.f32 %v1059, 1.442695
        %v1119 = vpow.pop %v1118
        %v1120 = vmul.f32 %v1060, 1.442695
        %v1121 = vpow.pop %v1120
        %v1122 = vmul.f32 %v1061, 1.442695
        %v1123 = vpow.pop %v1122
        %v1124 = vmul.f32 %v1062, 1.442695
        %v1125 = vpow.pop %v1124
        %v1126 = vmul.f32 %v1063, 1.442695
        %v1127 = vpow.pop %v1126
        %v1128 = vadd.f32 %v1065, 1.0
        %v1129 = vadd.f32 %v1067, 1.0
        %v1130 = vadd.f32 %v1069, 1.0
        %v1131 = vadd.f32 %v1071, 1.0
        %v1132 = vadd.f32 %v1073, 1.0
        %v1133 = vadd.f32 %v1075, 1.0
        %v1134 = vadd.f32 %v1077, 1.0
        %v1135 = vadd.f32 %v1079, 1.0
        %v1136 = vadd.f32 %v1081, 1.0
        %v1137 = vadd.f32 %v1083, 1.0
        %v1138 = vadd.f32 %v1085, 1.0
        %v1139 = vadd.f32 %v1087, 1.0
        %v1140 = vadd.f32 %v1089, 1.0
        %v1141 = vadd.f32 %v1091, 1.0
        %v1142 = vadd.f32 %v1093, 1.0
        %v1143 = vadd.f32 %v1095, 1.0
        %v1144 = vadd.f32 %v1097, 1.0
        %v1145 = vadd.f32 %v1099, 1.0
        %v1146 = vadd.f32 %v1101, 1.0
        %v1147 = vadd.f32 %v1103, 1.0
        %v1148 = vadd.f32 %v1105, 1.0
        %v1149 = vadd.f32 %v1107, 1.0
        %v1150 = vadd.f32 %v1109, 1.0
        %v1151 = vadd.f32 %v1111, 1.0
        %v1152 = vadd.f32 %v1113, 1.0
        %v1153 = vadd.f32 %v1115, 1.0
        %v1154 = vadd.f32 %v1117, 1.0
        %v1155 = vadd.f32 %v1119, 1.0
        %v1156 = vadd.f32 %v1121, 1.0
        %v1157 = vadd.f32 %v1123, 1.0
        %v1158 = vadd.f32 %v1125, 1.0
        %v1159 = vadd.f32 %v1127, 1.0
        %v1160 = vrcp.pop %v1128
        %v1161 = vmul.f32 %v1128, %v1160
        %v1162 = vsub.f32 1.0, %v1161
        %v1163 = vmul.f32 %v1160, %v1162
        %v1164 = vadd.f32 %v1160, %v1163
        %vm1165 = vweird.f32 %v1128
        %vm1166 = vweird.f32 %v1160
        %vm1167 = vmor %vm1165, %vm1166
        %v1168 = vsel %vm1167, %v1160, %v1164
        %v1169 = vand.u32 2147483647, %v1128
        %vm1170 = vcmp.eq.f32.partialorder %v1169, 8.507059e+37
        %v1171 = vand.u32 %v1128, 2147483648
        %v1172 = vor.u32 1.1754944e-38, %v1171
        %v1173 = vsel %vm1170, %v1172, %v1168
        %v1174 = vmul.f32 1.0, %v1173
        %v1175 = vrcp.pop %v1129
        %v1176 = vmul.f32 %v1129, %v1175
        %v1177 = vsub.f32 1.0, %v1176
        %v1178 = vmul.f32 %v1175, %v1177
        %v1179 = vadd.f32 %v1175, %v1178
        %vm1180 = vweird.f32 %v1129
        %vm1181 = vweird.f32 %v1175
        %vm1182 = vmor %vm1180, %vm1181
        %v1183 = vsel %vm1182, %v1175, %v1179
        %v1184 = vand.u32 2147483647, %v1129
        %vm1185 = vcmp.eq.f32.partialorder %v1184, 8.507059e+37
        %v1186 = vand.u32 %v1129, 2147483648
        %v1187 = vor.u32 1.1754944e-38, %v1186
        %v1188 = vsel %vm1185, %v1187, %v1183
        %v1189 = vmul.f32 1.0, %v1188
        %v1190 = vrcp.pop %v1130
        %v1191 = vmul.f32 %v1130, %v1190
        %v1192 = vsub.f32 1.0, %v1191
        %v1193 = vmul.f32 %v1190, %v1192
        %v1194 = vadd.f32 %v1190, %v1193
        %vm1195 = vweird.f32 %v1130
        %vm1196 = vweird.f32 %v1190
        %vm1197 = vmor %vm1195, %vm1196
        %v1198 = vsel %vm1197, %v1190, %v1194
        %v1199 = vand.u32 2147483647, %v1130
        %vm1200 = vcmp.eq.f32.partialorder %v1199, 8.507059e+37
        %v1201 = vand.u32 %v1130, 2147483648
        %v1202 = vor.u32 1.1754944e-38, %v1201
        %v1203 = vsel %vm1200, %v1202, %v1198
        %v1204 = vmul.f32 1.0, %v1203
        %v1205 = vrcp.pop %v1131
        %v1206 = vmul.f32 %v1131, %v1205
        %v1207 = vsub.f32 1.0, %v1206
        %v1208 = vmul.f32 %v1205, %v1207
        %v1209 = vadd.f32 %v1205, %v1208
        %vm1210 = vweird.f32 %v1131
        %vm1211 = vweird.f32 %v1205
        %vm1212 = vmor %vm1210, %vm1211
        %v1213 = vsel %vm1212, %v1205, %v1209
        %v1214 = vand.u32 2147483647, %v1131
        %vm1215 = vcmp.eq.f32.partialorder %v1214, 8.507059e+37
        %v1216 = vand.u32 %v1131, 2147483648
        %v1217 = vor.u32 1.1754944e-38, %v1216
        %v1218 = vsel %vm1215, %v1217, %v1213
        %v1219 = vmul.f32 1.0, %v1218
        %v1220 = vrcp.pop %v1132
        %v1221 = vmul.f32 %v1132, %v1220
        %v1222 = vsub.f32 1.0, %v1221
        %v1223 = vmul.f32 %v1220, %v1222
        %v1224 = vadd.f32 %v1220, %v1223
        %vm1225 = vweird.f32 %v1132
        %vm1226 = vweird.f32 %v1220
        %vm1227 = vmor %vm1225, %vm1226
        %v1228 = vsel %vm1227, %v1220, %v1224
        %v1229 = vand.u32 2147483647, %v1132
        %vm1230 = vcmp.eq.f32.partialorder %v1229, 8.507059e+37
        %v1231 = vand.u32 %v1132, 2147483648
        %v1232 = vor.u32 1.1754944e-38, %v1231
        %v1233 = vsel %vm1230, %v1232, %v1228
        %v1234 = vmul.f32 1.0, %v1233
        %v1235 = vrcp.pop %v1133
        %v1236 = vmul.f32 %v1133, %v1235
        %v1237 = vsub.f32 1.0, %v1236
        %v1238 = vmul.f32 %v1235, %v1237
        %v1239 = vadd.f32 %v1235, %v1238
        %vm1240 = vweird.f32 %v1133
        %vm1241 = vweird.f32 %v1235
        %vm1242 = vmor %vm1240, %vm1241
        %v1243 = vsel %vm1242, %v1235, %v1239
        %v1244 = vand.u32 2147483647, %v1133
        %vm1245 = vcmp.eq.f32.partialorder %v1244, 8.507059e+37
        %v1246 = vand.u32 %v1133, 2147483648
        %v1247 = vor.u32 1.1754944e-38, %v1246
        %v1248 = vsel %vm1245, %v1247, %v1243
        %v1249 = vmul.f32 1.0, %v1248
        %v1250 = vrcp.pop %v1134
        %v1251 = vmul.f32 %v1134, %v1250
        %v1252 = vsub.f32 1.0, %v1251
        %v1253 = vmul.f32 %v1250, %v1252
        %v1254 = vadd.f32 %v1250, %v1253
        %vm1255 = vweird.f32 %v1134
        %vm1256 = vweird.f32 %v1250
        %vm1257 = vmor %vm1255, %vm1256
        %v1258 = vsel %vm1257, %v1250, %v1254
        %v1259 = vand.u32 2147483647, %v1134
        %vm1260 = vcmp.eq.f32.partialorder %v1259, 8.507059e+37
        %v1261 = vand.u32 %v1134, 2147483648
        %v1262 = vor.u32 1.1754944e-38, %v1261
        %v1263 = vsel %vm1260, %v1262, %v1258
        %v1264 = vmul.f32 1.0, %v1263
        %v1265 = vrcp.pop %v1135
        %v1266 = vmul.f32 %v1135, %v1265
        %v1267 = vsub.f32 1.0, %v1266
        %v1268 = vmul.f32 %v1265, %v1267
        %v1269 = vadd.f32 %v1265, %v1268
        %vm1270 = vweird.f32 %v1135
        %vm1271 = vweird.f32 %v1265
        %vm1272 = vmor %vm1270, %vm1271
        %v1273 = vsel %vm1272, %v1265, %v1269
        %v1274 = vand.u32 2147483647, %v1135
        %vm1275 = vcmp.eq.f32.partialorder %v1274, 8.507059e+37
        %v1276 = vand.u32 %v1135, 2147483648
        %v1277 = vor.u32 1.1754944e-38, %v1276
        %v1278 = vsel %vm1275, %v1277, %v1273
        %v1279 = vmul.f32 1.0, %v1278
        %v1280 = vrcp.pop %v1136
        %v1281 = vmul.f32 %v1136, %v1280
        %v1282 = vsub.f32 1.0, %v1281
        %v1283 = vmul.f32 %v1280, %v1282
        %v1284 = vadd.f32 %v1280, %v1283
        %vm1285 = vweird.f32 %v1136
        %vm1286 = vweird.f32 %v1280
        %vm1287 = vmor %vm1285, %vm1286
        %v1288 = vsel %vm1287, %v1280, %v1284
        %v1289 = vand.u32 2147483647, %v1136
        %vm1290 = vcmp.eq.f32.partialorder %v1289, 8.507059e+37
        %v1291 = vand.u32 %v1136, 2147483648
        %v1292 = vor.u32 1.1754944e-38, %v1291
        %v1293 = vsel %vm1290, %v1292, %v1288
        %v1294 = vmul.f32 1.0, %v1293
        %v1295 = vrcp.pop %v1137
        %v1296 = vmul.f32 %v1137, %v1295
        %v1297 = vsub.f32 1.0, %v1296
        %v1298 = vmul.f32 %v1295, %v1297
        %v1299 = vadd.f32 %v1295, %v1298
        %vm1300 = vweird.f32 %v1137
        %vm1301 = vweird.f32 %v1295
        %vm1302 = vmor %vm1300, %vm1301
        %v1303 = vsel %vm1302, %v1295, %v1299
        %v1304 = vand.u32 2147483647, %v1137
        %vm1305 = vcmp.eq.f32.partialorder %v1304, 8.507059e+37
        %v1306 = vand.u32 %v1137, 2147483648
        %v1307 = vor.u32 1.1754944e-38, %v1306
        %v1308 = vsel %vm1305, %v1307, %v1303
        %v1309 = vmul.f32 1.0, %v1308
        %v1310 = vrcp.pop %v1138
        %v1311 = vmul.f32 %v1138, %v1310
        %v1312 = vsub.f32 1.0, %v1311
        %v1313 = vmul.f32 %v1310, %v1312
        %v1314 = vadd.f32 %v1310, %v1313
        %vm1315 = vweird.f32 %v1138
        %vm1316 = vweird.f32 %v1310
        %vm1317 = vmor %vm1315, %vm1316
        %v1318 = vsel %vm1317, %v1310, %v1314
        %v1319 = vand.u32 2147483647, %v1138
        %vm1320 = vcmp.eq.f32.partialorder %v1319, 8.507059e+37
        %v1321 = vand.u32 %v1138, 2147483648
        %v1322 = vor.u32 1.1754944e-38, %v1321
        %v1323 = vsel %vm1320, %v1322, %v1318
        %v1324 = vmul.f32 1.0, %v1323
        %v1325 = vrcp.pop %v1139
        %v1326 = vmul.f32 %v1139, %v1325
        %v1327 = vsub.f32 1.0, %v1326
        %v1328 = vmul.f32 %v1325, %v1327
        %v1329 = vadd.f32 %v1325, %v1328
        %vm1330 = vweird.f32 %v1139
        %vm1331 = vweird.f32 %v1325
        %vm1332 = vmor %vm1330, %vm1331
        %v1333 = vsel %vm1332, %v1325, %v1329
        %v1334 = vand.u32 2147483647, %v1139
        %vm1335 = vcmp.eq.f32.partialorder %v1334, 8.507059e+37
        %v1336 = vand.u32 %v1139, 2147483648
        %v1337 = vor.u32 1.1754944e-38, %v1336
        %v1338 = vsel %vm1335, %v1337, %v1333
        %v1339 = vmul.f32 1.0, %v1338
        %v1340 = vrcp.pop %v1140
        %v1341 = vmul.f32 %v1140, %v1340
        %v1342 = vsub.f32 1.0, %v1341
        %v1343 = vmul.f32 %v1340, %v1342
        %v1344 = vadd.f32 %v1340, %v1343
        %vm1345 = vweird.f32 %v1140
        %vm1346 = vweird.f32 %v1340
        %vm1347 = vmor %vm1345, %vm1346
        %v1348 = vsel %vm1347, %v1340, %v1344
        %v1349 = vand.u32 2147483647, %v1140
        %vm1350 = vcmp.eq.f32.partialorder %v1349, 8.507059e+37
        %v1351 = vand.u32 %v1140, 2147483648
        %v1352 = vor.u32 1.1754944e-38, %v1351
        %v1353 = vsel %vm1350, %v1352, %v1348
        %v1354 = vmul.f32 1.0, %v1353
        %v1355 = vrcp.pop %v1141
        %v1356 = vmul.f32 %v1141, %v1355
        %v1357 = vsub.f32 1.0, %v1356
        %v1358 = vmul.f32 %v1355, %v1357
        %v1359 = vadd.f32 %v1355, %v1358
        %vm1360 = vweird.f32 %v1141
        %vm1361 = vweird.f32 %v1355
        %vm1362 = vmor %vm1360, %vm1361
        %v1363 = vsel %vm1362, %v1355, %v1359
        %v1364 = vand.u32 2147483647, %v1141
        %vm1365 = vcmp.eq.f32.partialorder %v1364, 8.507059e+37
        %v1366 = vand.u32 %v1141, 2147483648
        %v1367 = vor.u32 1.1754944e-38, %v1366
        %v1368 = vsel %vm1365, %v1367, %v1363
        %v1369 = vmul.f32 1.0, %v1368
        %v1370 = vrcp.pop %v1142
        %v1371 = vmul.f32 %v1142, %v1370
        %v1372 = vsub.f32 1.0, %v1371
        %v1373 = vmul.f32 %v1370, %v1372
        %v1374 = vadd.f32 %v1370, %v1373
        %vm1375 = vweird.f32 %v1142
        %vm1376 = vweird.f32 %v1370
        %vm1377 = vmor %vm1375, %vm1376
        %v1378 = vsel %vm1377, %v1370, %v1374
        %v1379 = vand.u32 2147483647, %v1142
        %vm1380 = vcmp.eq.f32.partialorder %v1379, 8.507059e+37
        %v1381 = vand.u32 %v1142, 2147483648
        %v1382 = vor.u32 1.1754944e-38, %v1381
        %v1383 = vsel %vm1380, %v1382, %v1378
        %v1384 = vmul.f32 1.0, %v1383
        %v1385 = vrcp.pop %v1143
        %v1386 = vmul.f32 %v1143, %v1385
        %v1387 = vsub.f32 1.0, %v1386
        %v1388 = vmul.f32 %v1385, %v1387
        %v1389 = vadd.f32 %v1385, %v1388
        %vm1390 = vweird.f32 %v1143
        %vm1391 = vweird.f32 %v1385
        %vm1392 = vmor %vm1390, %vm1391
        %v1393 = vsel %vm1392, %v1385, %v1389
        %v1394 = vand.u32 2147483647, %v1143
        %vm1395 = vcmp.eq.f32.partialorder %v1394, 8.507059e+37
        %v1396 = vand.u32 %v1143, 2147483648
        %v1397 = vor.u32 1.1754944e-38, %v1396
        %v1398 = vsel %vm1395, %v1397, %v1393
        %v1399 = vmul.f32 1.0, %v1398
        %v1400 = vrcp.pop %v1144
        %v1401 = vmul.f32 %v1144, %v1400
        %v1402 = vsub.f32 1.0, %v1401
        %v1403 = vmul.f32 %v1400, %v1402
        %v1404 = vadd.f32 %v1400, %v1403
        %vm1405 = vweird.f32 %v1144
        %vm1406 = vweird.f32 %v1400
        %vm1407 = vmor %vm1405, %vm1406
        %v1408 = vsel %vm1407, %v1400, %v1404
        %v1409 = vand.u32 2147483647, %v1144
        %vm1410 = vcmp.eq.f32.partialorder %v1409, 8.507059e+37
        %v1411 = vand.u32 %v1144, 2147483648
        %v1412 = vor.u32 1.1754944e-38, %v1411
        %v1413 = vsel %vm1410, %v1412, %v1408
        %v1414 = vmul.f32 1.0, %v1413
        %v1415 = vrcp.pop %v1145
        %v1416 = vmul.f32 %v1145, %v1415
        %v1417 = vsub.f32 1.0, %v1416
        %v1418 = vmul.f32 %v1415, %v1417
        %v1419 = vadd.f32 %v1415, %v1418
        %vm1420 = vweird.f32 %v1145
        %vm1421 = vweird.f32 %v1415
        %vm1422 = vmor %vm1420, %vm1421
        %v1423 = vsel %vm1422, %v1415, %v1419
        %v1424 = vand.u32 2147483647, %v1145
        %vm1425 = vcmp.eq.f32.partialorder %v1424, 8.507059e+37
        %v1426 = vand.u32 %v1145, 2147483648
        %v1427 = vor.u32 1.1754944e-38, %v1426
        %v1428 = vsel %vm1425, %v1427, %v1423
        %v1429 = vmul.f32 1.0, %v1428
        %v1430 = vrcp.pop %v1146
        %v1431 = vmul.f32 %v1146, %v1430
        %v1432 = vsub.f32 1.0, %v1431
        %v1433 = vmul.f32 %v1430, %v1432
        %v1434 = vadd.f32 %v1430, %v1433
        %vm1435 = vweird.f32 %v1146
        %vm1436 = vweird.f32 %v1430
        %vm1437 = vmor %vm1435, %vm1436
        %v1438 = vsel %vm1437, %v1430, %v1434
        %v1439 = vand.u32 2147483647, %v1146
        %vm1440 = vcmp.eq.f32.partialorder %v1439, 8.507059e+37
        %v1441 = vand.u32 %v1146, 2147483648
        %v1442 = vor.u32 1.1754944e-38, %v1441
        %v1443 = vsel %vm1440, %v1442, %v1438
        %v1444 = vmul.f32 1.0, %v1443
        %v1445 = vrcp.pop %v1147
        %v1446 = vmul.f32 %v1147, %v1445
        %v1447 = vsub.f32 1.0, %v1446
        %v1448 = vmul.f32 %v1445, %v1447
        %v1449 = vadd.f32 %v1445, %v1448
        %vm1450 = vweird.f32 %v1147
        %vm1451 = vweird.f32 %v1445
        %vm1452 = vmor %vm1450, %vm1451
        %v1453 = vsel %vm1452, %v1445, %v1449
        %v1454 = vand.u32 2147483647, %v1147
        %vm1455 = vcmp.eq.f32.partialorder %v1454, 8.507059e+37
        %v1456 = vand.u32 %v1147, 2147483648
        %v1457 = vor.u32 1.1754944e-38, %v1456
        %v1458 = vsel %vm1455, %v1457, %v1453
        %v1459 = vmul.f32 1.0, %v1458
        %v1460 = vrcp.pop %v1148
        %v1461 = vmul.f32 %v1148, %v1460
        %v1462 = vsub.f32 1.0, %v1461
        %v1463 = vmul.f32 %v1460, %v1462
        %v1464 = vadd.f32 %v1460, %v1463
        %vm1465 = vweird.f32 %v1148
        %vm1466 = vweird.f32 %v1460
        %vm1467 = vmor %vm1465, %vm1466
        %v1468 = vsel %vm1467, %v1460, %v1464
        %v1469 = vand.u32 2147483647, %v1148
        %vm1470 = vcmp.eq.f32.partialorder %v1469, 8.507059e+37
        %v1471 = vand.u32 %v1148, 2147483648
        %v1472 = vor.u32 1.1754944e-38, %v1471
        %v1473 = vsel %vm1470, %v1472, %v1468
        %v1474 = vmul.f32 1.0, %v1473
        %v1475 = vrcp.pop %v1149
        %v1476 = vmul.f32 %v1149, %v1475
        %v1477 = vsub.f32 1.0, %v1476
        %v1478 = vmul.f32 %v1475, %v1477
        %v1479 = vadd.f32 %v1475, %v1478
        %vm1480 = vweird.f32 %v1149
        %vm1481 = vweird.f32 %v1475
        %vm1482 = vmor %vm1480, %vm1481
        %v1483 = vsel %vm1482, %v1475, %v1479
        %v1484 = vand.u32 2147483647, %v1149
        %vm1485 = vcmp.eq.f32.partialorder %v1484, 8.507059e+37
        %v1486 = vand.u32 %v1149, 2147483648
        %v1487 = vor.u32 1.1754944e-38, %v1486
        %v1488 = vsel %vm1485, %v1487, %v1483
        %v1489 = vmul.f32 1.0, %v1488
        %v1490 = vrcp.pop %v1150
        %v1491 = vmul.f32 %v1150, %v1490
        %v1492 = vsub.f32 1.0, %v1491
        %v1493 = vmul.f32 %v1490, %v1492
        %v1494 = vadd.f32 %v1490, %v1493
        %vm1495 = vweird.f32 %v1150
        %vm1496 = vweird.f32 %v1490
        %vm1497 = vmor %vm1495, %vm1496
        %v1498 = vsel %vm1497, %v1490, %v1494
        %v1499 = vand.u32 2147483647, %v1150
        %vm1500 = vcmp.eq.f32.partialorder %v1499, 8.507059e+37
        %v1501 = vand.u32 %v1150, 2147483648
        %v1502 = vor.u32 1.1754944e-38, %v1501
        %v1503 = vsel %vm1500, %v1502, %v1498
        %v1504 = vmul.f32 1.0, %v1503
        %v1505 = vrcp.pop %v1151
        %v1506 = vmul.f32 %v1151, %v1505
        %v1507 = vsub.f32 1.0, %v1506
        %v1508 = vmul.f32 %v1505, %v1507
        %v1509 = vadd.f32 %v1505, %v1508
        %vm1510 = vweird.f32 %v1151
        %vm1511 = vweird.f32 %v1505
        %vm1512 = vmor %vm1510, %vm1511
        %v1513 = vsel %vm1512, %v1505, %v1509
        %v1514 = vand.u32 2147483647, %v1151
        %vm1515 = vcmp.eq.f32.partialorder %v1514, 8.507059e+37
        %v1516 = vand.u32 %v1151, 2147483648
        %v1517 = vor.u32 1.1754944e-38, %v1516
        %v1518 = vsel %vm1515, %v1517, %v1513
        %v1519 = vmul.f32 1.0, %v1518
        %v1520 = vrcp.pop %v1152
        %v1521 = vmul.f32 %v1152, %v1520
        %v1522 = vsub.f32 1.0, %v1521
        %v1523 = vmul.f32 %v1520, %v1522
        %v1524 = vadd.f32 %v1520, %v1523
        %vm1525 = vweird.f32 %v1152
        %vm1526 = vweird.f32 %v1520
        %vm1527 = vmor %vm1525, %vm1526
        %v1528 = vsel %vm1527, %v1520, %v1524
        %v1529 = vand.u32 2147483647, %v1152
        %vm1530 = vcmp.eq.f32.partialorder %v1529, 8.507059e+37
        %v1531 = vand.u32 %v1152, 2147483648
        %v1532 = vor.u32 1.1754944e-38, %v1531
        %v1533 = vsel %vm1530, %v1532, %v1528
        %v1534 = vmul.f32 1.0, %v1533
        %v1535 = vrcp.pop %v1153
        %v1536 = vmul.f32 %v1153, %v1535
        %v1537 = vsub.f32 1.0, %v1536
        %v1538 = vmul.f32 %v1535, %v1537
        %v1539 = vadd.f32 %v1535, %v1538
        %vm1540 = vweird.f32 %v1153
        %vm1541 = vweird.f32 %v1535
        %vm1542 = vmor %vm1540, %vm1541
        %v1543 = vsel %vm1542, %v1535, %v1539
        %v1544 = vand.u32 2147483647, %v1153
        %vm1545 = vcmp.eq.f32.partialorder %v1544, 8.507059e+37
        %v1546 = vand.u32 %v1153, 2147483648
        %v1547 = vor.u32 1.1754944e-38, %v1546
        %v1548 = vsel %vm1545, %v1547, %v1543
        %v1549 = vmul.f32 1.0, %v1548
        %v1550 = vrcp.pop %v1154
        %v1551 = vmul.f32 %v1154, %v1550
        %v1552 = vsub.f32 1.0, %v1551
        %v1553 = vmul.f32 %v1550, %v1552
        %v1554 = vadd.f32 %v1550, %v1553
        %vm1555 = vweird.f32 %v1154
        %vm1556 = vweird.f32 %v1550
        %vm1557 = vmor %vm1555, %vm1556
        %v1558 = vsel %vm1557, %v1550, %v1554
        %v1559 = vand.u32 2147483647, %v1154
        %vm1560 = vcmp.eq.f32.partialorder %v1559, 8.507059e+37
        %v1561 = vand.u32 %v1154, 2147483648
        %v1562 = vor.u32 1.1754944e-38, %v1561
        %v1563 = vsel %vm1560, %v1562, %v1558
        %v1564 = vmul.f32 1.0, %v1563
        %v1565 = vrcp.pop %v1155
        %v1566 = vmul.f32 %v1155, %v1565
        %v1567 = vsub.f32 1.0, %v1566
        %v1568 = vmul.f32 %v1565, %v1567
        %v1569 = vadd.f32 %v1565, %v1568
        %vm1570 = vweird.f32 %v1155
        %vm1571 = vweird.f32 %v1565
        %vm1572 = vmor %vm1570, %vm1571
        %v1573 = vsel %vm1572, %v1565, %v1569
        %v1574 = vand.u32 2147483647, %v1155
        %vm1575 = vcmp.eq.f32.partialorder %v1574, 8.507059e+37
        %v1576 = vand.u32 %v1155, 2147483648
        %v1577 = vor.u32 1.1754944e-38, %v1576
        %v1578 = vsel %vm1575, %v1577, %v1573
        %v1579 = vmul.f32 1.0, %v1578
        %v1580 = vrcp.pop %v1156
        %v1581 = vmul.f32 %v1156, %v1580
        %v1582 = vsub.f32 1.0, %v1581
        %v1583 = vmul.f32 %v1580, %v1582
        %v1584 = vadd.f32 %v1580, %v1583
        %vm1585 = vweird.f32 %v1156
        %vm1586 = vweird.f32 %v1580
        %vm1587 = vmor %vm1585, %vm1586
        %v1588 = vsel %vm1587, %v1580, %v1584
        %v1589 = vand.u32 2147483647, %v1156
        %vm1590 = vcmp.eq.f32.partialorder %v1589, 8.507059e+37
        %v1591 = vand.u32 %v1156, 2147483648
        %v1592 = vor.u32 1.1754944e-38, %v1591
        %v1593 = vsel %vm1590, %v1592, %v1588
        %v1594 = vmul.f32 1.0, %v1593
        %v1595 = vrcp.pop %v1157
        %v1596 = vmul.f32 %v1157, %v1595
        %v1597 = vsub.f32 1.0, %v1596
        %v1598 = vmul.f32 %v1595, %v1597
        %v1599 = vadd.f32 %v1595, %v1598
        %vm1600 = vweird.f32 %v1157
        %vm1601 = vweird.f32 %v1595
        %vm1602 = vmor %vm1600, %vm1601
        %v1603 = vsel %vm1602, %v1595, %v1599
        %v1604 = vand.u32 2147483647, %v1157
        %vm1605 = vcmp.eq.f32.partialorder %v1604, 8.507059e+37
        %v1606 = vand.u32 %v1157, 2147483648
        %v1607 = vor.u32 1.1754944e-38, %v1606
        %v1608 = vsel %vm1605, %v1607, %v1603
        %v1609 = vmul.f32 1.0, %v1608
        %v1610 = vrcp.pop %v1158
        %v1611 = vmul.f32 %v1158, %v1610
        %v1612 = vsub.f32 1.0, %v1611
        %v1613 = vmul.f32 %v1610, %v1612
        %v1614 = vadd.f32 %v1610, %v1613
        %vm1615 = vweird.f32 %v1158
        %vm1616 = vweird.f32 %v1610
        %vm1617 = vmor %vm1615, %vm1616
        %v1618 = vsel %vm1617, %v1610, %v1614
        %v1619 = vand.u32 2147483647, %v1158
        %vm1620 = vcmp.eq.f32.partialorder %v1619, 8.507059e+37
        %v1621 = vand.u32 %v1158, 2147483648
        %v1622 = vor.u32 1.1754944e-38, %v1621
        %v1623 = vsel %vm1620, %v1622, %v1618
        %v1624 = vmul.f32 1.0, %v1623
        %v1625 = vrcp.pop %v1159
        %v1626 = vmul.f32 %v1159, %v1625
        %v1627 = vsub.f32 1.0, %v1626
        %v1628 = vmul.f32 %v1625, %v1627
        %v1629 = vadd.f32 %v1625, %v1628
        %vm1630 = vweird.f32 %v1159
        %vm1631 = vweird.f32 %v1625
        %vm1632 = vmor %vm1630, %vm1631
        %v1633 = vsel %vm1632, %v1625, %v1629
        %v1634 = vand.u32 2147483647, %v1159
        %vm1635 = vcmp.eq.f32.partialorder %v1634, 8.507059e+37
        %v1636 = vand.u32 %v1159, 2147483648
        %v1637 = vor.u32 1.1754944e-38, %v1636
        %v1638 = vsel %vm1635, %v1637, %v1633
        %v1639 = vmul.f32 1.0, %v1638
        %v1640 = vmul.f32 %v1000, %v1174
        %v1641 = vmul.f32 %v1001, %v1189
        %v1642 = vmul.f32 %v1002, %v1204
        %v1643 = vmul.f32 %v1003, %v1219
        %v1644 = vmul.f32 %v1004, %v1234
        %v1645 = vmul.f32 %v1005, %v1249
        %v1646 = vmul.f32 %v1006, %v1264
        %v1647 = vmul.f32 %v1007, %v1279
        %v1648 = vmul.f32 %v1008, %v1294
        %v1649 = vmul.f32 %v1009, %v1309
        %v1650 = vmul.f32 %v1010, %v1324
        %v1651 = vmul.f32 %v1011, %v1339
        %v1652 = vmul.f32 %v1012, %v1354
        %v1653 = vmul.f32 %v1013, %v1369
        %v1654 = vmul.f32 %v1014, %v1384
        %v1655 = vmul.f32 %v1015, %v1399
        %v1656 = vmul.f32 %v1016, %v1414
        %v1657 = vmul.f32 %v1017, %v1429
        %v1658 = vmul.f32 %v1018, %v1444
        %v1659 = vmul.f32 %v1019, %v1459
        %v1660 = vmul.f32 %v1020, %v1474
        %v1661 = vmul.f32 %v1021, %v1489
        %v1662 = vmul.f32 %v1022, %v1504
        %v1663 = vmul.f32 %v1023, %v1519
        %v1664 = vmul.f32 %v1024, %v1534
        %v1665 = vmul.f32 %v1025, %v1549
        %v1666 = vmul.f32 %v1026, %v1564
        %v1667 = vmul.f32 %v1027, %v1579
        %v1668 = vmul.f32 %v1028, %v1594
        %v1669 = vmul.f32 %v1029, %v1609
        %v1670 = vmul.f32 %v1030, %v1624
        %v1671 = vmul.f32 %v1031, %v1639
        %v1672 = vld [vmem:[%s7] sm:$0x1]
        %v1673 = vpack.c.bf16 %v1640, %v1640
        %v1674 = vpack.c.bf16 %v1641, %v1641
        %v1675 = vpack.c.bf16 %v1642, %v1642
        %v1676 = vpack.c.bf16 %v1643, %v1643
        %v1677 = vpack.c.bf16 %v1644, %v1644
        %v1678 = vpack.c.bf16 %v1645, %v1645
        %v1679 = vpack.c.bf16 %v1646, %v1646
        %v1680 = vpack.c.bf16 %v1647, %v1647
        %v1681 = vpack.c.bf16 %v1648, %v1648
        %v1682 = vpack.c.bf16 %v1649, %v1649
        %v1683 = vpack.c.bf16 %v1650, %v1650
        %v1684 = vpack.c.bf16 %v1651, %v1651
        %v1685 = vpack.c.bf16 %v1652, %v1652
        %v1686 = vpack.c.bf16 %v1653, %v1653
        %v1687 = vpack.c.bf16 %v1654, %v1654
        %v1688 = vpack.c.bf16 %v1655, %v1655
        %v1689 = vpack.c.bf16 %v1656, %v1656
        %v1690 = vpack.c.bf16 %v1657, %v1657
        %v1691 = vpack.c.bf16 %v1658, %v1658
        %v1692 = vpack.c.bf16 %v1659, %v1659
        %v1693 = vpack.c.bf16 %v1660, %v1660
        %v1694 = vpack.c.bf16 %v1661, %v1661
        %v1695 = vpack.c.bf16 %v1662, %v1662
        %v1696 = vpack.c.bf16 %v1663, %v1663
        %v1697 = vpack.c.bf16 %v1664, %v1664
        %v1698 = vpack.c.bf16 %v1665, %v1665
        %v1699 = vpack.c.bf16 %v1666, %v1666
        %v1700 = vpack.c.bf16 %v1667, %v1667
        %v1701 = vpack.c.bf16 %v1668, %v1668
        %v1702 = vpack.c.bf16 %v1669, %v1669
        %v1703 = vpack.c.bf16 %v1670, %v1670
        %v1704 = vpack.c.bf16 %v1671, %v1671
        %v1737 = vunpack.c.l.b16 %v1673
        %v1738 = vunpack.c.l.b16 %v1674
        %v1739 = vunpack.c.l.b16 %v1675
        %v1740 = vunpack.c.l.b16 %v1676
        %v1741 = vunpack.c.l.b16 %v1677
        %v1742 = vunpack.c.l.b16 %v1678
        %v1743 = vunpack.c.l.b16 %v1679
        %v1744 = vunpack.c.l.b16 %v1680
        %v1745 = vunpack.c.l.b16 %v1681
        %v1746 = vunpack.c.l.b16 %v1682
        %v1747 = vunpack.c.l.b16 %v1683
        %v1748 = vunpack.c.l.b16 %v1684
        %v1749 = vunpack.c.l.b16 %v1685
        %v1750 = vunpack.c.l.b16 %v1686
        %v1751 = vunpack.c.l.b16 %v1687
        %v1752 = vunpack.c.l.b16 %v1688
        %v1753 = vunpack.c.l.b16 %v1689
        %v1754 = vunpack.c.l.b16 %v1690
        %v1755 = vunpack.c.l.b16 %v1691
        %v1756 = vunpack.c.l.b16 %v1692
        %v1757 = vunpack.c.l.b16 %v1693
        %v1758 = vunpack.c.l.b16 %v1694
        %v1759 = vunpack.c.l.b16 %v1695
        %v1760 = vunpack.c.l.b16 %v1696
        %v1761 = vunpack.c.l.b16 %v1697
        %v1762 = vunpack.c.l.b16 %v1698
        %v1763 = vunpack.c.l.b16 %v1699
        %v1764 = vunpack.c.l.b16 %v1700
        %v1765 = vunpack.c.l.b16 %v1701
        %v1766 = vunpack.c.l.b16 %v1702
        %v1767 = vunpack.c.l.b16 %v1703
        %v1768 = vunpack.c.l.b16 %v1704
        %v1769 = vpack.c.b16 %v1738, %v1737
        %v1770 = vpack.c.b16 %v1740, %v1739
        %v1771 = vpack.c.b16 %v1742, %v1741
        %v1772 = vpack.c.b16 %v1744, %v1743
        %v1773 = vpack.c.b16 %v1746, %v1745
        %v1774 = vpack.c.b16 %v1748, %v1747
        %v1775 = vpack.c.b16 %v1750, %v1749
        %v1776 = vpack.c.b16 %v1752, %v1751
        %v1777 = vpack.c.b16 %v1754, %v1753
        %v1778 = vpack.c.b16 %v1756, %v1755
        %v1779 = vpack.c.b16 %v1758, %v1757
        %v1780 = vpack.c.b16 %v1760, %v1759
        %v1781 = vpack.c.b16 %v1762, %v1761
        %v1782 = vpack.c.b16 %v1764, %v1763
        %v1783 = vpack.c.b16 %v1766, %v1765
        %v1784 = vpack.c.b16 %v1768, %v1767
        %v1786 = vshrl.u32 0, 16
        %v1788 = vrot.slane %v1786, 7
        %v1789 = vshll.u32 0, 16
        %v1791 = vor.u32 %v1788, %v1789
        %v1793 = vshrl.u32 %v1769, 16
        %v1795 = vrot.slane %v1793, 7
        %v1796 = vshll.u32 %v1769, 16
        %v1798 = vor.u32 %v1795, %v1796
        %v1800 = vshrl.u32 %v1770, 16
        %v1802 = vrot.slane %v1800, 7
        %v1803 = vshll.u32 %v1770, 16
        %v1805 = vor.u32 %v1802, %v1803
        %v1807 = vshrl.u32 %v1771, 16
        %v1809 = vrot.slane %v1807, 7
        %v1810 = vshll.u32 %v1771, 16
        %v1812 = vor.u32 %v1809, %v1810
        %v1814 = vshrl.u32 %v1772, 16
        %v1816 = vrot.slane %v1814, 7
        %v1817 = vshll.u32 %v1772, 16
        %v1819 = vor.u32 %v1816, %v1817
        %v1821 = vshrl.u32 %v1773, 16
        %v1823 = vrot.slane %v1821, 7
        %v1824 = vshll.u32 %v1773, 16
        %v1826 = vor.u32 %v1823, %v1824
        %v1828 = vshrl.u32 %v1774, 16
        %v1830 = vrot.slane %v1828, 7
        %v1831 = vshll.u32 %v1774, 16
        %v1833 = vor.u32 %v1830, %v1831
        %v1835 = vshrl.u32 %v1775, 16
        %v1837 = vrot.slane %v1835, 7
        %v1838 = vshll.u32 %v1775, 16
        %v1840 = vor.u32 %v1837, %v1838
        %v1842 = vshrl.u32 %v1776, 16
        %v1844 = vrot.slane %v1842, 7
        %v1845 = vshll.u32 %v1776, 16
        %v1847 = vor.u32 %v1844, %v1845
        %v1849 = vshrl.u32 %v1777, 16
        %v1851 = vrot.slane %v1849, 7
        %v1852 = vshll.u32 %v1777, 16
        %v1854 = vor.u32 %v1851, %v1852
        %v1856 = vshrl.u32 %v1778, 16
        %v1858 = vrot.slane %v1856, 7
        %v1859 = vshll.u32 %v1778, 16
        %v1861 = vor.u32 %v1858, %v1859
        %v1863 = vshrl.u32 %v1779, 16
        %v1865 = vrot.slane %v1863, 7
        %v1866 = vshll.u32 %v1779, 16
        %v1868 = vor.u32 %v1865, %v1866
        %v1870 = vshrl.u32 %v1780, 16
        %v1872 = vrot.slane %v1870, 7
        %v1873 = vshll.u32 %v1780, 16
        %v1875 = vor.u32 %v1872, %v1873
        %v1877 = vshrl.u32 %v1781, 16
        %v1879 = vrot.slane %v1877, 7
        %v1880 = vshll.u32 %v1781, 16
        %v1882 = vor.u32 %v1879, %v1880
        %v1884 = vshrl.u32 %v1782, 16
        %v1886 = vrot.slane %v1884, 7
        %v1887 = vshll.u32 %v1782, 16
        %v1889 = vor.u32 %v1886, %v1887
        %v1891 = vshrl.u32 %v1783, 16
        %v1893 = vrot.slane %v1891, 7
        %v1894 = vshll.u32 %v1783, 16
        %v1896 = vor.u32 %v1893, %v1894
        %v1898 = vshrl.u32 %v1784, 16
        %v1900 = vrot.slane %v1898, 7
        %v1901 = vshll.u32 %v1784, 16
        %v1903 = vor.u32 %v1900, %v1901
        %vm1938 = vcmask 1040384
        %vm1939 = vsmask.f32 256
        %vm1940 = vmand %vm1938, %vm1939
        %v1941 = vsel %vm1940, 0, %v1791
        %v1942 = vsel %vm1940, 0, %v1798
        %v1943 = vsel %vm1940, 0, %v1805
        %v1944 = vsel %vm1940, 0, %v1812
        %v1945 = vsel %vm1940, 0, %v1819
        %v1946 = vsel %vm1940, 0, %v1826
        %v1947 = vsel %vm1940, 0, %v1833
        %v1948 = vsel %vm1940, 0, %v1840
        %v1949 = vsel %vm1940, 0, %v1847
        %v1950 = vsel %vm1940, 0, %v1854
        %v1951 = vsel %vm1940, 0, %v1861
        %v1952 = vsel %vm1940, 0, %v1868
        %v1953 = vsel %vm1940, 0, %v1875
        %v1954 = vsel %vm1940, 0, %v1882
        %v1955 = vsel %vm1940, 0, %v1889
        %v1956 = vsel %vm1940, 0, %v1896
        %v1957 = vsel %vm1940, 0, %v1903
        %v1958 = vsel %vm1940, %v1788, 0
        %v1959 = vsel %vm1940, %v1795, 0
        %v1960 = vsel %vm1940, %v1802, 0
        %v1961 = vsel %vm1940, %v1809, 0
        %v1962 = vsel %vm1940, %v1816, 0
        %v1963 = vsel %vm1940, %v1823, 0
        %v1964 = vsel %vm1940, %v1830, 0
        %v1965 = vsel %vm1940, %v1837, 0
        %v1966 = vsel %vm1940, %v1844, 0
        %v1967 = vsel %vm1940, %v1851, 0
        %v1968 = vsel %vm1940, %v1858, 0
        %v1969 = vsel %vm1940, %v1865, 0
        %v1970 = vsel %vm1940, %v1872, 0
        %v1971 = vsel %vm1940, %v1879, 0
        %v1972 = vsel %vm1940, %v1886, 0
        %v1973 = vsel %vm1940, %v1893, 0
        %v1974 = vsel %vm1940, %v1900, 0
        %vm1975 = vsmask.f32 7424
        %v1977 = vshrl.u32 %v1941, 16
        %v1979 = vshll.u32 %v1941, 16
        %v1981 = vrot.slane %v1979, 1
        %v1982 = vor.u32 %v1977, %v1981
        %v1984 = vshll.u32 %v1958, 16
        %v1986 = vrot.slane %v1984, 1
        %v1987 = vsel %vm1975, %v1982, %v1986
        %v1989 = vshrl.u32 %v1942, 16
        %v1991 = vshll.u32 %v1942, 16
        %v1993 = vrot.slane %v1991, 1
        %v1994 = vor.u32 %v1989, %v1993
        %v1996 = vshll.u32 %v1959, 16
        %v1998 = vrot.slane %v1996, 1
        %v1999 = vsel %vm1975, %v1994, %v1998
        %v2001 = vshrl.u32 %v1943, 16
        %v2003 = vshll.u32 %v1943, 16
        %v2005 = vrot.slane %v2003, 1
        %v2006 = vor.u32 %v2001, %v2005
        %v2008 = vshll.u32 %v1960, 16
        %v2010 = vrot.slane %v2008, 1
        %v2011 = vsel %vm1975, %v2006, %v2010
        %v2013 = vshrl.u32 %v1944, 16
        %v2015 = vshll.u32 %v1944, 16
        %v2017 = vrot.slane %v2015, 1
        %v2018 = vor.u32 %v2013, %v2017
        %v2020 = vshll.u32 %v1961, 16
        %v2022 = vrot.slane %v2020, 1
        %v2023 = vsel %vm1975, %v2018, %v2022
        %v2025 = vshrl.u32 %v1945, 16
        %v2027 = vshll.u32 %v1945, 16
        %v2029 = vrot.slane %v2027, 1
        %v2030 = vor.u32 %v2025, %v2029
        %v2032 = vshll.u32 %v1962, 16
        %v2034 = vrot.slane %v2032, 1
        %v2035 = vsel %vm1975, %v2030, %v2034
        %v2037 = vshrl.u32 %v1946, 16
        %v2039 = vshll.u32 %v1946, 16
        %v2041 = vrot.slane %v2039, 1
        %v2042 = vor.u32 %v2037, %v2041
        %v2044 = vshll.u32 %v1963, 16
        %v2046 = vrot.slane %v2044, 1
        %v2047 = vsel %vm1975, %v2042, %v2046
        %v2049 = vshrl.u32 %v1947, 16
        %v2051 = vshll.u32 %v1947, 16
        %v2053 = vrot.slane %v2051, 1
        %v2054 = vor.u32 %v2049, %v2053
        %v2056 = vshll.u32 %v1964, 16
        %v2058 = vrot.slane %v2056, 1
        %v2059 = vsel %vm1975, %v2054, %v2058
        %v2061 = vshrl.u32 %v1948, 16
        %v2063 = vshll.u32 %v1948, 16
        %v2065 = vrot.slane %v2063, 1
        %v2066 = vor.u32 %v2061, %v2065
        %v2068 = vshll.u32 %v1965, 16
        %v2070 = vrot.slane %v2068, 1
        %v2071 = vsel %vm1975, %v2066, %v2070
        %v2073 = vshrl.u32 %v1949, 16
        %v2075 = vshll.u32 %v1949, 16
        %v2077 = vrot.slane %v2075, 1
        %v2078 = vor.u32 %v2073, %v2077
        %v2080 = vshll.u32 %v1966, 16
        %v2082 = vrot.slane %v2080, 1
        %v2083 = vsel %vm1975, %v2078, %v2082
        %v2085 = vshrl.u32 %v1950, 16
        %v2087 = vshll.u32 %v1950, 16
        %v2089 = vrot.slane %v2087, 1
        %v2090 = vor.u32 %v2085, %v2089
        %v2092 = vshll.u32 %v1967, 16
        %v2094 = vrot.slane %v2092, 1
        %v2095 = vsel %vm1975, %v2090, %v2094
        %v2097 = vshrl.u32 %v1951, 16
        %v2099 = vshll.u32 %v1951, 16
        %v2101 = vrot.slane %v2099, 1
        %v2102 = vor.u32 %v2097, %v2101
        %v2104 = vshll.u32 %v1968, 16
        %v2106 = vrot.slane %v2104, 1
        %v2107 = vsel %vm1975, %v2102, %v2106
        %v2109 = vshrl.u32 %v1952, 16
        %v2111 = vshll.u32 %v1952, 16
        %v2113 = vrot.slane %v2111, 1
        %v2114 = vor.u32 %v2109, %v2113
        %v2116 = vshll.u32 %v1969, 16
        %v2118 = vrot.slane %v2116, 1
        %v2119 = vsel %vm1975, %v2114, %v2118
        %v2121 = vshrl.u32 %v1953, 16
        %v2123 = vshll.u32 %v1953, 16
        %v2125 = vrot.slane %v2123, 1
        %v2126 = vor.u32 %v2121, %v2125
        %v2128 = vshll.u32 %v1970, 16
        %v2130 = vrot.slane %v2128, 1
        %v2131 = vsel %vm1975, %v2126, %v2130
        %v2133 = vshrl.u32 %v1954, 16
        %v2135 = vshll.u32 %v1954, 16
        %v2137 = vrot.slane %v2135, 1
        %v2138 = vor.u32 %v2133, %v2137
        %v2140 = vshll.u32 %v1971, 16
        %v2142 = vrot.slane %v2140, 1
        %v2143 = vsel %vm1975, %v2138, %v2142
        %v2145 = vshrl.u32 %v1955, 16
        %v2147 = vshll.u32 %v1955, 16
        %v2149 = vrot.slane %v2147, 1
        %v2150 = vor.u32 %v2145, %v2149
        %v2152 = vshll.u32 %v1972, 16
        %v2154 = vrot.slane %v2152, 1
        %v2155 = vsel %vm1975, %v2150, %v2154
        %v2157 = vshrl.u32 %v1956, 16
        %v2159 = vshll.u32 %v1956, 16
        %v2161 = vrot.slane %v2159, 1
        %v2162 = vor.u32 %v2157, %v2161
        %v2164 = vshll.u32 %v1973, 16
        %v2166 = vrot.slane %v2164, 1
        %v2167 = vsel %vm1975, %v2162, %v2166
        %2168 = vrot.lane.b32.xlu0 %v1987, 32
        %v2169 = vpop.permute.xlu0 %2168
        %2170 = vrot.lane.b32.xlu0 %v1999, 32
        %v2171 = vpop.permute.xlu0 %2170
        %2172 = vrot.lane.b32.xlu0 %v2011, 32
        %v2173 = vpop.permute.xlu0 %2172
        %2174 = vrot.lane.b32.xlu0 %v2023, 32
        %v2175 = vpop.permute.xlu0 %2174
        %2176 = vrot.lane.b32.xlu0 %v2035, 32
        %v2177 = vpop.permute.xlu0 %2176
        %2178 = vrot.lane.b32.xlu0 %v2047, 32
        %v2179 = vpop.permute.xlu0 %2178
        %2180 = vrot.lane.b32.xlu0 %v2059, 32
        %v2181 = vpop.permute.xlu0 %2180
        %2182 = vrot.lane.b32.xlu0 %v2071, 32
        %v2183 = vpop.permute.xlu0 %2182
        %2184 = vrot.lane.b32.xlu0 %v2083, 32
        %v2185 = vpop.permute.xlu0 %2184
        %2186 = vrot.lane.b32.xlu0 %v2095, 32
        %v2187 = vpop.permute.xlu0 %2186
        %2188 = vrot.lane.b32.xlu0 %v2107, 32
        %v2189 = vpop.permute.xlu0 %2188
        %2190 = vrot.lane.b32.xlu0 %v2119, 32
        %v2191 = vpop.permute.xlu0 %2190
        %2192 = vrot.lane.b32.xlu0 %v2131, 32
        %v2193 = vpop.permute.xlu0 %2192
        %2194 = vrot.lane.b32.xlu0 %v2143, 32
        %v2195 = vpop.permute.xlu0 %2194
        %2196 = vrot.lane.b32.xlu0 %v2155, 32
        %v2197 = vpop.permute.xlu0 %2196
        %2198 = vrot.lane.b32.xlu0 %v2167, 32
        %v2199 = vpop.permute.xlu0 %2198
        %vm2232 = vcmask 1046528
        %v2233 = vrot.slane %v1941, 1
        %v2234 = vrot.slane %v1958, 1
        %v2235 = vsel %vm2232, %v2233, %v2234
        %v2236 = vrot.slane %v1942, 1
        %v2237 = vrot.slane %v1959, 1
        %v2238 = vsel %vm2232, %v2236, %v2237
        %v2239 = vrot.slane %v1943, 1
        %v2240 = vrot.slane %v1960, 1
        %v2241 = vsel %vm2232, %v2239, %v2240
        %v2242 = vrot.slane %v1944, 1
        %v2243 = vrot.slane %v1961, 1
        %v2244 = vsel %vm2232, %v2242, %v2243
        %v2245 = vrot.slane %v1945, 1
        %v2246 = vrot.slane %v1962, 1
        %v2247 = vsel %vm2232, %v2245, %v2246
        %v2248 = vrot.slane %v1946, 1
        %v2249 = vrot.slane %v1963, 1
        %v2250 = vsel %vm2232, %v2248, %v2249
        %v2251 = vrot.slane %v1947, 1
        %v2252 = vrot.slane %v1964, 1
        %v2253 = vsel %vm2232, %v2251, %v2252
        %v2254 = vrot.slane %v1948, 1
        %v2255 = vrot.slane %v1965, 1
        %v2256 = vsel %vm2232, %v2254, %v2255
        %v2257 = vrot.slane %v1949, 1
        %v2258 = vrot.slane %v1966, 1
        %v2259 = vsel %vm2232, %v2257, %v2258
        %v2260 = vrot.slane %v1950, 1
        %v2261 = vrot.slane %v1967, 1
        %v2262 = vsel %vm2232, %v2260, %v2261
        %v2263 = vrot.slane %v1951, 1
        %v2264 = vrot.slane %v1968, 1
        %v2265 = vsel %vm2232, %v2263, %v2264
        %v2266 = vrot.slane %v1952, 1
        %v2267 = vrot.slane %v1969, 1
        %v2268 = vsel %vm2232, %v2266, %v2267
        %v2269 = vrot.slane %v1953, 1
        %v2270 = vrot.slane %v1970, 1
        %v2271 = vsel %vm2232, %v2269, %v2270
        %v2272 = vrot.slane %v1954, 1
        %v2273 = vrot.slane %v1971, 1
        %v2274 = vsel %vm2232, %v2272, %v2273
        %v2275 = vrot.slane %v1955, 1
        %v2276 = vrot.slane %v1972, 1
        %v2277 = vsel %vm2232, %v2275, %v2276
        %v2278 = vrot.slane %v1956, 1
        %v2279 = vrot.slane %v1973, 1
        %v2280 = vsel %vm2232, %v2278, %v2279
        %2281 = vrot.lane.b32.xlu0 %v2235, 64
        %v2282 = vpop.permute.xlu0 %2281
        %2283 = vrot.lane.b32.xlu0 %v2238, 64
        %v2284 = vpop.permute.xlu0 %2283
        %2285 = vrot.lane.b32.xlu0 %v2241, 64
        %v2286 = vpop.permute.xlu0 %2285
        %2287 = vrot.lane.b32.xlu0 %v2244, 64
        %v2288 = vpop.permute.xlu0 %2287
        %2289 = vrot.lane.b32.xlu0 %v2247, 64
        %v2290 = vpop.permute.xlu0 %2289
        %2291 = vrot.lane.b32.xlu0 %v2250, 64
        %v2292 = vpop.permute.xlu0 %2291
        %2293 = vrot.lane.b32.xlu0 %v2253, 64
        %v2294 = vpop.permute.xlu0 %2293
        %2295 = vrot.lane.b32.xlu0 %v2256, 64
        %v2296 = vpop.permute.xlu0 %2295
        %2297 = vrot.lane.b32.xlu0 %v2259, 64
        %v2298 = vpop.permute.xlu0 %2297
        %2299 = vrot.lane.b32.xlu0 %v2262, 64
        %v2300 = vpop.permute.xlu0 %2299
        %2301 = vrot.lane.b32.xlu0 %v2265, 64
        %v2302 = vpop.permute.xlu0 %2301
        %2303 = vrot.lane.b32.xlu0 %v2268, 64
        %v2304 = vpop.permute.xlu0 %2303
        %2305 = vrot.lane.b32.xlu0 %v2271, 64
        %v2306 = vpop.permute.xlu0 %2305
        %2307 = vrot.lane.b32.xlu0 %v2274, 64
        %v2308 = vpop.permute.xlu0 %2307
        %2309 = vrot.lane.b32.xlu0 %v2277, 64
        %v2310 = vpop.permute.xlu0 %2309
        %2311 = vrot.lane.b32.xlu0 %v2280, 64
        %v2312 = vpop.permute.xlu0 %2311
        %v2314 = vsel %vm648, %v1941, %v2169
        %v2316 = vsel %vm648, %v1942, %v2171
        %v2318 = vsel %vm648, %v1943, %v2173
        %v2320 = vsel %vm648, %v1944, %v2175
        %v2322 = vsel %vm648, %v1945, %v2177
        %v2324 = vsel %vm648, %v1946, %v2179
        %v2326 = vsel %vm648, %v1947, %v2181
        %v2328 = vsel %vm648, %v1948, %v2183
        %v2330 = vsel %vm648, %v1949, %v2185
        %v2332 = vsel %vm648, %v1950, %v2187
        %v2334 = vsel %vm648, %v1951, %v2189
        %v2336 = vsel %vm648, %v1952, %v2191
        %v2338 = vsel %vm648, %v1953, %v2193
        %v2340 = vsel %vm648, %v1954, %v2195
        %v2342 = vsel %vm648, %v1955, %v2197
        %v2344 = vsel %vm648, %v1956, %v2199
        %vm2345 = vcmask 523264
        %v2347 = vsel %vm2345, %v2314, %v2282
        %v2349 = vsel %vm2345, %v2316, %v2284
        %v2351 = vsel %vm2345, %v2318, %v2286
        %v2353 = vsel %vm2345, %v2320, %v2288
        %v2355 = vsel %vm2345, %v2322, %v2290
        %v2357 = vsel %vm2345, %v2324, %v2292
        %v2359 = vsel %vm2345, %v2326, %v2294
        %v2361 = vsel %vm2345, %v2328, %v2296
        %v2363 = vsel %vm2345, %v2330, %v2298
        %v2365 = vsel %vm2345, %v2332, %v2300
        %v2367 = vsel %vm2345, %v2334, %v2302
        %v2369 = vsel %vm2345, %v2336, %v2304
        %v2371 = vsel %vm2345, %v2338, %v2306
        %v2373 = vsel %vm2345, %v2340, %v2308
        %v2375 = vsel %vm2345, %v2342, %v2310
        %v2377 = vsel %vm2345, %v2344, %v2312
        %v2379 = vshrl.u32 %v1957, 16
        %v2381 = vshll.u32 %v1957, 16
        %v2383 = vrot.slane %v2381, 1
        %v2384 = vor.u32 %v2379, %v2383
        %v2386 = vshll.u32 %v1974, 16
        %v2388 = vrot.slane %v2386, 1
        %v2389 = vsel %vm1975, %v2384, %v2388
        %2390 = vrot.lane.b32.xlu0 %v2389, 32
        %v2391 = vpop.permute.xlu0 %2390
        %v2394 = vrot.slane %v1957, 1
        %v2395 = vrot.slane %v1974, 1
        %v2396 = vsel %vm2232, %v2394, %v2395
        %2397 = vrot.lane.b32.xlu0 %v2396, 64
        %v2398 = vpop.permute.xlu0 %2397
        %v2400 = vsel %vm648, %v1957, %v2391
        %v2402 = vsel %vm2345, %v2400, %v2398
        %2419 = vrot.lane.b32.xlu0 %v2349, 96
        %v2420 = vpop.permute.xlu0 %2419
        %2421 = vrot.lane.b32.xlu0 %v2351, 96
        %v2422 = vpop.permute.xlu0 %2421
        %2423 = vrot.lane.b32.xlu0 %v2353, 96
        %v2424 = vpop.permute.xlu0 %2423
        %2425 = vrot.lane.b32.xlu0 %v2355, 96
        %v2426 = vpop.permute.xlu0 %2425
        %2427 = vrot.lane.b32.xlu0 %v2357, 96
        %v2428 = vpop.permute.xlu0 %2427
        %2429 = vrot.lane.b32.xlu0 %v2359, 96
        %v2430 = vpop.permute.xlu0 %2429
        %2431 = vrot.lane.b32.xlu0 %v2361, 96
        %v2432 = vpop.permute.xlu0 %2431
        %2433 = vrot.lane.b32.xlu0 %v2363, 96
        %v2434 = vpop.permute.xlu0 %2433
        %2435 = vrot.lane.b32.xlu0 %v2365, 96
        %v2436 = vpop.permute.xlu0 %2435
        %2437 = vrot.lane.b32.xlu0 %v2367, 96
        %v2438 = vpop.permute.xlu0 %2437
        %2439 = vrot.lane.b32.xlu0 %v2369, 96
        %v2440 = vpop.permute.xlu0 %2439
        %2441 = vrot.lane.b32.xlu0 %v2371, 96
        %v2442 = vpop.permute.xlu0 %2441
        %2443 = vrot.lane.b32.xlu0 %v2373, 96
        %v2444 = vpop.permute.xlu0 %2443
        %2445 = vrot.lane.b32.xlu0 %v2375, 96
        %v2446 = vpop.permute.xlu0 %2445
        %2447 = vrot.lane.b32.xlu0 %v2377, 96
        %v2448 = vpop.permute.xlu0 %2447
        %2449 = vrot.lane.b32.xlu0 %v2402, 96
        %v2450 = vpop.permute.xlu0 %2449
        %2452 = vrot.lane.b32.xlu0 %v2351, 64
        %v2453 = vpop.permute.xlu0 %2452
        %2454 = vrot.lane.b32.xlu0 %v2353, 64
        %v2455 = vpop.permute.xlu0 %2454
        %2456 = vrot.lane.b32.xlu0 %v2355, 64
        %v2457 = vpop.permute.xlu0 %2456
        %2458 = vrot.lane.b32.xlu0 %v2357, 64
        %v2459 = vpop.permute.xlu0 %2458
        %2460 = vrot.lane.b32.xlu0 %v2359, 64
        %v2461 = vpop.permute.xlu0 %2460
        %2462 = vrot.lane.b32.xlu0 %v2361, 64
        %v2463 = vpop.permute.xlu0 %2462
        %2464 = vrot.lane.b32.xlu0 %v2363, 64
        %v2465 = vpop.permute.xlu0 %2464
        %2466 = vrot.lane.b32.xlu0 %v2365, 64
        %v2467 = vpop.permute.xlu0 %2466
        %2468 = vrot.lane.b32.xlu0 %v2367, 64
        %v2469 = vpop.permute.xlu0 %2468
        %2470 = vrot.lane.b32.xlu0 %v2369, 64
        %v2471 = vpop.permute.xlu0 %2470
        %2472 = vrot.lane.b32.xlu0 %v2371, 64
        %v2473 = vpop.permute.xlu0 %2472
        %2474 = vrot.lane.b32.xlu0 %v2373, 64
        %v2475 = vpop.permute.xlu0 %2474
        %2476 = vrot.lane.b32.xlu0 %v2375, 64
        %v2477 = vpop.permute.xlu0 %2476
        %2478 = vrot.lane.b32.xlu0 %v2377, 64
        %v2479 = vpop.permute.xlu0 %2478
        %2480 = vrot.lane.b32.xlu0 %v2402, 64
        %v2481 = vpop.permute.xlu0 %2480
        %2482 = vrot.lane.b32.xlu0 %v2347, 64
        %v2483 = vpop.permute.xlu0 %2482
        %vm2484 = vcmask 785408
        %v2486 = vsel %vm2484, %v2347, %v2420
        %v2489 = vsel %vm2484, %v2349, %v2422
        %v2492 = vsel %vm2484, %v2351, %v2424
        %v2495 = vsel %vm2484, %v2353, %v2426
        %v2498 = vsel %vm2484, %v2355, %v2428
        %v2501 = vsel %vm2484, %v2357, %v2430
        %v2504 = vsel %vm2484, %v2359, %v2432
        %v2507 = vsel %vm2484, %v2361, %v2434
        %v2510 = vsel %vm2484, %v2363, %v2436
        %v2513 = vsel %vm2484, %v2365, %v2438
        %v2516 = vsel %vm2484, %v2367, %v2440
        %v2519 = vsel %vm2484, %v2369, %v2442
        %v2522 = vsel %vm2484, %v2371, %v2444
        %v2525 = vsel %vm2484, %v2373, %v2446
        %v2528 = vsel %vm2484, %v2375, %v2448
        %v2531 = vsel %vm2484, %v2377, %v2450
        %v2534 = vsel %vm2345, %v2420, %v2453
        %v2537 = vsel %vm2345, %v2422, %v2455
        %v2540 = vsel %vm2345, %v2424, %v2457
        %v2543 = vsel %vm2345, %v2426, %v2459
        %v2546 = vsel %vm2345, %v2428, %v2461
        %v2549 = vsel %vm2345, %v2430, %v2463
        %v2552 = vsel %vm2345, %v2432, %v2465
        %v2555 = vsel %vm2345, %v2434, %v2467
        %v2558 = vsel %vm2345, %v2436, %v2469
        %v2561 = vsel %vm2345, %v2438, %v2471
        %v2564 = vsel %vm2345, %v2440, %v2473
        %v2567 = vsel %vm2345, %v2442, %v2475
        %v2570 = vsel %vm2345, %v2444, %v2477
        %v2573 = vsel %vm2345, %v2446, %v2479
        %v2576 = vsel %vm2345, %v2448, %v2481
        %v2579 = vsel %vm2345, %v2450, %v2483
        %v2581 = vld [vmem:[%s6] sm:$0xf]
        %v2582 = vld [vmem:[%s6 + $0x4] sm:$0xf]
        %v2583 = vld [vmem:[%s6 + $0x8] sm:$0xf]
        %v2584 = vld [vmem:[%s6 + $0xc] sm:$0xf]
        %v2585 = vld [vmem:[%s6 + $0x10] sm:$0xf]
        %v2586 = vld [vmem:[%s6 + $0x14] sm:$0xf]
        %v2587 = vld [vmem:[%s6 + $0x18] sm:$0xf]
        %v2588 = vld [vmem:[%s6 + $0x1c] sm:$0xf]
        %v2589 = vld [vmem:[%s6 + $0x20] sm:$0xf]
        %v2590 = vld [vmem:[%s6 + $0x24] sm:$0xf]
        %v2591 = vld [vmem:[%s6 + $0x28] sm:$0xf]
        %v2592 = vld [vmem:[%s6 + $0x2c] sm:$0xf]
        %v2593 = vld [vmem:[%s6 + $0x30] sm:$0xf]
        %v2594 = vld [vmem:[%s6 + $0x34] sm:$0xf]
        %v2595 = vld [vmem:[%s6 + $0x38] sm:$0xf]
        %v2596 = vld [vmem:[%s6 + $0x3c] sm:$0xf]
        %v2597 = vld [vmem:[%s6 + $0x40] sm:$0xf]
        %v2598 = vld [vmem:[%s6 + $0x44] sm:$0xf]
        %v2599 = vld [vmem:[%s6 + $0x48] sm:$0xf]
        %v2600 = vld [vmem:[%s6 + $0x4c] sm:$0xf]
        %v2601 = vld [vmem:[%s6 + $0x50] sm:$0xf]
        %v2602 = vld [vmem:[%s6 + $0x54] sm:$0xf]
        %v2603 = vld [vmem:[%s6 + $0x58] sm:$0xf]
        %v2604 = vld [vmem:[%s6 + $0x5c] sm:$0xf]
        %v2605 = vld [vmem:[%s6 + $0x60] sm:$0xf]
        %v2606 = vld [vmem:[%s6 + $0x64] sm:$0xf]
        %v2607 = vld [vmem:[%s6 + $0x68] sm:$0xf]
        %v2608 = vld [vmem:[%s6 + $0x6c] sm:$0xf]
        %v2609 = vld [vmem:[%s6 + $0x70] sm:$0xf]
        %v2610 = vld [vmem:[%s6 + $0x74] sm:$0xf]
        %v2611 = vld [vmem:[%s6 + $0x78] sm:$0xf]
        %v2612 = vld [vmem:[%s6 + $0x7c] sm:$0xf]
        %v2613 = vld [vmem:[%s6 + $0x80] sm:$0xf]
        %v2614 = vld [vmem:[%s6 + $0x84] sm:$0xf]
        %v2615 = vld [vmem:[%s6 + $0x88] sm:$0xf]
        %v2616 = vld [vmem:[%s6 + $0x8c] sm:$0xf]
        %v2618 = vperm.slane %v1672, 0
        %v2656 = vunpack.c.l.b16 %v2581
        %v2657 = vunpack.c.l.b16 %v2582
        %v2658 = vunpack.c.l.b16 %v2583
        %v2659 = vunpack.c.l.b16 %v2584
        %v2660 = vunpack.c.l.b16 %v2585
        %v2661 = vunpack.c.l.b16 %v2586
        %v2662 = vunpack.c.l.b16 %v2587
        %v2663 = vunpack.c.l.b16 %v2588
        %v2664 = vunpack.c.l.b16 %v2589
        %v2665 = vunpack.c.l.b16 %v2590
        %v2666 = vunpack.c.l.b16 %v2591
        %v2667 = vunpack.c.l.b16 %v2592
        %v2668 = vunpack.c.l.b16 %v2593
        %v2669 = vunpack.c.l.b16 %v2594
        %v2670 = vunpack.c.l.b16 %v2595
        %v2671 = vunpack.c.l.b16 %v2596
        %v2672 = vunpack.c.l.b16 %v2597
        %v2673 = vunpack.c.l.b16 %v2598
        %v2674 = vunpack.c.l.b16 %v2599
        %v2675 = vunpack.c.l.b16 %v2600
        %v2676 = vunpack.c.l.b16 %v2601
        %v2677 = vunpack.c.l.b16 %v2602
        %v2678 = vunpack.c.l.b16 %v2603
        %v2679 = vunpack.c.l.b16 %v2604
        %v2680 = vunpack.c.l.b16 %v2605
        %v2681 = vunpack.c.l.b16 %v2606
        %v2682 = vunpack.c.l.b16 %v2607
        %v2683 = vunpack.c.l.b16 %v2608
        %v2684 = vunpack.c.l.b16 %v2609
        %v2685 = vunpack.c.l.b16 %v2610
        %v2686 = vunpack.c.l.b16 %v2611
        %v2687 = vunpack.c.l.b16 %v2612
        %v2688 = vunpack.c.l.b16 %v2613
        %v2689 = vunpack.c.l.b16 %v2614
        %v2690 = vunpack.c.l.b16 %v2615
        %v2691 = vunpack.c.l.b16 %v2616
        %v2692 = vpack.c.b16 %v2657, %v2656
        %v2693 = vpack.c.b16 %v2659, %v2658
        %v2694 = vpack.c.b16 %v2661, %v2660
        %v2695 = vpack.c.b16 %v2663, %v2662
        %v2696 = vpack.c.b16 %v2665, %v2664
        %v2697 = vpack.c.b16 %v2667, %v2666
        %v2698 = vpack.c.b16 %v2669, %v2668
        %v2699 = vpack.c.b16 %v2671, %v2670
        %v2700 = vpack.c.b16 %v2673, %v2672
        %v2701 = vpack.c.b16 %v2675, %v2674
        %v2702 = vpack.c.b16 %v2677, %v2676
        %v2703 = vpack.c.b16 %v2679, %v2678
        %v2704 = vpack.c.b16 %v2681, %v2680
        %v2705 = vpack.c.b16 %v2683, %v2682
        %v2706 = vpack.c.b16 %v2685, %v2684
        %v2707 = vpack.c.b16 %v2687, %v2686
        %v2708 = vpack.c.b16 %v2689, %v2688
        %v2709 = vpack.c.b16 %v2691, %v2690
        %v2728 = vsel %vm648, %v2453, 0
        %v2730 = vsel %vm648, %v2455, 0
        %v2732 = vsel %vm648, %v2457, 0
        %v2734 = vsel %vm648, %v2459, 0
        %v2736 = vsel %vm648, %v2461, 0
        %v2738 = vsel %vm648, %v2463, 0
        %v2740 = vsel %vm648, %v2465, 0
        %v2742 = vsel %vm648, %v2467, 0
        %v2744 = vsel %vm648, %v2469, 0
        %v2746 = vsel %vm648, %v2471, 0
        %v2748 = vsel %vm648, %v2473, 0
        %v2750 = vsel %vm648, %v2475, 0
        %v2752 = vsel %vm648, %v2477, 0
        %v2754 = vsel %vm648, %v2479, 0
        %v2756 = vsel %vm648, %v2481, 0
        %v2758 = vsel %vm648, %v2483, 0
        %2760 = vmatpush.bf16.msra.mxu0 %v2699
        %2761 = vmatpush.bf16.msra.mxu0 %v2698
        %2762 = vmatpush.bf16.msra.mxu0 %v2697
        %2763 = vmatpush.bf16.msra.mxu0 %v2696
        %2764 = vmatpush.bf16.msra.mxu0 %v2695
        %2765 = vmatpush.bf16.msra.mxu0 %v2694
        %2766 = vmatpush.bf16.msra.mxu0 %v2693
        %2767 = vmatpush.bf16.msra.mxu0 %v2692
        %2768 = vmatmul.bf16.gmra.mxu0 %v2486
        %v2769 = vpop.f32.mrf.mxu0
        %v2770 = vadd.f32 %v2618, %v2769
        %v2771 = vpop.f32.mrf.mxu0
        %v2772 = vadd.f32 %v2618, %v2771
        %2773 = vmatmul.bf16.gmra.mxu0 %v2489
        %v2774 = vpop.f32.mrf.mxu0
        %v2775 = vadd.f32 %v2618, %v2774
        %v2776 = vpop.f32.mrf.mxu0
        %v2777 = vadd.f32 %v2618, %v2776
        %2778 = vmatmul.bf16.gmra.mxu0 %v2492
        %v2779 = vpop.f32.mrf.mxu0
        %v2780 = vadd.f32 %v2618, %v2779
        %v2781 = vpop.f32.mrf.mxu0
        %v2782 = vadd.f32 %v2618, %v2781
        %2783 = vmatmul.bf16.gmra.mxu0 %v2495
        %v2784 = vpop.f32.mrf.mxu0
        %v2785 = vadd.f32 %v2618, %v2784
        %v2786 = vpop.f32.mrf.mxu0
        %v2787 = vadd.f32 %v2618, %v2786
        %2788 = vmatmul.bf16.gmra.mxu0 %v2498
        %v2789 = vpop.f32.mrf.mxu0
        %v2790 = vadd.f32 %v2618, %v2789
        %v2791 = vpop.f32.mrf.mxu0
        %v2792 = vadd.f32 %v2618, %v2791
        %2793 = vmatmul.bf16.gmra.mxu0 %v2501
        %v2794 = vpop.f32.mrf.mxu0
        %v2795 = vadd.f32 %v2618, %v2794
        %v2796 = vpop.f32.mrf.mxu0
        %v2797 = vadd.f32 %v2618, %v2796
        %2798 = vmatmul.bf16.gmra.mxu0 %v2504
        %v2799 = vpop.f32.mrf.mxu0
        %v2800 = vadd.f32 %v2618, %v2799
        %v2801 = vpop.f32.mrf.mxu0
        %v2802 = vadd.f32 %v2618, %v2801
        %2803 = vmatmul.bf16.gmra.mxu0 %v2507
        %v2804 = vpop.f32.mrf.mxu0
        %v2805 = vadd.f32 %v2618, %v2804
        %v2806 = vpop.f32.mrf.mxu0
        %v2807 = vadd.f32 %v2618, %v2806
        %2808 = vmatmul.bf16.gmra.mxu0 %v2510
        %v2809 = vpop.f32.mrf.mxu0
        %v2810 = vadd.f32 %v2618, %v2809
        %v2811 = vpop.f32.mrf.mxu0
        %v2812 = vadd.f32 %v2618, %v2811
        %2813 = vmatmul.bf16.gmra.mxu0 %v2513
        %v2814 = vpop.f32.mrf.mxu0
        %v2815 = vadd.f32 %v2618, %v2814
        %v2816 = vpop.f32.mrf.mxu0
        %v2817 = vadd.f32 %v2618, %v2816
        %2818 = vmatmul.bf16.gmra.mxu0 %v2516
        %v2819 = vpop.f32.mrf.mxu0
        %v2820 = vadd.f32 %v2618, %v2819
        %v2821 = vpop.f32.mrf.mxu0
        %v2822 = vadd.f32 %v2618, %v2821
        %2823 = vmatmul.bf16.gmra.mxu0 %v2519
        %v2824 = vpop.f32.mrf.mxu0
        %v2825 = vadd.f32 %v2618, %v2824
        %v2826 = vpop.f32.mrf.mxu0
        %v2827 = vadd.f32 %v2618, %v2826
        %2828 = vmatmul.bf16.gmra.mxu0 %v2522
        %v2829 = vpop.f32.mrf.mxu0
        %v2830 = vadd.f32 %v2618, %v2829
        %v2831 = vpop.f32.mrf.mxu0
        %v2832 = vadd.f32 %v2618, %v2831
        %2833 = vmatmul.bf16.gmra.mxu0 %v2525
        %v2834 = vpop.f32.mrf.mxu0
        %v2835 = vadd.f32 %v2618, %v2834
        %v2836 = vpop.f32.mrf.mxu0
        %v2837 = vadd.f32 %v2618, %v2836
        %2838 = vmatmul.bf16.gmra.mxu0 %v2528
        %v2839 = vpop.f32.mrf.mxu0
        %v2840 = vadd.f32 %v2618, %v2839
        %v2841 = vpop.f32.mrf.mxu0
        %v2842 = vadd.f32 %v2618, %v2841
        %2843 = vmatmul.bf16.gmra.mxu0 %v2531
        %v2844 = vpop.f32.mrf.mxu0
        %v2845 = vadd.f32 %v2618, %v2844
        %v2846 = vpop.f32.mrf.mxu0
        %v2847 = vadd.f32 %v2618, %v2846
        %2848 = vdwg.mxu0
        %2849 = vmatpush.bf16.msra.mxu0 %v2707
        %2850 = vmatpush.bf16.msra.mxu0 %v2706
        %2851 = vmatpush.bf16.msra.mxu0 %v2705
        %2852 = vmatpush.bf16.msra.mxu0 %v2704
        %2853 = vmatpush.bf16.msra.mxu0 %v2703
        %2854 = vmatpush.bf16.msra.mxu0 %v2702
        %2855 = vmatpush.bf16.msra.mxu0 %v2701
        %2856 = vmatpush.bf16.msra.mxu0 %v2700
        %2857 = vmatmul.bf16.gmra.mxu0 %v2534
        %v2858 = vpop.f32.mrf.mxu0
        %v2859 = vadd.f32 %v2770, %v2858
        %v2860 = vpop.f32.mrf.mxu0
        %v2861 = vadd.f32 %v2772, %v2860
        %2862 = vmatmul.bf16.gmra.mxu0 %v2537
        %v2863 = vpop.f32.mrf.mxu0
        %v2864 = vadd.f32 %v2775, %v2863
        %v2865 = vpop.f32.mrf.mxu0
        %v2866 = vadd.f32 %v2777, %v2865
        %2867 = vmatmul.bf16.gmra.mxu0 %v2540
        %v2868 = vpop.f32.mrf.mxu0
        %v2869 = vadd.f32 %v2780, %v2868
        %v2870 = vpop.f32.mrf.mxu0
        %v2871 = vadd.f32 %v2782, %v2870
        %2872 = vmatmul.bf16.gmra.mxu0 %v2543
        %v2873 = vpop.f32.mrf.mxu0
        %v2874 = vadd.f32 %v2785, %v2873
        %v2875 = vpop.f32.mrf.mxu0
        %v2876 = vadd.f32 %v2787, %v2875
        %2877 = vmatmul.bf16.gmra.mxu0 %v2546
        %v2878 = vpop.f32.mrf.mxu0
        %v2879 = vadd.f32 %v2790, %v2878
        %v2880 = vpop.f32.mrf.mxu0
        %v2881 = vadd.f32 %v2792, %v2880
        %2882 = vmatmul.bf16.gmra.mxu0 %v2549
        %v2883 = vpop.f32.mrf.mxu0
        %v2884 = vadd.f32 %v2795, %v2883
        %v2885 = vpop.f32.mrf.mxu0
        %v2886 = vadd.f32 %v2797, %v2885
        %2887 = vmatmul.bf16.gmra.mxu0 %v2552
        %v2888 = vpop.f32.mrf.mxu0
        %v2889 = vadd.f32 %v2800, %v2888
        %v2890 = vpop.f32.mrf.mxu0
        %v2891 = vadd.f32 %v2802, %v2890
        %2892 = vmatmul.bf16.gmra.mxu0 %v2555
        %v2893 = vpop.f32.mrf.mxu0
        %v2894 = vadd.f32 %v2805, %v2893
        %v2895 = vpop.f32.mrf.mxu0
        %v2896 = vadd.f32 %v2807, %v2895
        %2897 = vmatmul.bf16.gmra.mxu0 %v2558
        %v2898 = vpop.f32.mrf.mxu0
        %v2899 = vadd.f32 %v2810, %v2898
        %v2900 = vpop.f32.mrf.mxu0
        %v2901 = vadd.f32 %v2812, %v2900
        %2902 = vmatmul.bf16.gmra.mxu0 %v2561
        %v2903 = vpop.f32.mrf.mxu0
        %v2904 = vadd.f32 %v2815, %v2903
        %v2905 = vpop.f32.mrf.mxu0
        %v2906 = vadd.f32 %v2817, %v2905
        %2907 = vmatmul.bf16.gmra.mxu0 %v2564
        %v2908 = vpop.f32.mrf.mxu0
        %v2909 = vadd.f32 %v2820, %v2908
        %v2910 = vpop.f32.mrf.mxu0
        %v2911 = vadd.f32 %v2822, %v2910
        %2912 = vmatmul.bf16.gmra.mxu0 %v2567
        %v2913 = vpop.f32.mrf.mxu0
        %v2914 = vadd.f32 %v2825, %v2913
        %v2915 = vpop.f32.mrf.mxu0
        %v2916 = vadd.f32 %v2827, %v2915
        %2917 = vmatmul.bf16.gmra.mxu0 %v2570
        %v2918 = vpop.f32.mrf.mxu0
        %v2919 = vadd.f32 %v2830, %v2918
        %v2920 = vpop.f32.mrf.mxu0
        %v2921 = vadd.f32 %v2832, %v2920
        %2922 = vmatmul.bf16.gmra.mxu0 %v2573
        %v2923 = vpop.f32.mrf.mxu0
        %v2924 = vadd.f32 %v2835, %v2923
        %v2925 = vpop.f32.mrf.mxu0
        %v2926 = vadd.f32 %v2837, %v2925
        %2927 = vmatmul.bf16.gmra.mxu0 %v2576
        %v2928 = vpop.f32.mrf.mxu0
        %v2929 = vadd.f32 %v2840, %v2928
        %v2930 = vpop.f32.mrf.mxu0
        %v2931 = vadd.f32 %v2842, %v2930
        %2932 = vmatmul.bf16.gmra.mxu0 %v2579
        %v2933 = vpop.f32.mrf.mxu0
        %v2934 = vadd.f32 %v2845, %v2933
        %v2935 = vpop.f32.mrf.mxu0
        %v2936 = vadd.f32 %v2847, %v2935
        %2937 = vdwg.mxu0
        %2938 = vmatpush.bf16.msra.mxu0 0
        %2939 = vmatpush.bf16.msra.mxu0 0
        %2940 = vmatpush.bf16.msra.mxu0 0
        %2941 = vmatpush.bf16.msra.mxu0 0
        %2942 = vmatpush.bf16.msra.mxu0 0
        %2943 = vmatpush.bf16.msra.mxu0 0
        %2944 = vmatpush.bf16.msra.mxu0 %v2709
        %2945 = vmatpush.bf16.msra.mxu0 %v2708
        %2946 = vmatmul.bf16.gmra.mxu0 %v2728
        %v2947 = vpop.f32.mrf.mxu0
        %v2948 = vadd.f32 %v2859, %v2947
        %v2949 = vpop.f32.mrf.mxu0
        %v2950 = vadd.f32 %v2861, %v2949
        %2951 = vmatmul.bf16.gmra.mxu0 %v2730
        %v2952 = vpop.f32.mrf.mxu0
        %v2953 = vadd.f32 %v2864, %v2952
        %v2954 = vpop.f32.mrf.mxu0
        %v2955 = vadd.f32 %v2866, %v2954
        %2956 = vmatmul.bf16.gmra.mxu0 %v2732
        %v2957 = vpop.f32.mrf.mxu0
        %v2958 = vadd.f32 %v2869, %v2957
        %v2959 = vpop.f32.mrf.mxu0
        %v2960 = vadd.f32 %v2871, %v2959
        %2961 = vmatmul.bf16.gmra.mxu0 %v2734
        %v2962 = vpop.f32.mrf.mxu0
        %v2963 = vadd.f32 %v2874, %v2962
        %v2964 = vpop.f32.mrf.mxu0
        %v2965 = vadd.f32 %v2876, %v2964
        %2966 = vmatmul.bf16.gmra.mxu0 %v2736
        %v2967 = vpop.f32.mrf.mxu0
        %v2968 = vadd.f32 %v2879, %v2967
        %v2969 = vpop.f32.mrf.mxu0
        %v2970 = vadd.f32 %v2881, %v2969
        %2971 = vmatmul.bf16.gmra.mxu0 %v2738
        %v2972 = vpop.f32.mrf.mxu0
        %v2973 = vadd.f32 %v2884, %v2972
        %v2974 = vpop.f32.mrf.mxu0
        %v2975 = vadd.f32 %v2886, %v2974
        %2976 = vmatmul.bf16.gmra.mxu0 %v2740
        %v2977 = vpop.f32.mrf.mxu0
        %v2978 = vadd.f32 %v2889, %v2977
        %v2979 = vpop.f32.mrf.mxu0
        %v2980 = vadd.f32 %v2891, %v2979
        %2981 = vmatmul.bf16.gmra.mxu0 %v2742
        %v2982 = vpop.f32.mrf.mxu0
        %v2983 = vadd.f32 %v2894, %v2982
        %v2984 = vpop.f32.mrf.mxu0
        %v2985 = vadd.f32 %v2896, %v2984
        %2986 = vmatmul.bf16.gmra.mxu0 %v2744
        %v2987 = vpop.f32.mrf.mxu0
        %v2988 = vadd.f32 %v2899, %v2987
        %v2989 = vpop.f32.mrf.mxu0
        %v2990 = vadd.f32 %v2901, %v2989
        %2991 = vmatmul.bf16.gmra.mxu0 %v2746
        %v2992 = vpop.f32.mrf.mxu0
        %v2993 = vadd.f32 %v2904, %v2992
        %v2994 = vpop.f32.mrf.mxu0
        %v2995 = vadd.f32 %v2906, %v2994
        %2996 = vmatmul.bf16.gmra.mxu0 %v2748
        %v2997 = vpop.f32.mrf.mxu0
        %v2998 = vadd.f32 %v2909, %v2997
        %v2999 = vpop.f32.mrf.mxu0
        %v3000 = vadd.f32 %v2911, %v2999
        %3001 = vmatmul.bf16.gmra.mxu0 %v2750
        %v3002 = vpop.f32.mrf.mxu0
        %v3003 = vadd.f32 %v2914, %v3002
        %v3004 = vpop.f32.mrf.mxu0
        %v3005 = vadd.f32 %v2916, %v3004
        %3006 = vmatmul.bf16.gmra.mxu0 %v2752
        %v3007 = vpop.f32.mrf.mxu0
        %v3008 = vadd.f32 %v2919, %v3007
        %v3009 = vpop.f32.mrf.mxu0
        %v3010 = vadd.f32 %v2921, %v3009
        %3011 = vmatmul.bf16.gmra.mxu0 %v2754
        %v3012 = vpop.f32.mrf.mxu0
        %v3013 = vadd.f32 %v2924, %v3012
        %v3014 = vpop.f32.mrf.mxu0
        %v3015 = vadd.f32 %v2926, %v3014
        %3016 = vmatmul.bf16.gmra.mxu0 %v2756
        %v3017 = vpop.f32.mrf.mxu0
        %v3018 = vadd.f32 %v2929, %v3017
        %v3019 = vpop.f32.mrf.mxu0
        %v3020 = vadd.f32 %v2931, %v3019
        %3021 = vmatmul.bf16.gmra.mxu0 %v2758
        %v3022 = vpop.f32.mrf.mxu0
        %v3023 = vadd.f32 %v2934, %v3022
        %v3024 = vpop.f32.mrf.mxu0
        %v3025 = vadd.f32 %v2936, %v3024
        %3026 = vdwg.mxu0
        %v3027 = vld [vmem:[%s572] sm:$0x1]
        %v3029 = vperm.slane %v3027, 0
        %v3031 = vadd.f32 %v2948, %v3029
        %v3032 = vadd.f32 %v2950, %v3029
        %v3033 = vadd.f32 %v2953, %v3029
        %v3034 = vadd.f32 %v2955, %v3029
        %v3035 = vadd.f32 %v2958, %v3029
        %v3036 = vadd.f32 %v2960, %v3029
        %v3037 = vadd.f32 %v2963, %v3029
        %v3038 = vadd.f32 %v2965, %v3029
        %v3039 = vadd.f32 %v2968, %v3029
        %v3040 = vadd.f32 %v2970, %v3029
        %v3041 = vadd.f32 %v2973, %v3029
        %v3042 = vadd.f32 %v2975, %v3029
        %v3043 = vadd.f32 %v2978, %v3029
        %v3044 = vadd.f32 %v2980, %v3029
        %v3045 = vadd.f32 %v2983, %v3029
        %v3046 = vadd.f32 %v2985, %v3029
        %v3047 = vadd.f32 %v2988, %v3029
        %v3048 = vadd.f32 %v2990, %v3029
        %v3049 = vadd.f32 %v2993, %v3029
        %v3050 = vadd.f32 %v2995, %v3029
        %v3051 = vadd.f32 %v2998, %v3029
        %v3052 = vadd.f32 %v3000, %v3029
        %v3053 = vadd.f32 %v3003, %v3029
        %v3054 = vadd.f32 %v3005, %v3029
        %v3055 = vadd.f32 %v3008, %v3029
        %v3056 = vadd.f32 %v3010, %v3029
        %v3057 = vadd.f32 %v3013, %v3029
        %v3058 = vadd.f32 %v3015, %v3029
        %v3059 = vadd.f32 %v3018, %v3029
        %v3060 = vadd.f32 %v3020, %v3029
        %v3061 = vadd.f32 %v3023, %v3029
        %v3062 = vadd.f32 %v3025, %v3029
        %v3063 = vld [vmem:[%s8] sm:$0xff]
        %v3064 = vld [vmem:[%s8 + $0x8] sm:$0xff]
        %v3065 = vld [vmem:[%s8 + $0x10] sm:$0xff]
        %v3066 = vld [vmem:[%s8 + $0x18] sm:$0xff]
        %v3067 = vld [vmem:[%s8 + $0x20] sm:$0xff]
        %v3068 = vld [vmem:[%s8 + $0x28] sm:$0xff]
        %v3069 = vld [vmem:[%s8 + $0x30] sm:$0xff]
        %v3070 = vld [vmem:[%s8 + $0x38] sm:$0xff]
        %v3071 = vld [vmem:[%s9] sm:$0xff]
        %v3072 = vld [vmem:[%s9 + $0x8] sm:$0xff]
        %v3073 = vld [vmem:[%s9 + $0x10] sm:$0xff]
        %v3074 = vld [vmem:[%s9 + $0x18] sm:$0xff]
        %v3075 = vld [vmem:[%s10] sm:$0x1]
        %v3076 = vld [vmem:[%s11] sm:$0x1]
        %v3077 = vsel %vm2345, %v3031, 0.0
        %v3078 = vsel %vm2345, %v3032, 0.0
        %v3079 = vadd.f32 %v3077, %v3078
        %v3080 = vsel %vm2345, %v3033, 0.0
        %v3081 = vadd.f32 %v3079, %v3080
        %v3082 = vsel %vm2345, %v3034, 0.0
        %v3083 = vadd.f32 %v3081, %v3082
        %v3084 = vsel %vm2345, %v3035, 0.0
        %v3085 = vadd.f32 %v3083, %v3084
        %v3086 = vsel %vm2345, %v3036, 0.0
        %v3087 = vadd.f32 %v3085, %v3086
        %v3088 = vsel %vm2345, %v3037, 0.0
        %v3089 = vadd.f32 %v3087, %v3088
        %v3090 = vsel %vm2345, %v3038, 0.0
        %v3091 = vadd.f32 %v3089, %v3090
        %v3092 = vsel %vm2345, %v3039, 0.0
        %v3093 = vadd.f32 %v3091, %v3092
        %v3094 = vsel %vm2345, %v3040, 0.0
        %v3095 = vadd.f32 %v3093, %v3094
        %v3096 = vsel %vm2345, %v3041, 0.0
        %v3097 = vadd.f32 %v3095, %v3096
        %v3098 = vsel %vm2345, %v3042, 0.0
        %v3099 = vadd.f32 %v3097, %v3098
        %v3100 = vsel %vm2345, %v3043, 0.0
        %v3101 = vadd.f32 %v3099, %v3100
        %v3102 = vsel %vm2345, %v3044, 0.0
        %v3103 = vadd.f32 %v3101, %v3102
        %v3104 = vsel %vm2345, %v3045, 0.0
        %v3105 = vadd.f32 %v3103, %v3104
        %v3106 = vsel %vm2345, %v3046, 0.0
        %v3107 = vadd.f32 %v3105, %v3106
        %v3108 = vsel %vm2345, %v3047, 0.0
        %v3109 = vadd.f32 %v3107, %v3108
        %v3110 = vsel %vm2345, %v3048, 0.0
        %v3111 = vadd.f32 %v3109, %v3110
        %v3112 = vsel %vm2345, %v3049, 0.0
        %v3113 = vadd.f32 %v3111, %v3112
        %v3114 = vsel %vm2345, %v3050, 0.0
        %v3115 = vadd.f32 %v3113, %v3114
        %v3116 = vsel %vm2345, %v3051, 0.0
        %v3117 = vadd.f32 %v3115, %v3116
        %v3118 = vsel %vm2345, %v3052, 0.0
        %v3119 = vadd.f32 %v3117, %v3118
        %v3120 = vsel %vm2345, %v3053, 0.0
        %v3121 = vadd.f32 %v3119, %v3120
        %v3122 = vsel %vm2345, %v3054, 0.0
        %v3123 = vadd.f32 %v3121, %v3122
        %v3124 = vsel %vm2345, %v3055, 0.0
        %v3125 = vadd.f32 %v3123, %v3124
        %v3126 = vsel %vm2345, %v3056, 0.0
        %v3127 = vadd.f32 %v3125, %v3126
        %v3128 = vsel %vm2345, %v3057, 0.0
        %v3129 = vadd.f32 %v3127, %v3128
        %v3130 = vsel %vm2345, %v3058, 0.0
        %v3131 = vadd.f32 %v3129, %v3130
        %v3132 = vsel %vm2345, %v3059, 0.0
        %v3133 = vadd.f32 %v3131, %v3132
        %v3134 = vsel %vm2345, %v3060, 0.0
        %v3135 = vadd.f32 %v3133, %v3134
        %v3136 = vsel %vm2345, %v3061, 0.0
        %v3137 = vadd.f32 %v3135, %v3136
        %v3138 = vsel %vm2345, %v3062, 0.0
        %v3139 = vadd.f32 %v3137, %v3138
        %v3140 = vrot.slane %v3139, 4
        %v3141 = vadd.f32 %v3139, %v3140
        %v3142 = vrot.slane %v3141, 2
        %v3143 = vadd.f32 %v3141, %v3142
        %v3144 = vrot.slane %v3143, 1
        %v3145 = vadd.f32 %v3143, %v3144
        %v3146 = vmul.f32 %v3145, %v724
        %v3148 = vsel %vm2345, %v3146, 0
        %3150 = vmatpush.msra.mxu0 0.0
        %3151 = vmatpush.msra.mxu0 0.0
        %3152 = vmatpush.msra.mxu0 0.0
        %3153 = vmatpush.msra.mxu0 0.0
        %3154 = vmatpush.msra.mxu0 0.0
        %3155 = vmatpush.msra.mxu0 0.0
        %3156 = vmatpush.msra.mxu0 0.0
        %3157 = vmatpush.msra.mxu0 0.0
        %3158 = vmatpush.msra.mxu0 %v3070
        %3159 = vmatpush.msra.mxu0 %v3069
        %3160 = vmatpush.msra.mxu0 %v3068
        %3161 = vmatpush.msra.mxu0 %v3067
        %3162 = vmatpush.msra.mxu0 %v3066
        %3163 = vmatpush.msra.mxu0 %v3065
        %3164 = vmatpush.msra.mxu0 %v3064
        %3165 = vmatpush.msra.mxu0 %v3063
        %3166 = vmatmul.f32.gmra.mxu0 %v3148
        %v3167 = vpop.f32.mrf.mxu0
        %v3168 = vadd.f32 0.0, %v3167
        %3169 = vdwg.mxu0
        %v3170 = vmul.f32 %v3168, 0.5
        %v3172 = vsel %vm648, %v3170, 0
        %3174 = vmatpush.msra.mxu0 0.0
        %3175 = vmatpush.msra.mxu0 0.0
        %3176 = vmatpush.msra.mxu0 0.0
        %3177 = vmatpush.msra.mxu0 0.0
        %3178 = vmatpush.msra.mxu0 0.0
        %3179 = vmatpush.msra.mxu0 0.0
        %3180 = vmatpush.msra.mxu0 0.0
        %3181 = vmatpush.msra.mxu0 0.0
        %3182 = vmatpush.msra.mxu0 0.0
        %3183 = vmatpush.msra.mxu0 0.0
        %3184 = vmatpush.msra.mxu0 0.0
        %3185 = vmatpush.msra.mxu0 0.0
        %3186 = vmatpush.msra.mxu0 %v3074
        %3187 = vmatpush.msra.mxu0 %v3073
        %3188 = vmatpush.msra.mxu0 %v3072
        %3189 = vmatpush.msra.mxu0 %v3071
        %3190 = vmatmul.f32.gmra.mxu0 %v3172
        %v3191 = vpop.f32.mrf.mxu0
        %v3192 = vadd.f32 0.0, %v3191
        %3193 = vdwg.mxu0
        %v3194 = vperm.slane %v3192, 0
        %v3195 = vsub.f32 %v3031, %v3194
        %v3196 = vsub.f32 %v3032, %v3194
        %v3197 = vsub.f32 %v3033, %v3194
        %v3198 = vsub.f32 %v3034, %v3194
        %v3199 = vsub.f32 %v3035, %v3194
        %v3200 = vsub.f32 %v3036, %v3194
        %v3201 = vsub.f32 %v3037, %v3194
        %v3202 = vsub.f32 %v3038, %v3194
        %v3203 = vsub.f32 %v3039, %v3194
        %v3204 = vsub.f32 %v3040, %v3194
        %v3205 = vsub.f32 %v3041, %v3194
        %v3206 = vsub.f32 %v3042, %v3194
        %v3207 = vsub.f32 %v3043, %v3194
        %v3208 = vsub.f32 %v3044, %v3194
        %v3209 = vsub.f32 %v3045, %v3194
        %v3210 = vsub.f32 %v3046, %v3194
        %v3211 = vsub.f32 %v3047, %v3194
        %v3212 = vsub.f32 %v3048, %v3194
        %v3213 = vsub.f32 %v3049, %v3194
        %v3214 = vsub.f32 %v3050, %v3194
        %v3215 = vsub.f32 %v3051, %v3194
        %v3216 = vsub.f32 %v3052, %v3194
        %v3217 = vsub.f32 %v3053, %v3194
        %v3218 = vsub.f32 %v3054, %v3194
        %v3219 = vsub.f32 %v3055, %v3194
        %v3220 = vsub.f32 %v3056, %v3194
        %v3221 = vsub.f32 %v3057, %v3194
        %v3222 = vsub.f32 %v3058, %v3194
        %v3223 = vsub.f32 %v3059, %v3194
        %v3224 = vsub.f32 %v3060, %v3194
        %v3225 = vsub.f32 %v3061, %v3194
        %v3226 = vsub.f32 %v3062, %v3194
        %v3227 = vmul.f32 %v3195, %v3195
        %v3228 = vmul.f32 %v3196, %v3196
        %v3229 = vmul.f32 %v3197, %v3197
        %v3230 = vmul.f32 %v3198, %v3198
        %v3231 = vmul.f32 %v3199, %v3199
        %v3232 = vmul.f32 %v3200, %v3200
        %v3233 = vmul.f32 %v3201, %v3201
        %v3234 = vmul.f32 %v3202, %v3202
        %v3235 = vmul.f32 %v3203, %v3203
        %v3236 = vmul.f32 %v3204, %v3204
        %v3237 = vmul.f32 %v3205, %v3205
        %v3238 = vmul.f32 %v3206, %v3206
        %v3239 = vmul.f32 %v3207, %v3207
        %v3240 = vmul.f32 %v3208, %v3208
        %v3241 = vmul.f32 %v3209, %v3209
        %v3242 = vmul.f32 %v3210, %v3210
        %v3243 = vmul.f32 %v3211, %v3211
        %v3244 = vmul.f32 %v3212, %v3212
        %v3245 = vmul.f32 %v3213, %v3213
        %v3246 = vmul.f32 %v3214, %v3214
        %v3247 = vmul.f32 %v3215, %v3215
        %v3248 = vmul.f32 %v3216, %v3216
        %v3249 = vmul.f32 %v3217, %v3217
        %v3250 = vmul.f32 %v3218, %v3218
        %v3251 = vmul.f32 %v3219, %v3219
        %v3252 = vmul.f32 %v3220, %v3220
        %v3253 = vmul.f32 %v3221, %v3221
        %v3254 = vmul.f32 %v3222, %v3222
        %v3255 = vmul.f32 %v3223, %v3223
        %v3256 = vmul.f32 %v3224, %v3224
        %v3257 = vmul.f32 %v3225, %v3225
        %v3258 = vmul.f32 %v3226, %v3226
        %v3259 = vsel %vm2345, %v3227, 0.0
        %v3260 = vsel %vm2345, %v3228, 0.0
        %v3261 = vadd.f32 %v3259, %v3260
        %v3262 = vsel %vm2345, %v3229, 0.0
        %v3263 = vadd.f32 %v3261, %v3262
        %v3264 = vsel %vm2345, %v3230, 0.0
        %v3265 = vadd.f32 %v3263, %v3264
        %v3266 = vsel %vm2345, %v3231, 0.0
        %v3267 = vadd.f32 %v3265, %v3266
        %v3268 = vsel %vm2345, %v3232, 0.0
        %v3269 = vadd.f32 %v3267, %v3268
        %v3270 = vsel %vm2345, %v3233, 0.0
        %v3271 = vadd.f32 %v3269, %v3270
        %v3272 = vsel %vm2345, %v3234, 0.0
        %v3273 = vadd.f32 %v3271, %v3272
        %v3274 = vsel %vm2345, %v3235, 0.0
        %v3275 = vadd.f32 %v3273, %v3274
        %v3276 = vsel %vm2345, %v3236, 0.0
        %v3277 = vadd.f32 %v3275, %v3276
        %v3278 = vsel %vm2345, %v3237, 0.0
        %v3279 = vadd.f32 %v3277, %v3278
        %v3280 = vsel %vm2345, %v3238, 0.0
        %v3281 = vadd.f32 %v3279, %v3280
        %v3282 = vsel %vm2345, %v3239, 0.0
        %v3283 = vadd.f32 %v3281, %v3282
        %v3284 = vsel %vm2345, %v3240, 0.0
        %v3285 = vadd.f32 %v3283, %v3284
        %v3286 = vsel %vm2345, %v3241, 0.0
        %v3287 = vadd.f32 %v3285, %v3286
        %v3288 = vsel %vm2345, %v3242, 0.0
        %v3289 = vadd.f32 %v3287, %v3288
        %v3290 = vsel %vm2345, %v3243, 0.0
        %v3291 = vadd.f32 %v3289, %v3290
        %v3292 = vsel %vm2345, %v3244, 0.0
        %v3293 = vadd.f32 %v3291, %v3292
        %v3294 = vsel %vm2345, %v3245, 0.0
        %v3295 = vadd.f32 %v3293, %v3294
        %v3296 = vsel %vm2345, %v3246, 0.0
        %v3297 = vadd.f32 %v3295, %v3296
        %v3298 = vsel %vm2345, %v3247, 0.0
        %v3299 = vadd.f32 %v3297, %v3298
        %v3300 = vsel %vm2345, %v3248, 0.0
        %v3301 = vadd.f32 %v3299, %v3300
        %v3302 = vsel %vm2345, %v3249, 0.0
        %v3303 = vadd.f32 %v3301, %v3302
        %v3304 = vsel %vm2345, %v3250, 0.0
        %v3305 = vadd.f32 %v3303, %v3304
        %v3306 = vsel %vm2345, %v3251, 0.0
        %v3307 = vadd.f32 %v3305, %v3306
        %v3308 = vsel %vm2345, %v3252, 0.0
        %v3309 = vadd.f32 %v3307, %v3308
        %v3310 = vsel %vm2345, %v3253, 0.0
        %v3311 = vadd.f32 %v3309, %v3310
        %v3312 = vsel %vm2345, %v3254, 0.0
        %v3313 = vadd.f32 %v3311, %v3312
        %v3314 = vsel %vm2345, %v3255, 0.0
        %v3315 = vadd.f32 %v3313, %v3314
        %v3316 = vsel %vm2345, %v3256, 0.0
        %v3317 = vadd.f32 %v3315, %v3316
        %v3318 = vsel %vm2345, %v3257, 0.0
        %v3319 = vadd.f32 %v3317, %v3318
        %v3320 = vsel %vm2345, %v3258, 0.0
        %v3321 = vadd.f32 %v3319, %v3320
        %v3322 = vrot.slane %v3321, 4
        %v3323 = vadd.f32 %v3321, %v3322
        %v3324 = vrot.slane %v3323, 2
        %v3325 = vadd.f32 %v3323, %v3324
        %v3326 = vrot.slane %v3325, 1
        %v3327 = vadd.f32 %v3325, %v3326
        %v3328 = vmul.f32 %v3327, %v724
        %v3330 = vsel %vm2345, %v3328, 0
        %3332 = vmatpush.msra.mxu0 0.0
        %3333 = vmatpush.msra.mxu0 0.0
        %3334 = vmatpush.msra.mxu0 0.0
        %3335 = vmatpush.msra.mxu0 0.0
        %3336 = vmatpush.msra.mxu0 0.0
        %3337 = vmatpush.msra.mxu0 0.0
        %3338 = vmatpush.msra.mxu0 0.0
        %3339 = vmatpush.msra.mxu0 0.0
        %3340 = vmatpush.msra.mxu0 %v3070
        %3341 = vmatpush.msra.mxu0 %v3069
        %3342 = vmatpush.msra.mxu0 %v3068
        %3343 = vmatpush.msra.mxu0 %v3067
        %3344 = vmatpush.msra.mxu0 %v3066
        %3345 = vmatpush.msra.mxu0 %v3065
        %3346 = vmatpush.msra.mxu0 %v3064
        %3347 = vmatpush.msra.mxu0 %v3063
        %3348 = vmatmul.f32.gmra.mxu0 %v3330
        %v3349 = vpop.f32.mrf.mxu0
        %v3350 = vadd.f32 0.0, %v3349
        %3351 = vdwg.mxu0
        %v3352 = vmul.f32 %v3350, 0.5
        %v3353 = vadd.f32 %v3352, 1e-06
        %v3354 = vrsqrt.pop %v3353
        %v3355 = vmul.f32 %v3354, %v3353
        %v3356 = vmul.f32 %v3355, %v3354
        %v3357 = vmul.f32 0.5, %v3356
        %v3358 = vsub.f32 1.5, %v3357
        %v3359 = vmul.f32 %v3354, %v3358
        %vm3360 = vweird.f32 %v3353
        %vm3361 = vweird.f32 %v3354
        %vm3362 = vmor %vm3360, %vm3361
        %v3363 = vsel %vm3362, %v3354, %v3359
        %v3365 = vsel %vm648, %v3363, 0
        %3367 = vmatpush.msra.mxu0 0.0
        %3368 = vmatpush.msra.mxu0 0.0
        %3369 = vmatpush.msra.mxu0 0.0
        %3370 = vmatpush.msra.mxu0 0.0
        %3371 = vmatpush.msra.mxu0 0.0
        %3372 = vmatpush.msra.mxu0 0.0
        %3373 = vmatpush.msra.mxu0 0.0
        %3374 = vmatpush.msra.mxu0 0.0
        %3375 = vmatpush.msra.mxu0 0.0
        %3376 = vmatpush.msra.mxu0 0.0
        %3377 = vmatpush.msra.mxu0 0.0
        %3378 = vmatpush.msra.mxu0 0.0
        %3379 = vmatpush.msra.mxu0 %v3074
        %3380 = vmatpush.msra.mxu0 %v3073
        %3381 = vmatpush.msra.mxu0 %v3072
        %3382 = vmatpush.msra.mxu0 %v3071
        %3383 = vmatmul.f32.gmra.mxu0 %v3365
        %v3384 = vpop.f32.mrf.mxu0
        %v3385 = vadd.f32 0.0, %v3384
        %3386 = vdwg.mxu0
        %v3387 = vmul.f32 %v3385, %v3075
        %v3388 = vperm.slane %v3387, 0
        %v3389 = vmul.f32 %v3195, %v3388
        %v3390 = vmul.f32 %v3196, %v3388
        %v3391 = vmul.f32 %v3197, %v3388
        %v3392 = vmul.f32 %v3198, %v3388
        %v3393 = vmul.f32 %v3199, %v3388
        %v3394 = vmul.f32 %v3200, %v3388
        %v3395 = vmul.f32 %v3201, %v3388
        %v3396 = vmul.f32 %v3202, %v3388
        %v3397 = vmul.f32 %v3203, %v3388
        %v3398 = vmul.f32 %v3204, %v3388
        %v3399 = vmul.f32 %v3205, %v3388
        %v3400 = vmul.f32 %v3206, %v3388
        %v3401 = vmul.f32 %v3207, %v3388
        %v3402 = vmul.f32 %v3208, %v3388
        %v3403 = vmul.f32 %v3209, %v3388
        %v3404 = vmul.f32 %v3210, %v3388
        %v3405 = vmul.f32 %v3211, %v3388
        %v3406 = vmul.f32 %v3212, %v3388
        %v3407 = vmul.f32 %v3213, %v3388
        %v3408 = vmul.f32 %v3214, %v3388
        %v3409 = vmul.f32 %v3215, %v3388
        %v3410 = vmul.f32 %v3216, %v3388
        %v3411 = vmul.f32 %v3217, %v3388
        %v3412 = vmul.f32 %v3218, %v3388
        %v3413 = vmul.f32 %v3219, %v3388
        %v3414 = vmul.f32 %v3220, %v3388
        %v3415 = vmul.f32 %v3221, %v3388
        %v3416 = vmul.f32 %v3222, %v3388
        %v3417 = vmul.f32 %v3223, %v3388
        %v3418 = vmul.f32 %v3224, %v3388
        %v3419 = vmul.f32 %v3225, %v3388
        %v3420 = vmul.f32 %v3226, %v3388
        %v3422 = vperm.slane %v3076, 0
        %v3424 = vadd.f32 %v3389, %v3422
        %v3425 = vadd.f32 %v3390, %v3422
        %v3426 = vadd.f32 %v3391, %v3422
        %v3427 = vadd.f32 %v3392, %v3422
        %v3428 = vadd.f32 %v3393, %v3422
        %v3429 = vadd.f32 %v3394, %v3422
        %v3430 = vadd.f32 %v3395, %v3422
        %v3431 = vadd.f32 %v3396, %v3422
        %v3432 = vadd.f32 %v3397, %v3422
        %v3433 = vadd.f32 %v3398, %v3422
        %v3434 = vadd.f32 %v3399, %v3422
        %v3435 = vadd.f32 %v3400, %v3422
        %v3436 = vadd.f32 %v3401, %v3422
        %v3437 = vadd.f32 %v3402, %v3422
        %v3438 = vadd.f32 %v3403, %v3422
        %v3439 = vadd.f32 %v3404, %v3422
        %v3440 = vadd.f32 %v3405, %v3422
        %v3441 = vadd.f32 %v3406, %v3422
        %v3442 = vadd.f32 %v3407, %v3422
        %v3443 = vadd.f32 %v3408, %v3422
        %v3444 = vadd.f32 %v3409, %v3422
        %v3445 = vadd.f32 %v3410, %v3422
        %v3446 = vadd.f32 %v3411, %v3422
        %v3447 = vadd.f32 %v3412, %v3422
        %v3448 = vadd.f32 %v3413, %v3422
        %v3449 = vadd.f32 %v3414, %v3422
        %v3450 = vadd.f32 %v3415, %v3422
        %v3451 = vadd.f32 %v3416, %v3422
        %v3452 = vadd.f32 %v3417, %v3422
        %v3453 = vadd.f32 %v3418, %v3422
        %v3454 = vadd.f32 %v3419, %v3422
        %v3455 = vadd.f32 %v3420, %v3422
        %v3456 = vxor.u32 %v3424, 2147483648
        %v3457 = vxor.u32 %v3425, 2147483648
        %v3458 = vxor.u32 %v3426, 2147483648
        %v3459 = vxor.u32 %v3427, 2147483648
        %v3460 = vxor.u32 %v3428, 2147483648
        %v3461 = vxor.u32 %v3429, 2147483648
        %v3462 = vxor.u32 %v3430, 2147483648
        %v3463 = vxor.u32 %v3431, 2147483648
        %v3464 = vxor.u32 %v3432, 2147483648
        %v3465 = vxor.u32 %v3433, 2147483648
        %v3466 = vxor.u32 %v3434, 2147483648
        %v3467 = vxor.u32 %v3435, 2147483648
        %v3468 = vxor.u32 %v3436, 2147483648
        %v3469 = vxor.u32 %v3437, 2147483648
        %v3470 = vxor.u32 %v3438, 2147483648
        %v3471 = vxor.u32 %v3439, 2147483648
        %v3472 = vxor.u32 %v3440, 2147483648
        %v3473 = vxor.u32 %v3441, 2147483648
        %v3474 = vxor.u32 %v3442, 2147483648
        %v3475 = vxor.u32 %v3443, 2147483648
        %v3476 = vxor.u32 %v3444, 2147483648
        %v3477 = vxor.u32 %v3445, 2147483648
        %v3478 = vxor.u32 %v3446, 2147483648
        %v3479 = vxor.u32 %v3447, 2147483648
        %v3480 = vxor.u32 %v3448, 2147483648
        %v3481 = vxor.u32 %v3449, 2147483648
        %v3482 = vxor.u32 %v3450, 2147483648
        %v3483 = vxor.u32 %v3451, 2147483648
        %v3484 = vxor.u32 %v3452, 2147483648
        %v3485 = vxor.u32 %v3453, 2147483648
        %v3486 = vxor.u32 %v3454, 2147483648
        %v3487 = vxor.u32 %v3455, 2147483648
        %v3488 = vmul.f32 %v3456, 1.442695
        %v3489 = vpow.pop %v3488
        %v3490 = vmul.f32 %v3457, 1.442695
        %v3491 = vpow.pop %v3490
        %v3492 = vmul.f32 %v3458, 1.442695
        %v3493 = vpow.pop %v3492
        %v3494 = vmul.f32 %v3459, 1.442695
        %v3495 = vpow.pop %v3494
        %v3496 = vmul.f32 %v3460, 1.442695
        %v3497 = vpow.pop %v3496
        %v3498 = vmul.f32 %v3461, 1.442695
        %v3499 = vpow.pop %v3498
        %v3500 = vmul.f32 %v3462, 1.442695
        %v3501 = vpow.pop %v3500
        %v3502 = vmul.f32 %v3463, 1.442695
        %v3503 = vpow.pop %v3502
        %v3504 = vmul.f32 %v3464, 1.442695
        %v3505 = vpow.pop %v3504
        %v3506 = vmul.f32 %v3465, 1.442695
        %v3507 = vpow.pop %v3506
        %v3508 = vmul.f32 %v3466, 1.442695
        %v3509 = vpow.pop %v3508
        %v3510 = vmul.f32 %v3467, 1.442695
        %v3511 = vpow.pop %v3510
        %v3512 = vmul.f32 %v3468, 1.442695
        %v3513 = vpow.pop %v3512
        %v3514 = vmul.f32 %v3469, 1.442695
        %v3515 = vpow.pop %v3514
        %v3516 = vmul.f32 %v3470, 1.442695
        %v3517 = vpow.pop %v3516
        %v3518 = vmul.f32 %v3471, 1.442695
        %v3519 = vpow.pop %v3518
        %v3520 = vmul.f32 %v3472, 1.442695
        %v3521 = vpow.pop %v3520
        %v3522 = vmul.f32 %v3473, 1.442695
        %v3523 = vpow.pop %v3522
        %v3524 = vmul.f32 %v3474, 1.442695
        %v3525 = vpow.pop %v3524
        %v3526 = vmul.f32 %v3475, 1.442695
        %v3527 = vpow.pop %v3526
        %v3528 = vmul.f32 %v3476, 1.442695
        %v3529 = vpow.pop %v3528
        %v3530 = vmul.f32 %v3477, 1.442695
        %v3531 = vpow.pop %v3530
        %v3532 = vmul.f32 %v3478, 1.442695
        %v3533 = vpow.pop %v3532
        %v3534 = vmul.f32 %v3479, 1.442695
        %v3535 = vpow.pop %v3534
        %v3536 = vmul.f32 %v3480, 1.442695
        %v3537 = vpow.pop %v3536
        %v3538 = vmul.f32 %v3481, 1.442695
        %v3539 = vpow.pop %v3538
        %v3540 = vmul.f32 %v3482, 1.442695
        %v3541 = vpow.pop %v3540
        %v3542 = vmul.f32 %v3483, 1.442695
        %v3543 = vpow.pop %v3542
        %v3544 = vmul.f32 %v3484, 1.442695
        %v3545 = vpow.pop %v3544
        %v3546 = vmul.f32 %v3485, 1.442695
        %v3547 = vpow.pop %v3546
        %v3548 = vmul.f32 %v3486, 1.442695
        %v3549 = vpow.pop %v3548
        %v3550 = vmul.f32 %v3487, 1.442695
        %v3551 = vpow.pop %v3550
        %v3552 = vadd.f32 %v3489, 1.0
        %v3553 = vadd.f32 %v3491, 1.0
        %v3554 = vadd.f32 %v3493, 1.0
        %v3555 = vadd.f32 %v3495, 1.0
        %v3556 = vadd.f32 %v3497, 1.0
        %v3557 = vadd.f32 %v3499, 1.0
        %v3558 = vadd.f32 %v3501, 1.0
        %v3559 = vadd.f32 %v3503, 1.0
        %v3560 = vadd.f32 %v3505, 1.0
        %v3561 = vadd.f32 %v3507, 1.0
        %v3562 = vadd.f32 %v3509, 1.0
        %v3563 = vadd.f32 %v3511, 1.0
        %v3564 = vadd.f32 %v3513, 1.0
        %v3565 = vadd.f32 %v3515, 1.0
        %v3566 = vadd.f32 %v3517, 1.0
        %v3567 = vadd.f32 %v3519, 1.0
        %v3568 = vadd.f32 %v3521, 1.0
        %v3569 = vadd.f32 %v3523, 1.0
        %v3570 = vadd.f32 %v3525, 1.0
        %v3571 = vadd.f32 %v3527, 1.0
        %v3572 = vadd.f32 %v3529, 1.0
        %v3573 = vadd.f32 %v3531, 1.0
        %v3574 = vadd.f32 %v3533, 1.0
        %v3575 = vadd.f32 %v3535, 1.0
        %v3576 = vadd.f32 %v3537, 1.0
        %v3577 = vadd.f32 %v3539, 1.0
        %v3578 = vadd.f32 %v3541, 1.0
        %v3579 = vadd.f32 %v3543, 1.0
        %v3580 = vadd.f32 %v3545, 1.0
        %v3581 = vadd.f32 %v3547, 1.0
        %v3582 = vadd.f32 %v3549, 1.0
        %v3583 = vadd.f32 %v3551, 1.0
        %v3584 = vrcp.pop %v3552
        %v3585 = vmul.f32 %v3552, %v3584
        %v3586 = vsub.f32 1.0, %v3585
        %v3587 = vmul.f32 %v3584, %v3586
        %v3588 = vadd.f32 %v3584, %v3587
        %vm3589 = vweird.f32 %v3552
        %vm3590 = vweird.f32 %v3584
        %vm3591 = vmor %vm3589, %vm3590
        %v3592 = vsel %vm3591, %v3584, %v3588
        %v3593 = vand.u32 2147483647, %v3552
        %vm3594 = vcmp.eq.f32.partialorder %v3593, 8.507059e+37
        %v3595 = vand.u32 %v3552, 2147483648
        %v3596 = vor.u32 1.1754944e-38, %v3595
        %v3597 = vsel %vm3594, %v3596, %v3592
        %v3598 = vmul.f32 1.0, %v3597
        %v3599 = vrcp.pop %v3553
        %v3600 = vmul.f32 %v3553, %v3599
        %v3601 = vsub.f32 1.0, %v3600
        %v3602 = vmul.f32 %v3599, %v3601
        %v3603 = vadd.f32 %v3599, %v3602
        %vm3604 = vweird.f32 %v3553
        %vm3605 = vweird.f32 %v3599
        %vm3606 = vmor %vm3604, %vm3605
        %v3607 = vsel %vm3606, %v3599, %v3603
        %v3608 = vand.u32 2147483647, %v3553
        %vm3609 = vcmp.eq.f32.partialorder %v3608, 8.507059e+37
        %v3610 = vand.u32 %v3553, 2147483648
        %v3611 = vor.u32 1.1754944e-38, %v3610
        %v3612 = vsel %vm3609, %v3611, %v3607
        %v3613 = vmul.f32 1.0, %v3612
        %v3614 = vrcp.pop %v3554
        %v3615 = vmul.f32 %v3554, %v3614
        %v3616 = vsub.f32 1.0, %v3615
        %v3617 = vmul.f32 %v3614, %v3616
        %v3618 = vadd.f32 %v3614, %v3617
        %vm3619 = vweird.f32 %v3554
        %vm3620 = vweird.f32 %v3614
        %vm3621 = vmor %vm3619, %vm3620
        %v3622 = vsel %vm3621, %v3614, %v3618
        %v3623 = vand.u32 2147483647, %v3554
        %vm3624 = vcmp.eq.f32.partialorder %v3623, 8.507059e+37
        %v3625 = vand.u32 %v3554, 2147483648
        %v3626 = vor.u32 1.1754944e-38, %v3625
        %v3627 = vsel %vm3624, %v3626, %v3622
        %v3628 = vmul.f32 1.0, %v3627
        %v3629 = vrcp.pop %v3555
        %v3630 = vmul.f32 %v3555, %v3629
        %v3631 = vsub.f32 1.0, %v3630
        %v3632 = vmul.f32 %v3629, %v3631
        %v3633 = vadd.f32 %v3629, %v3632
        %vm3634 = vweird.f32 %v3555
        %vm3635 = vweird.f32 %v3629
        %vm3636 = vmor %vm3634, %vm3635
        %v3637 = vsel %vm3636, %v3629, %v3633
        %v3638 = vand.u32 2147483647, %v3555
        %vm3639 = vcmp.eq.f32.partialorder %v3638, 8.507059e+37
        %v3640 = vand.u32 %v3555, 2147483648
        %v3641 = vor.u32 1.1754944e-38, %v3640
        %v3642 = vsel %vm3639, %v3641, %v3637
        %v3643 = vmul.f32 1.0, %v3642
        %v3644 = vrcp.pop %v3556
        %v3645 = vmul.f32 %v3556, %v3644
        %v3646 = vsub.f32 1.0, %v3645
        %v3647 = vmul.f32 %v3644, %v3646
        %v3648 = vadd.f32 %v3644, %v3647
        %vm3649 = vweird.f32 %v3556
        %vm3650 = vweird.f32 %v3644
        %vm3651 = vmor %vm3649, %vm3650
        %v3652 = vsel %vm3651, %v3644, %v3648
        %v3653 = vand.u32 2147483647, %v3556
        %vm3654 = vcmp.eq.f32.partialorder %v3653, 8.507059e+37
        %v3655 = vand.u32 %v3556, 2147483648
        %v3656 = vor.u32 1.1754944e-38, %v3655
        %v3657 = vsel %vm3654, %v3656, %v3652
        %v3658 = vmul.f32 1.0, %v3657
        %v3659 = vrcp.pop %v3557
        %v3660 = vmul.f32 %v3557, %v3659
        %v3661 = vsub.f32 1.0, %v3660
        %v3662 = vmul.f32 %v3659, %v3661
        %v3663 = vadd.f32 %v3659, %v3662
        %vm3664 = vweird.f32 %v3557
        %vm3665 = vweird.f32 %v3659
        %vm3666 = vmor %vm3664, %vm3665
        %v3667 = vsel %vm3666, %v3659, %v3663
        %v3668 = vand.u32 2147483647, %v3557
        %vm3669 = vcmp.eq.f32.partialorder %v3668, 8.507059e+37
        %v3670 = vand.u32 %v3557, 2147483648
        %v3671 = vor.u32 1.1754944e-38, %v3670
        %v3672 = vsel %vm3669, %v3671, %v3667
        %v3673 = vmul.f32 1.0, %v3672
        %v3674 = vrcp.pop %v3558
        %v3675 = vmul.f32 %v3558, %v3674
        %v3676 = vsub.f32 1.0, %v3675
        %v3677 = vmul.f32 %v3674, %v3676
        %v3678 = vadd.f32 %v3674, %v3677
        %vm3679 = vweird.f32 %v3558
        %vm3680 = vweird.f32 %v3674
        %vm3681 = vmor %vm3679, %vm3680
        %v3682 = vsel %vm3681, %v3674, %v3678
        %v3683 = vand.u32 2147483647, %v3558
        %vm3684 = vcmp.eq.f32.partialorder %v3683, 8.507059e+37
        %v3685 = vand.u32 %v3558, 2147483648
        %v3686 = vor.u32 1.1754944e-38, %v3685
        %v3687 = vsel %vm3684, %v3686, %v3682
        %v3688 = vmul.f32 1.0, %v3687
        %v3689 = vrcp.pop %v3559
        %v3690 = vmul.f32 %v3559, %v3689
        %v3691 = vsub.f32 1.0, %v3690
        %v3692 = vmul.f32 %v3689, %v3691
        %v3693 = vadd.f32 %v3689, %v3692
        %vm3694 = vweird.f32 %v3559
        %vm3695 = vweird.f32 %v3689
        %vm3696 = vmor %vm3694, %vm3695
        %v3697 = vsel %vm3696, %v3689, %v3693
        %v3698 = vand.u32 2147483647, %v3559
        %vm3699 = vcmp.eq.f32.partialorder %v3698, 8.507059e+37
        %v3700 = vand.u32 %v3559, 2147483648
        %v3701 = vor.u32 1.1754944e-38, %v3700
        %v3702 = vsel %vm3699, %v3701, %v3697
        %v3703 = vmul.f32 1.0, %v3702
        %v3704 = vrcp.pop %v3560
        %v3705 = vmul.f32 %v3560, %v3704
        %v3706 = vsub.f32 1.0, %v3705
        %v3707 = vmul.f32 %v3704, %v3706
        %v3708 = vadd.f32 %v3704, %v3707
        %vm3709 = vweird.f32 %v3560
        %vm3710 = vweird.f32 %v3704
        %vm3711 = vmor %vm3709, %vm3710
        %v3712 = vsel %vm3711, %v3704, %v3708
        %v3713 = vand.u32 2147483647, %v3560
        %vm3714 = vcmp.eq.f32.partialorder %v3713, 8.507059e+37
        %v3715 = vand.u32 %v3560, 2147483648
        %v3716 = vor.u32 1.1754944e-38, %v3715
        %v3717 = vsel %vm3714, %v3716, %v3712
        %v3718 = vmul.f32 1.0, %v3717
        %v3719 = vrcp.pop %v3561
        %v3720 = vmul.f32 %v3561, %v3719
        %v3721 = vsub.f32 1.0, %v3720
        %v3722 = vmul.f32 %v3719, %v3721
        %v3723 = vadd.f32 %v3719, %v3722
        %vm3724 = vweird.f32 %v3561
        %vm3725 = vweird.f32 %v3719
        %vm3726 = vmor %vm3724, %vm3725
        %v3727 = vsel %vm3726, %v3719, %v3723
        %v3728 = vand.u32 2147483647, %v3561
        %vm3729 = vcmp.eq.f32.partialorder %v3728, 8.507059e+37
        %v3730 = vand.u32 %v3561, 2147483648
        %v3731 = vor.u32 1.1754944e-38, %v3730
        %v3732 = vsel %vm3729, %v3731, %v3727
        %v3733 = vmul.f32 1.0, %v3732
        %v3734 = vrcp.pop %v3562
        %v3735 = vmul.f32 %v3562, %v3734
        %v3736 = vsub.f32 1.0, %v3735
        %v3737 = vmul.f32 %v3734, %v3736
        %v3738 = vadd.f32 %v3734, %v3737
        %vm3739 = vweird.f32 %v3562
        %vm3740 = vweird.f32 %v3734
        %vm3741 = vmor %vm3739, %vm3740
        %v3742 = vsel %vm3741, %v3734, %v3738
        %v3743 = vand.u32 2147483647, %v3562
        %vm3744 = vcmp.eq.f32.partialorder %v3743, 8.507059e+37
        %v3745 = vand.u32 %v3562, 2147483648
        %v3746 = vor.u32 1.1754944e-38, %v3745
        %v3747 = vsel %vm3744, %v3746, %v3742
        %v3748 = vmul.f32 1.0, %v3747
        %v3749 = vrcp.pop %v3563
        %v3750 = vmul.f32 %v3563, %v3749
        %v3751 = vsub.f32 1.0, %v3750
        %v3752 = vmul.f32 %v3749, %v3751
        %v3753 = vadd.f32 %v3749, %v3752
        %vm3754 = vweird.f32 %v3563
        %vm3755 = vweird.f32 %v3749
        %vm3756 = vmor %vm3754, %vm3755
        %v3757 = vsel %vm3756, %v3749, %v3753
        %v3758 = vand.u32 2147483647, %v3563
        %vm3759 = vcmp.eq.f32.partialorder %v3758, 8.507059e+37
        %v3760 = vand.u32 %v3563, 2147483648
        %v3761 = vor.u32 1.1754944e-38, %v3760
        %v3762 = vsel %vm3759, %v3761, %v3757
        %v3763 = vmul.f32 1.0, %v3762
        %v3764 = vrcp.pop %v3564
        %v3765 = vmul.f32 %v3564, %v3764
        %v3766 = vsub.f32 1.0, %v3765
        %v3767 = vmul.f32 %v3764, %v3766
        %v3768 = vadd.f32 %v3764, %v3767
        %vm3769 = vweird.f32 %v3564
        %vm3770 = vweird.f32 %v3764
        %vm3771 = vmor %vm3769, %vm3770
        %v3772 = vsel %vm3771, %v3764, %v3768
        %v3773 = vand.u32 2147483647, %v3564
        %vm3774 = vcmp.eq.f32.partialorder %v3773, 8.507059e+37
        %v3775 = vand.u32 %v3564, 2147483648
        %v3776 = vor.u32 1.1754944e-38, %v3775
        %v3777 = vsel %vm3774, %v3776, %v3772
        %v3778 = vmul.f32 1.0, %v3777
        %v3779 = vrcp.pop %v3565
        %v3780 = vmul.f32 %v3565, %v3779
        %v3781 = vsub.f32 1.0, %v3780
        %v3782 = vmul.f32 %v3779, %v3781
        %v3783 = vadd.f32 %v3779, %v3782
        %vm3784 = vweird.f32 %v3565
        %vm3785 = vweird.f32 %v3779
        %vm3786 = vmor %vm3784, %vm3785
        %v3787 = vsel %vm3786, %v3779, %v3783
        %v3788 = vand.u32 2147483647, %v3565
        %vm3789 = vcmp.eq.f32.partialorder %v3788, 8.507059e+37
        %v3790 = vand.u32 %v3565, 2147483648
        %v3791 = vor.u32 1.1754944e-38, %v3790
        %v3792 = vsel %vm3789, %v3791, %v3787
        %v3793 = vmul.f32 1.0, %v3792
        %v3794 = vrcp.pop %v3566
        %v3795 = vmul.f32 %v3566, %v3794
        %v3796 = vsub.f32 1.0, %v3795
        %v3797 = vmul.f32 %v3794, %v3796
        %v3798 = vadd.f32 %v3794, %v3797
        %vm3799 = vweird.f32 %v3566
        %vm3800 = vweird.f32 %v3794
        %vm3801 = vmor %vm3799, %vm3800
        %v3802 = vsel %vm3801, %v3794, %v3798
        %v3803 = vand.u32 2147483647, %v3566
        %vm3804 = vcmp.eq.f32.partialorder %v3803, 8.507059e+37
        %v3805 = vand.u32 %v3566, 2147483648
        %v3806 = vor.u32 1.1754944e-38, %v3805
        %v3807 = vsel %vm3804, %v3806, %v3802
        %v3808 = vmul.f32 1.0, %v3807
        %v3809 = vrcp.pop %v3567
        %v3810 = vmul.f32 %v3567, %v3809
        %v3811 = vsub.f32 1.0, %v3810
        %v3812 = vmul.f32 %v3809, %v3811
        %v3813 = vadd.f32 %v3809, %v3812
        %vm3814 = vweird.f32 %v3567
        %vm3815 = vweird.f32 %v3809
        %vm3816 = vmor %vm3814, %vm3815
        %v3817 = vsel %vm3816, %v3809, %v3813
        %v3818 = vand.u32 2147483647, %v3567
        %vm3819 = vcmp.eq.f32.partialorder %v3818, 8.507059e+37
        %v3820 = vand.u32 %v3567, 2147483648
        %v3821 = vor.u32 1.1754944e-38, %v3820
        %v3822 = vsel %vm3819, %v3821, %v3817
        %v3823 = vmul.f32 1.0, %v3822
        %v3824 = vrcp.pop %v3568
        %v3825 = vmul.f32 %v3568, %v3824
        %v3826 = vsub.f32 1.0, %v3825
        %v3827 = vmul.f32 %v3824, %v3826
        %v3828 = vadd.f32 %v3824, %v3827
        %vm3829 = vweird.f32 %v3568
        %vm3830 = vweird.f32 %v3824
        %vm3831 = vmor %vm3829, %vm3830
        %v3832 = vsel %vm3831, %v3824, %v3828
        %v3833 = vand.u32 2147483647, %v3568
        %vm3834 = vcmp.eq.f32.partialorder %v3833, 8.507059e+37
        %v3835 = vand.u32 %v3568, 2147483648
        %v3836 = vor.u32 1.1754944e-38, %v3835
        %v3837 = vsel %vm3834, %v3836, %v3832
        %v3838 = vmul.f32 1.0, %v3837
        %v3839 = vrcp.pop %v3569
        %v3840 = vmul.f32 %v3569, %v3839
        %v3841 = vsub.f32 1.0, %v3840
        %v3842 = vmul.f32 %v3839, %v3841
        %v3843 = vadd.f32 %v3839, %v3842
        %vm3844 = vweird.f32 %v3569
        %vm3845 = vweird.f32 %v3839
        %vm3846 = vmor %vm3844, %vm3845
        %v3847 = vsel %vm3846, %v3839, %v3843
        %v3848 = vand.u32 2147483647, %v3569
        %vm3849 = vcmp.eq.f32.partialorder %v3848, 8.507059e+37
        %v3850 = vand.u32 %v3569, 2147483648
        %v3851 = vor.u32 1.1754944e-38, %v3850
        %v3852 = vsel %vm3849, %v3851, %v3847
        %v3853 = vmul.f32 1.0, %v3852
        %v3854 = vrcp.pop %v3570
        %v3855 = vmul.f32 %v3570, %v3854
        %v3856 = vsub.f32 1.0, %v3855
        %v3857 = vmul.f32 %v3854, %v3856
        %v3858 = vadd.f32 %v3854, %v3857
        %vm3859 = vweird.f32 %v3570
        %vm3860 = vweird.f32 %v3854
        %vm3861 = vmor %vm3859, %vm3860
        %v3862 = vsel %vm3861, %v3854, %v3858
        %v3863 = vand.u32 2147483647, %v3570
        %vm3864 = vcmp.eq.f32.partialorder %v3863, 8.507059e+37
        %v3865 = vand.u32 %v3570, 2147483648
        %v3866 = vor.u32 1.1754944e-38, %v3865
        %v3867 = vsel %vm3864, %v3866, %v3862
        %v3868 = vmul.f32 1.0, %v3867
        %v3869 = vrcp.pop %v3571
        %v3870 = vmul.f32 %v3571, %v3869
        %v3871 = vsub.f32 1.0, %v3870
        %v3872 = vmul.f32 %v3869, %v3871
        %v3873 = vadd.f32 %v3869, %v3872
        %vm3874 = vweird.f32 %v3571
        %vm3875 = vweird.f32 %v3869
        %vm3876 = vmor %vm3874, %vm3875
        %v3877 = vsel %vm3876, %v3869, %v3873
        %v3878 = vand.u32 2147483647, %v3571
        %vm3879 = vcmp.eq.f32.partialorder %v3878, 8.507059e+37
        %v3880 = vand.u32 %v3571, 2147483648
        %v3881 = vor.u32 1.1754944e-38, %v3880
        %v3882 = vsel %vm3879, %v3881, %v3877
        %v3883 = vmul.f32 1.0, %v3882
        %v3884 = vrcp.pop %v3572
        %v3885 = vmul.f32 %v3572, %v3884
        %v3886 = vsub.f32 1.0, %v3885
        %v3887 = vmul.f32 %v3884, %v3886
        %v3888 = vadd.f32 %v3884, %v3887
        %vm3889 = vweird.f32 %v3572
        %vm3890 = vweird.f32 %v3884
        %vm3891 = vmor %vm3889, %vm3890
        %v3892 = vsel %vm3891, %v3884, %v3888
        %v3893 = vand.u32 2147483647, %v3572
        %vm3894 = vcmp.eq.f32.partialorder %v3893, 8.507059e+37
        %v3895 = vand.u32 %v3572, 2147483648
        %v3896 = vor.u32 1.1754944e-38, %v3895
        %v3897 = vsel %vm3894, %v3896, %v3892
        %v3898 = vmul.f32 1.0, %v3897
        %v3899 = vrcp.pop %v3573
        %v3900 = vmul.f32 %v3573, %v3899
        %v3901 = vsub.f32 1.0, %v3900
        %v3902 = vmul.f32 %v3899, %v3901
        %v3903 = vadd.f32 %v3899, %v3902
        %vm3904 = vweird.f32 %v3573
        %vm3905 = vweird.f32 %v3899
        %vm3906 = vmor %vm3904, %vm3905
        %v3907 = vsel %vm3906, %v3899, %v3903
        %v3908 = vand.u32 2147483647, %v3573
        %vm3909 = vcmp.eq.f32.partialorder %v3908, 8.507059e+37
        %v3910 = vand.u32 %v3573, 2147483648
        %v3911 = vor.u32 1.1754944e-38, %v3910
        %v3912 = vsel %vm3909, %v3911, %v3907
        %v3913 = vmul.f32 1.0, %v3912
        %v3914 = vrcp.pop %v3574
        %v3915 = vmul.f32 %v3574, %v3914
        %v3916 = vsub.f32 1.0, %v3915
        %v3917 = vmul.f32 %v3914, %v3916
        %v3918 = vadd.f32 %v3914, %v3917
        %vm3919 = vweird.f32 %v3574
        %vm3920 = vweird.f32 %v3914
        %vm3921 = vmor %vm3919, %vm3920
        %v3922 = vsel %vm3921, %v3914, %v3918
        %v3923 = vand.u32 2147483647, %v3574
        %vm3924 = vcmp.eq.f32.partialorder %v3923, 8.507059e+37
        %v3925 = vand.u32 %v3574, 2147483648
        %v3926 = vor.u32 1.1754944e-38, %v3925
        %v3927 = vsel %vm3924, %v3926, %v3922
        %v3928 = vmul.f32 1.0, %v3927
        %v3929 = vrcp.pop %v3575
        %v3930 = vmul.f32 %v3575, %v3929
        %v3931 = vsub.f32 1.0, %v3930
        %v3932 = vmul.f32 %v3929, %v3931
        %v3933 = vadd.f32 %v3929, %v3932
        %vm3934 = vweird.f32 %v3575
        %vm3935 = vweird.f32 %v3929
        %vm3936 = vmor %vm3934, %vm3935
        %v3937 = vsel %vm3936, %v3929, %v3933
        %v3938 = vand.u32 2147483647, %v3575
        %vm3939 = vcmp.eq.f32.partialorder %v3938, 8.507059e+37
        %v3940 = vand.u32 %v3575, 2147483648
        %v3941 = vor.u32 1.1754944e-38, %v3940
        %v3942 = vsel %vm3939, %v3941, %v3937
        %v3943 = vmul.f32 1.0, %v3942
        %v3944 = vrcp.pop %v3576
        %v3945 = vmul.f32 %v3576, %v3944
        %v3946 = vsub.f32 1.0, %v3945
        %v3947 = vmul.f32 %v3944, %v3946
        %v3948 = vadd.f32 %v3944, %v3947
        %vm3949 = vweird.f32 %v3576
        %vm3950 = vweird.f32 %v3944
        %vm3951 = vmor %vm3949, %vm3950
        %v3952 = vsel %vm3951, %v3944, %v3948
        %v3953 = vand.u32 2147483647, %v3576
        %vm3954 = vcmp.eq.f32.partialorder %v3953, 8.507059e+37
        %v3955 = vand.u32 %v3576, 2147483648
        %v3956 = vor.u32 1.1754944e-38, %v3955
        %v3957 = vsel %vm3954, %v3956, %v3952
        %v3958 = vmul.f32 1.0, %v3957
        %v3959 = vrcp.pop %v3577
        %v3960 = vmul.f32 %v3577, %v3959
        %v3961 = vsub.f32 1.0, %v3960
        %v3962 = vmul.f32 %v3959, %v3961
        %v3963 = vadd.f32 %v3959, %v3962
        %vm3964 = vweird.f32 %v3577
        %vm3965 = vweird.f32 %v3959
        %vm3966 = vmor %vm3964, %vm3965
        %v3967 = vsel %vm3966, %v3959, %v3963
        %v3968 = vand.u32 2147483647, %v3577
        %vm3969 = vcmp.eq.f32.partialorder %v3968, 8.507059e+37
        %v3970 = vand.u32 %v3577, 2147483648
        %v3971 = vor.u32 1.1754944e-38, %v3970
        %v3972 = vsel %vm3969, %v3971, %v3967
        %v3973 = vmul.f32 1.0, %v3972
        %v3974 = vrcp.pop %v3578
        %v3975 = vmul.f32 %v3578, %v3974
        %v3976 = vsub.f32 1.0, %v3975
        %v3977 = vmul.f32 %v3974, %v3976
        %v3978 = vadd.f32 %v3974, %v3977
        %vm3979 = vweird.f32 %v3578
        %vm3980 = vweird.f32 %v3974
        %vm3981 = vmor %vm3979, %vm3980
        %v3982 = vsel %vm3981, %v3974, %v3978
        %v3983 = vand.u32 2147483647, %v3578
        %vm3984 = vcmp.eq.f32.partialorder %v3983, 8.507059e+37
        %v3985 = vand.u32 %v3578, 2147483648
        %v3986 = vor.u32 1.1754944e-38, %v3985
        %v3987 = vsel %vm3984, %v3986, %v3982
        %v3988 = vmul.f32 1.0, %v3987
        %v3989 = vrcp.pop %v3579
        %v3990 = vmul.f32 %v3579, %v3989
        %v3991 = vsub.f32 1.0, %v3990
        %v3992 = vmul.f32 %v3989, %v3991
        %v3993 = vadd.f32 %v3989, %v3992
        %vm3994 = vweird.f32 %v3579
        %vm3995 = vweird.f32 %v3989
        %vm3996 = vmor %vm3994, %vm3995
        %v3997 = vsel %vm3996, %v3989, %v3993
        %v3998 = vand.u32 2147483647, %v3579
        %vm3999 = vcmp.eq.f32.partialorder %v3998, 8.507059e+37
        %v4000 = vand.u32 %v3579, 2147483648
        %v4001 = vor.u32 1.1754944e-38, %v4000
        %v4002 = vsel %vm3999, %v4001, %v3997
        %v4003 = vmul.f32 1.0, %v4002
        %v4004 = vrcp.pop %v3580
        %v4005 = vmul.f32 %v3580, %v4004
        %v4006 = vsub.f32 1.0, %v4005
        %v4007 = vmul.f32 %v4004, %v4006
        %v4008 = vadd.f32 %v4004, %v4007
        %vm4009 = vweird.f32 %v3580
        %vm4010 = vweird.f32 %v4004
        %vm4011 = vmor %vm4009, %vm4010
        %v4012 = vsel %vm4011, %v4004, %v4008
        %v4013 = vand.u32 2147483647, %v3580
        %vm4014 = vcmp.eq.f32.partialorder %v4013, 8.507059e+37
        %v4015 = vand.u32 %v3580, 2147483648
        %v4016 = vor.u32 1.1754944e-38, %v4015
        %v4017 = vsel %vm4014, %v4016, %v4012
        %v4018 = vmul.f32 1.0, %v4017
        %v4019 = vrcp.pop %v3581
        %v4020 = vmul.f32 %v3581, %v4019
        %v4021 = vsub.f32 1.0, %v4020
        %v4022 = vmul.f32 %v4019, %v4021
        %v4023 = vadd.f32 %v4019, %v4022
        %vm4024 = vweird.f32 %v3581
        %vm4025 = vweird.f32 %v4019
        %vm4026 = vmor %vm4024, %vm4025
        %v4027 = vsel %vm4026, %v4019, %v4023
        %v4028 = vand.u32 2147483647, %v3581
        %vm4029 = vcmp.eq.f32.partialorder %v4028, 8.507059e+37
        %v4030 = vand.u32 %v3581, 2147483648
        %v4031 = vor.u32 1.1754944e-38, %v4030
        %v4032 = vsel %vm4029, %v4031, %v4027
        %v4033 = vmul.f32 1.0, %v4032
        %v4034 = vrcp.pop %v3582
        %v4035 = vmul.f32 %v3582, %v4034
        %v4036 = vsub.f32 1.0, %v4035
        %v4037 = vmul.f32 %v4034, %v4036
        %v4038 = vadd.f32 %v4034, %v4037
        %vm4039 = vweird.f32 %v3582
        %vm4040 = vweird.f32 %v4034
        %vm4041 = vmor %vm4039, %vm4040
        %v4042 = vsel %vm4041, %v4034, %v4038
        %v4043 = vand.u32 2147483647, %v3582
        %vm4044 = vcmp.eq.f32.partialorder %v4043, 8.507059e+37
        %v4045 = vand.u32 %v3582, 2147483648
        %v4046 = vor.u32 1.1754944e-38, %v4045
        %v4047 = vsel %vm4044, %v4046, %v4042
        %v4048 = vmul.f32 1.0, %v4047
        %v4049 = vrcp.pop %v3583
        %v4050 = vmul.f32 %v3583, %v4049
        %v4051 = vsub.f32 1.0, %v4050
        %v4052 = vmul.f32 %v4049, %v4051
        %v4053 = vadd.f32 %v4049, %v4052
        %vm4054 = vweird.f32 %v3583
        %vm4055 = vweird.f32 %v4049
        %vm4056 = vmor %vm4054, %vm4055
        %v4057 = vsel %vm4056, %v4049, %v4053
        %v4058 = vand.u32 2147483647, %v3583
        %vm4059 = vcmp.eq.f32.partialorder %v4058, 8.507059e+37
        %v4060 = vand.u32 %v3583, 2147483648
        %v4061 = vor.u32 1.1754944e-38, %v4060
        %v4062 = vsel %vm4059, %v4061, %v4057
        %v4063 = vmul.f32 1.0, %v4062
        %v4064 = vmul.f32 %v3424, %v3598
        %v4065 = vmul.f32 %v3425, %v3613
        %v4066 = vmul.f32 %v3426, %v3628
        %v4067 = vmul.f32 %v3427, %v3643
        %v4068 = vmul.f32 %v3428, %v3658
        %v4069 = vmul.f32 %v3429, %v3673
        %v4070 = vmul.f32 %v3430, %v3688
        %v4071 = vmul.f32 %v3431, %v3703
        %v4072 = vmul.f32 %v3432, %v3718
        %v4073 = vmul.f32 %v3433, %v3733
        %v4074 = vmul.f32 %v3434, %v3748
        %v4075 = vmul.f32 %v3435, %v3763
        %v4076 = vmul.f32 %v3436, %v3778
        %v4077 = vmul.f32 %v3437, %v3793
        %v4078 = vmul.f32 %v3438, %v3808
        %v4079 = vmul.f32 %v3439, %v3823
        %v4080 = vmul.f32 %v3440, %v3838
        %v4081 = vmul.f32 %v3441, %v3853
        %v4082 = vmul.f32 %v3442, %v3868
        %v4083 = vmul.f32 %v3443, %v3883
        %v4084 = vmul.f32 %v3444, %v3898
        %v4085 = vmul.f32 %v3445, %v3913
        %v4086 = vmul.f32 %v3446, %v3928
        %v4087 = vmul.f32 %v3447, %v3943
        %v4088 = vmul.f32 %v3448, %v3958
        %v4089 = vmul.f32 %v3449, %v3973
        %v4090 = vmul.f32 %v3450, %v3988
        %v4091 = vmul.f32 %v3451, %v4003
        %v4092 = vmul.f32 %v3452, %v4018
        %v4093 = vmul.f32 %v3453, %v4033
        %v4094 = vmul.f32 %v3454, %v4048
        %v4095 = vmul.f32 %v3455, %v4063
        %v4096 = vld [vmem:[%s13] sm:$0x1]
        %v4097 = vpack.c.bf16 %v4064, %v4064
        %v4098 = vpack.c.bf16 %v4065, %v4065
        %v4099 = vpack.c.bf16 %v4066, %v4066
        %v4100 = vpack.c.bf16 %v4067, %v4067
        %v4101 = vpack.c.bf16 %v4068, %v4068
        %v4102 = vpack.c.bf16 %v4069, %v4069
        %v4103 = vpack.c.bf16 %v4070, %v4070
        %v4104 = vpack.c.bf16 %v4071, %v4071
        %v4105 = vpack.c.bf16 %v4072, %v4072
        %v4106 = vpack.c.bf16 %v4073, %v4073
        %v4107 = vpack.c.bf16 %v4074, %v4074
        %v4108 = vpack.c.bf16 %v4075, %v4075
        %v4109 = vpack.c.bf16 %v4076, %v4076
        %v4110 = vpack.c.bf16 %v4077, %v4077
        %v4111 = vpack.c.bf16 %v4078, %v4078
        %v4112 = vpack.c.bf16 %v4079, %v4079
        %v4113 = vpack.c.bf16 %v4080, %v4080
        %v4114 = vpack.c.bf16 %v4081, %v4081
        %v4115 = vpack.c.bf16 %v4082, %v4082
        %v4116 = vpack.c.bf16 %v4083, %v4083
        %v4117 = vpack.c.bf16 %v4084, %v4084
        %v4118 = vpack.c.bf16 %v4085, %v4085
        %v4119 = vpack.c.bf16 %v4086, %v4086
        %v4120 = vpack.c.bf16 %v4087, %v4087
        %v4121 = vpack.c.bf16 %v4088, %v4088
        %v4122 = vpack.c.bf16 %v4089, %v4089
        %v4123 = vpack.c.bf16 %v4090, %v4090
        %v4124 = vpack.c.bf16 %v4091, %v4091
        %v4125 = vpack.c.bf16 %v4092, %v4092
        %v4126 = vpack.c.bf16 %v4093, %v4093
        %v4127 = vpack.c.bf16 %v4094, %v4094
        %v4128 = vpack.c.bf16 %v4095, %v4095
        %v4161 = vunpack.c.l.b16 %v4097
        %v4162 = vunpack.c.l.b16 %v4098
        %v4163 = vunpack.c.l.b16 %v4099
        %v4164 = vunpack.c.l.b16 %v4100
        %v4165 = vunpack.c.l.b16 %v4101
        %v4166 = vunpack.c.l.b16 %v4102
        %v4167 = vunpack.c.l.b16 %v4103
        %v4168 = vunpack.c.l.b16 %v4104
        %v4169 = vunpack.c.l.b16 %v4105
        %v4170 = vunpack.c.l.b16 %v4106
        %v4171 = vunpack.c.l.b16 %v4107
        %v4172 = vunpack.c.l.b16 %v4108
        %v4173 = vunpack.c.l.b16 %v4109
        %v4174 = vunpack.c.l.b16 %v4110
        %v4175 = vunpack.c.l.b16 %v4111
        %v4176 = vunpack.c.l.b16 %v4112
        %v4177 = vunpack.c.l.b16 %v4113
        %v4178 = vunpack.c.l.b16 %v4114
        %v4179 = vunpack.c.l.b16 %v4115
        %v4180 = vunpack.c.l.b16 %v4116
        %v4181 = vunpack.c.l.b16 %v4117
        %v4182 = vunpack.c.l.b16 %v4118
        %v4183 = vunpack.c.l.b16 %v4119
        %v4184 = vunpack.c.l.b16 %v4120
        %v4185 = vunpack.c.l.b16 %v4121
        %v4186 = vunpack.c.l.b16 %v4122
        %v4187 = vunpack.c.l.b16 %v4123
        %v4188 = vunpack.c.l.b16 %v4124
        %v4189 = vunpack.c.l.b16 %v4125
        %v4190 = vunpack.c.l.b16 %v4126
        %v4191 = vunpack.c.l.b16 %v4127
        %v4192 = vunpack.c.l.b16 %v4128
        %v4193 = vpack.c.b16 %v4162, %v4161
        %v4194 = vpack.c.b16 %v4164, %v4163
        %v4195 = vpack.c.b16 %v4166, %v4165
        %v4196 = vpack.c.b16 %v4168, %v4167
        %v4197 = vpack.c.b16 %v4170, %v4169
        %v4198 = vpack.c.b16 %v4172, %v4171
        %v4199 = vpack.c.b16 %v4174, %v4173
        %v4200 = vpack.c.b16 %v4176, %v4175
        %v4201 = vpack.c.b16 %v4178, %v4177
        %v4202 = vpack.c.b16 %v4180, %v4179
        %v4203 = vpack.c.b16 %v4182, %v4181
        %v4204 = vpack.c.b16 %v4184, %v4183
        %v4205 = vpack.c.b16 %v4186, %v4185
        %v4206 = vpack.c.b16 %v4188, %v4187
        %v4207 = vpack.c.b16 %v4190, %v4189
        %v4208 = vpack.c.b16 %v4192, %v4191
        %v4210 = vshrl.u32 %v4193, 16
        %v4212 = vrot.slane %v4210, 7
        %v4213 = vshll.u32 %v4193, 16
        %v4215 = vor.u32 %v4212, %v4213
        %v4217 = vshrl.u32 %v4194, 16
        %v4219 = vrot.slane %v4217, 7
        %v4220 = vshll.u32 %v4194, 16
        %v4222 = vor.u32 %v4219, %v4220
        %v4224 = vshrl.u32 %v4195, 16
        %v4226 = vrot.slane %v4224, 7
        %v4227 = vshll.u32 %v4195, 16
        %v4229 = vor.u32 %v4226, %v4227
        %v4231 = vshrl.u32 %v4196, 16
        %v4233 = vrot.slane %v4231, 7
        %v4234 = vshll.u32 %v4196, 16
        %v4236 = vor.u32 %v4233, %v4234
        %v4238 = vshrl.u32 %v4197, 16
        %v4240 = vrot.slane %v4238, 7
        %v4241 = vshll.u32 %v4197, 16
        %v4243 = vor.u32 %v4240, %v4241
        %v4245 = vshrl.u32 %v4198, 16
        %v4247 = vrot.slane %v4245, 7
        %v4248 = vshll.u32 %v4198, 16
        %v4250 = vor.u32 %v4247, %v4248
        %v4252 = vshrl.u32 %v4199, 16
        %v4254 = vrot.slane %v4252, 7
        %v4255 = vshll.u32 %v4199, 16
        %v4257 = vor.u32 %v4254, %v4255
        %v4259 = vshrl.u32 %v4200, 16
        %v4261 = vrot.slane %v4259, 7
        %v4262 = vshll.u32 %v4200, 16
        %v4264 = vor.u32 %v4261, %v4262
        %v4266 = vshrl.u32 %v4201, 16
        %v4268 = vrot.slane %v4266, 7
        %v4269 = vshll.u32 %v4201, 16
        %v4271 = vor.u32 %v4268, %v4269
        %v4273 = vshrl.u32 %v4202, 16
        %v4275 = vrot.slane %v4273, 7
        %v4276 = vshll.u32 %v4202, 16
        %v4278 = vor.u32 %v4275, %v4276
        %v4280 = vshrl.u32 %v4203, 16
        %v4282 = vrot.slane %v4280, 7
        %v4283 = vshll.u32 %v4203, 16
        %v4285 = vor.u32 %v4282, %v4283
        %v4287 = vshrl.u32 %v4204, 16
        %v4289 = vrot.slane %v4287, 7
        %v4290 = vshll.u32 %v4204, 16
        %v4292 = vor.u32 %v4289, %v4290
        %v4294 = vshrl.u32 %v4205, 16
        %v4296 = vrot.slane %v4294, 7
        %v4297 = vshll.u32 %v4205, 16
        %v4299 = vor.u32 %v4296, %v4297
        %v4301 = vshrl.u32 %v4206, 16
        %v4303 = vrot.slane %v4301, 7
        %v4304 = vshll.u32 %v4206, 16
        %v4306 = vor.u32 %v4303, %v4304
        %v4308 = vshrl.u32 %v4207, 16
        %v4310 = vrot.slane %v4308, 7
        %v4311 = vshll.u32 %v4207, 16
        %v4313 = vor.u32 %v4310, %v4311
        %v4315 = vshrl.u32 %v4208, 16
        %v4317 = vrot.slane %v4315, 7
        %v4318 = vshll.u32 %v4208, 16
        %v4320 = vor.u32 %v4317, %v4318
        %v4353 = vsel %vm1940, 0, %v4215
        %v4354 = vsel %vm1940, 0, %v4222
        %v4355 = vsel %vm1940, 0, %v4229
        %v4356 = vsel %vm1940, 0, %v4236
        %v4357 = vsel %vm1940, 0, %v4243
        %v4358 = vsel %vm1940, 0, %v4250
        %v4359 = vsel %vm1940, 0, %v4257
        %v4360 = vsel %vm1940, 0, %v4264
        %v4361 = vsel %vm1940, 0, %v4271
        %v4362 = vsel %vm1940, 0, %v4278
        %v4363 = vsel %vm1940, 0, %v4285
        %v4364 = vsel %vm1940, 0, %v4292
        %v4365 = vsel %vm1940, 0, %v4299
        %v4366 = vsel %vm1940, 0, %v4306
        %v4367 = vsel %vm1940, 0, %v4313
        %v4368 = vsel %vm1940, 0, %v4320
        %v4369 = vsel %vm1940, %v4212, 0
        %v4370 = vsel %vm1940, %v4219, 0
        %v4371 = vsel %vm1940, %v4226, 0
        %v4372 = vsel %vm1940, %v4233, 0
        %v4373 = vsel %vm1940, %v4240, 0
        %v4374 = vsel %vm1940, %v4247, 0
        %v4375 = vsel %vm1940, %v4254, 0
        %v4376 = vsel %vm1940, %v4261, 0
        %v4377 = vsel %vm1940, %v4268, 0
        %v4378 = vsel %vm1940, %v4275, 0
        %v4379 = vsel %vm1940, %v4282, 0
        %v4380 = vsel %vm1940, %v4289, 0
        %v4381 = vsel %vm1940, %v4296, 0
        %v4382 = vsel %vm1940, %v4303, 0
        %v4383 = vsel %vm1940, %v4310, 0
        %v4384 = vsel %vm1940, %v4317, 0
        %v4386 = vshrl.u32 %v4353, 16
        %v4388 = vshll.u32 %v4353, 16
        %v4390 = vrot.slane %v4388, 1
        %v4391 = vor.u32 %v4386, %v4390
        %v4393 = vshll.u32 %v4369, 16
        %v4395 = vrot.slane %v4393, 1
        %v4396 = vsel %vm1975, %v4391, %v4395
        %v4398 = vshrl.u32 %v4354, 16
        %v4400 = vshll.u32 %v4354, 16
        %v4402 = vrot.slane %v4400, 1
        %v4403 = vor.u32 %v4398, %v4402
        %v4405 = vshll.u32 %v4370, 16
        %v4407 = vrot.slane %v4405, 1
        %v4408 = vsel %vm1975, %v4403, %v4407
        %v4410 = vshrl.u32 %v4355, 16
        %v4412 = vshll.u32 %v4355, 16
        %v4414 = vrot.slane %v4412, 1
        %v4415 = vor.u32 %v4410, %v4414
        %v4417 = vshll.u32 %v4371, 16
        %v4419 = vrot.slane %v4417, 1
        %v4420 = vsel %vm1975, %v4415, %v4419
        %v4422 = vshrl.u32 %v4356, 16
        %v4424 = vshll.u32 %v4356, 16
        %v4426 = vrot.slane %v4424, 1
        %v4427 = vor.u32 %v4422, %v4426
        %v4429 = vshll.u32 %v4372, 16
        %v4431 = vrot.slane %v4429, 1
        %v4432 = vsel %vm1975, %v4427, %v4431
        %v4434 = vshrl.u32 %v4357, 16
        %v4436 = vshll.u32 %v4357, 16
        %v4438 = vrot.slane %v4436, 1
        %v4439 = vor.u32 %v4434, %v4438
        %v4441 = vshll.u32 %v4373, 16
        %v4443 = vrot.slane %v4441, 1
        %v4444 = vsel %vm1975, %v4439, %v4443
        %v4446 = vshrl.u32 %v4358, 16
        %v4448 = vshll.u32 %v4358, 16
        %v4450 = vrot.slane %v4448, 1
        %v4451 = vor.u32 %v4446, %v4450
        %v4453 = vshll.u32 %v4374, 16
        %v4455 = vrot.slane %v4453, 1
        %v4456 = vsel %vm1975, %v4451, %v4455
        %v4458 = vshrl.u32 %v4359, 16
        %v4460 = vshll.u32 %v4359, 16
        %v4462 = vrot.slane %v4460, 1
        %v4463 = vor.u32 %v4458, %v4462
        %v4465 = vshll.u32 %v4375, 16
        %v4467 = vrot.slane %v4465, 1
        %v4468 = vsel %vm1975, %v4463, %v4467
        %v4470 = vshrl.u32 %v4360, 16
        %v4472 = vshll.u32 %v4360, 16
        %v4474 = vrot.slane %v4472, 1
        %v4475 = vor.u32 %v4470, %v4474
        %v4477 = vshll.u32 %v4376, 16
        %v4479 = vrot.slane %v4477, 1
        %v4480 = vsel %vm1975, %v4475, %v4479
        %v4482 = vshrl.u32 %v4361, 16
        %v4484 = vshll.u32 %v4361, 16
        %v4486 = vrot.slane %v4484, 1
        %v4487 = vor.u32 %v4482, %v4486
        %v4489 = vshll.u32 %v4377, 16
        %v4491 = vrot.slane %v4489, 1
        %v4492 = vsel %vm1975, %v4487, %v4491
        %v4494 = vshrl.u32 %v4362, 16
        %v4496 = vshll.u32 %v4362, 16
        %v4498 = vrot.slane %v4496, 1
        %v4499 = vor.u32 %v4494, %v4498
        %v4501 = vshll.u32 %v4378, 16
        %v4503 = vrot.slane %v4501, 1
        %v4504 = vsel %vm1975, %v4499, %v4503
        %v4506 = vshrl.u32 %v4363, 16
        %v4508 = vshll.u32 %v4363, 16
        %v4510 = vrot.slane %v4508, 1
        %v4511 = vor.u32 %v4506, %v4510
        %v4513 = vshll.u32 %v4379, 16
        %v4515 = vrot.slane %v4513, 1
        %v4516 = vsel %vm1975, %v4511, %v4515
        %v4518 = vshrl.u32 %v4364, 16
        %v4520 = vshll.u32 %v4364, 16
        %v4522 = vrot.slane %v4520, 1
        %v4523 = vor.u32 %v4518, %v4522
        %v4525 = vshll.u32 %v4380, 16
        %v4527 = vrot.slane %v4525, 1
        %v4528 = vsel %vm1975, %v4523, %v4527
        %v4530 = vshrl.u32 %v4365, 16
        %v4532 = vshll.u32 %v4365, 16
        %v4534 = vrot.slane %v4532, 1
        %v4535 = vor.u32 %v4530, %v4534
        %v4537 = vshll.u32 %v4381, 16
        %v4539 = vrot.slane %v4537, 1
        %v4540 = vsel %vm1975, %v4535, %v4539
        %v4542 = vshrl.u32 %v4366, 16
        %v4544 = vshll.u32 %v4366, 16
        %v4546 = vrot.slane %v4544, 1
        %v4547 = vor.u32 %v4542, %v4546
        %v4549 = vshll.u32 %v4382, 16
        %v4551 = vrot.slane %v4549, 1
        %v4552 = vsel %vm1975, %v4547, %v4551
        %v4554 = vshrl.u32 %v4367, 16
        %v4556 = vshll.u32 %v4367, 16
        %v4558 = vrot.slane %v4556, 1
        %v4559 = vor.u32 %v4554, %v4558
        %v4561 = vshll.u32 %v4383, 16
        %v4563 = vrot.slane %v4561, 1
        %v4564 = vsel %vm1975, %v4559, %v4563
        %4565 = vrot.lane.b32.xlu0 %v1987, 64
        %v4566 = vpop.permute.xlu0 %4565
        %4567 = vrot.lane.b32.xlu0 %v4396, 64
        %v4568 = vpop.permute.xlu0 %4567
        %4569 = vrot.lane.b32.xlu0 %v4408, 64
        %v4570 = vpop.permute.xlu0 %4569
        %4571 = vrot.lane.b32.xlu0 %v4420, 64
        %v4572 = vpop.permute.xlu0 %4571
        %4573 = vrot.lane.b32.xlu0 %v4432, 64
        %v4574 = vpop.permute.xlu0 %4573
        %4575 = vrot.lane.b32.xlu0 %v4444, 64
        %v4576 = vpop.permute.xlu0 %4575
        %4577 = vrot.lane.b32.xlu0 %v4456, 64
        %v4578 = vpop.permute.xlu0 %4577
        %4579 = vrot.lane.b32.xlu0 %v4468, 64
        %v4580 = vpop.permute.xlu0 %4579
        %4581 = vrot.lane.b32.xlu0 %v4480, 64
        %v4582 = vpop.permute.xlu0 %4581
        %4583 = vrot.lane.b32.xlu0 %v4492, 64
        %v4584 = vpop.permute.xlu0 %4583
        %4585 = vrot.lane.b32.xlu0 %v4504, 64
        %v4586 = vpop.permute.xlu0 %4585
        %4587 = vrot.lane.b32.xlu0 %v4516, 64
        %v4588 = vpop.permute.xlu0 %4587
        %4589 = vrot.lane.b32.xlu0 %v4528, 64
        %v4590 = vpop.permute.xlu0 %4589
        %4591 = vrot.lane.b32.xlu0 %v4540, 64
        %v4592 = vpop.permute.xlu0 %4591
        %4593 = vrot.lane.b32.xlu0 %v4552, 64
        %v4594 = vpop.permute.xlu0 %4593
        %4595 = vrot.lane.b32.xlu0 %v4564, 64
        %v4596 = vpop.permute.xlu0 %4595
        %v4627 = vrot.slane %v4353, 1
        %v4628 = vrot.slane %v4369, 1
        %v4629 = vsel %vm2232, %v4627, %v4628
        %v4630 = vrot.slane %v4354, 1
        %v4631 = vrot.slane %v4370, 1
        %v4632 = vsel %vm2232, %v4630, %v4631
        %v4633 = vrot.slane %v4355, 1
        %v4634 = vrot.slane %v4371, 1
        %v4635 = vsel %vm2232, %v4633, %v4634
        %v4636 = vrot.slane %v4356, 1
        %v4637 = vrot.slane %v4372, 1
        %v4638 = vsel %vm2232, %v4636, %v4637
        %v4639 = vrot.slane %v4357, 1
        %v4640 = vrot.slane %v4373, 1
        %v4641 = vsel %vm2232, %v4639, %v4640
        %v4642 = vrot.slane %v4358, 1
        %v4643 = vrot.slane %v4374, 1
        %v4644 = vsel %vm2232, %v4642, %v4643
        %v4645 = vrot.slane %v4359, 1
        %v4646 = vrot.slane %v4375, 1
        %v4647 = vsel %vm2232, %v4645, %v4646
        %v4648 = vrot.slane %v4360, 1
        %v4649 = vrot.slane %v4376, 1
        %v4650 = vsel %vm2232, %v4648, %v4649
        %v4651 = vrot.slane %v4361, 1
        %v4652 = vrot.slane %v4377, 1
        %v4653 = vsel %vm2232, %v4651, %v4652
        %v4654 = vrot.slane %v4362, 1
        %v4655 = vrot.slane %v4378, 1
        %v4656 = vsel %vm2232, %v4654, %v4655
        %v4657 = vrot.slane %v4363, 1
        %v4658 = vrot.slane %v4379, 1
        %v4659 = vsel %vm2232, %v4657, %v4658
        %v4660 = vrot.slane %v4364, 1
        %v4661 = vrot.slane %v4380, 1
        %v4662 = vsel %vm2232, %v4660, %v4661
        %v4663 = vrot.slane %v4365, 1
        %v4664 = vrot.slane %v4381, 1
        %v4665 = vsel %vm2232, %v4663, %v4664
        %v4666 = vrot.slane %v4366, 1
        %v4667 = vrot.slane %v4382, 1
        %v4668 = vsel %vm2232, %v4666, %v4667
        %v4669 = vrot.slane %v4367, 1
        %v4670 = vrot.slane %v4383, 1
        %v4671 = vsel %vm2232, %v4669, %v4670
        %v4673 = vsel %vm2345, %v1941, %v4566
        %v4676 = vsel %vm2345, %v4353, %v4568
        %v4679 = vsel %vm2345, %v4354, %v4570
        %v4682 = vsel %vm2345, %v4355, %v4572
        %v4685 = vsel %vm2345, %v4356, %v4574
        %v4688 = vsel %vm2345, %v4357, %v4576
        %v4691 = vsel %vm2345, %v4358, %v4578
        %v4694 = vsel %vm2345, %v4359, %v4580
        %v4697 = vsel %vm2345, %v4360, %v4582
        %v4700 = vsel %vm2345, %v4361, %v4584
        %v4703 = vsel %vm2345, %v4362, %v4586
        %v4706 = vsel %vm2345, %v4363, %v4588
        %v4709 = vsel %vm2345, %v4364, %v4590
        %v4712 = vsel %vm2345, %v4365, %v4592
        %v4715 = vsel %vm2345, %v4366, %v4594
        %v4718 = vsel %vm2345, %v4367, %v4596
        %v4721 = vshrl.u32 %v4368, 16
        %v4723 = vshll.u32 %v4368, 16
        %v4725 = vrot.slane %v4723, 1
        %v4726 = vor.u32 %v4721, %v4725
        %v4728 = vshll.u32 %v4384, 16
        %v4730 = vrot.slane %v4728, 1
        %v4731 = vsel %vm1975, %v4726, %v4730
        %4732 = vrot.lane.b32.xlu0 %v4731, 64
        %v4733 = vpop.permute.xlu0 %4732
        %v4736 = vrot.slane %v4368, 1
        %v4737 = vrot.slane %v4384, 1
        %v4738 = vsel %vm2232, %v4736, %v4737
        %v4740 = vsel %vm2345, %v4368, %v4733
        %4758 = vrot.lane.b32.xlu0 %v4676, 64
        %v4759 = vpop.permute.xlu0 %4758
        %4760 = vrot.lane.b32.xlu0 %v4629, 64
        %v4761 = vpop.permute.xlu0 %4760
        %4762 = vrot.lane.b32.xlu0 %v4679, 64
        %v4763 = vpop.permute.xlu0 %4762
        %4764 = vrot.lane.b32.xlu0 %v4632, 64
        %v4765 = vpop.permute.xlu0 %4764
        %4766 = vrot.lane.b32.xlu0 %v4682, 64
        %v4767 = vpop.permute.xlu0 %4766
        %4768 = vrot.lane.b32.xlu0 %v4635, 64
        %v4769 = vpop.permute.xlu0 %4768
        %4770 = vrot.lane.b32.xlu0 %v4685, 64
        %v4771 = vpop.permute.xlu0 %4770
        %4772 = vrot.lane.b32.xlu0 %v4638, 64
        %v4773 = vpop.permute.xlu0 %4772
        %4774 = vrot.lane.b32.xlu0 %v4688, 64
        %v4775 = vpop.permute.xlu0 %4774
        %4776 = vrot.lane.b32.xlu0 %v4641, 64
        %v4777 = vpop.permute.xlu0 %4776
        %4778 = vrot.lane.b32.xlu0 %v4691, 64
        %v4779 = vpop.permute.xlu0 %4778
        %4780 = vrot.lane.b32.xlu0 %v4644, 64
        %v4781 = vpop.permute.xlu0 %4780
        %4782 = vrot.lane.b32.xlu0 %v4694, 64
        %v4783 = vpop.permute.xlu0 %4782
        %4784 = vrot.lane.b32.xlu0 %v4647, 64
        %v4785 = vpop.permute.xlu0 %4784
        %4786 = vrot.lane.b32.xlu0 %v4697, 64
        %v4787 = vpop.permute.xlu0 %4786
        %4788 = vrot.lane.b32.xlu0 %v4650, 64
        %v4789 = vpop.permute.xlu0 %4788
        %4790 = vrot.lane.b32.xlu0 %v4700, 64
        %v4791 = vpop.permute.xlu0 %4790
        %4792 = vrot.lane.b32.xlu0 %v4653, 64
        %v4793 = vpop.permute.xlu0 %4792
        %4794 = vrot.lane.b32.xlu0 %v4703, 64
        %v4795 = vpop.permute.xlu0 %4794
        %4796 = vrot.lane.b32.xlu0 %v4656, 64
        %v4797 = vpop.permute.xlu0 %4796
        %4798 = vrot.lane.b32.xlu0 %v4706, 64
        %v4799 = vpop.permute.xlu0 %4798
        %4800 = vrot.lane.b32.xlu0 %v4659, 64
        %v4801 = vpop.permute.xlu0 %4800
        %4802 = vrot.lane.b32.xlu0 %v4709, 64
        %v4803 = vpop.permute.xlu0 %4802
        %4804 = vrot.lane.b32.xlu0 %v4662, 64
        %v4805 = vpop.permute.xlu0 %4804
        %4806 = vrot.lane.b32.xlu0 %v4712, 64
        %v4807 = vpop.permute.xlu0 %4806
        %4808 = vrot.lane.b32.xlu0 %v4665, 64
        %v4809 = vpop.permute.xlu0 %4808
        %4810 = vrot.lane.b32.xlu0 %v4715, 64
        %v4811 = vpop.permute.xlu0 %4810
        %4812 = vrot.lane.b32.xlu0 %v4668, 64
        %v4813 = vpop.permute.xlu0 %4812
        %4814 = vrot.lane.b32.xlu0 %v4718, 64
        %v4815 = vpop.permute.xlu0 %4814
        %4816 = vrot.lane.b32.xlu0 %v4671, 64
        %v4817 = vpop.permute.xlu0 %4816
        %4818 = vrot.lane.b32.xlu0 %v4740, 64
        %v4819 = vpop.permute.xlu0 %4818
        %4820 = vrot.lane.b32.xlu0 %v4738, 64
        %v4821 = vpop.permute.xlu0 %4820
        %vm4822 = vcmask 523264
        %v4823 = vsel %vm4822, %v4759, %v4761
        %v4824 = vsel %vm4822, %v4763, %v4765
        %v4825 = vsel %vm4822, %v4767, %v4769
        %v4826 = vsel %vm4822, %v4771, %v4773
        %v4827 = vsel %vm4822, %v4775, %v4777
        %v4828 = vsel %vm4822, %v4779, %v4781
        %v4829 = vsel %vm4822, %v4783, %v4785
        %v4830 = vsel %vm4822, %v4787, %v4789
        %v4831 = vsel %vm4822, %v4791, %v4793
        %v4832 = vsel %vm4822, %v4795, %v4797
        %v4833 = vsel %vm4822, %v4799, %v4801
        %v4834 = vsel %vm4822, %v4803, %v4805
        %v4835 = vsel %vm4822, %v4807, %v4809
        %v4836 = vsel %vm4822, %v4811, %v4813
        %v4837 = vsel %vm4822, %v4815, %v4817
        %v4838 = vsel %vm4822, %v4819, %v4821
        %v4857 = vsel %vm2345, %v2235, %v4759
        %v4861 = vsel %vm2345, %v4629, %v4763
        %v4865 = vsel %vm2345, %v4632, %v4767
        %v4869 = vsel %vm2345, %v4635, %v4771
        %v4873 = vsel %vm2345, %v4638, %v4775
        %v4877 = vsel %vm2345, %v4641, %v4779
        %v4881 = vsel %vm2345, %v4644, %v4783
        %v4885 = vsel %vm2345, %v4647, %v4787
        %v4889 = vsel %vm2345, %v4650, %v4791
        %v4893 = vsel %vm2345, %v4653, %v4795
        %v4897 = vsel %vm2345, %v4656, %v4799
        %v4901 = vsel %vm2345, %v4659, %v4803
        %v4905 = vsel %vm2345, %v4662, %v4807
        %v4909 = vsel %vm2345, %v4665, %v4811
        %v4913 = vsel %vm2345, %v4668, %v4815
        %v4917 = vsel %vm2345, %v4671, %v4819
        %v4919 = vld [vmem:[#allocation5] sm:$0xf]
        %v4920 = vld [vmem:[#allocation5 + $0x4] sm:$0xf]
        %v4921 = vld [vmem:[#allocation5 + $0x8] sm:$0xf]
        %v4922 = vld [vmem:[#allocation5 + $0xc] sm:$0xf]
        %v4923 = vld [vmem:[#allocation5 + $0x10] sm:$0xf]
        %v4924 = vld [vmem:[#allocation5 + $0x14] sm:$0xf]
        %v4925 = vld [vmem:[#allocation5 + $0x18] sm:$0xf]
        %v4926 = vld [vmem:[#allocation5 + $0x1c] sm:$0xf]
        %v4927 = vld [vmem:[#allocation5 + $0x20] sm:$0xf]
        %v4928 = vld [vmem:[#allocation5 + $0x24] sm:$0xf]
        %v4929 = vld [vmem:[#allocation5 + $0x28] sm:$0xf]
        %v4930 = vld [vmem:[#allocation5 + $0x2c] sm:$0xf]
        %v4931 = vld [vmem:[#allocation5 + $0x30] sm:$0xf]
        %v4932 = vld [vmem:[#allocation5 + $0x34] sm:$0xf]
        %v4933 = vld [vmem:[#allocation5 + $0x38] sm:$0xf]
        %v4934 = vld [vmem:[#allocation5 + $0x3c] sm:$0xf]
        %v4935 = vld [vmem:[#allocation5 + $0x40] sm:$0xf]
        %v4936 = vld [vmem:[#allocation5 + $0x44] sm:$0xf]
        %v4937 = vld [vmem:[#allocation5 + $0x48] sm:$0xf]
        %v4938 = vld [vmem:[#allocation5 + $0x4c] sm:$0xf]
        %v4939 = vld [vmem:[#allocation5 + $0x50] sm:$0xf]
        %v4940 = vld [vmem:[#allocation5 + $0x54] sm:$0xf]
        %v4941 = vld [vmem:[#allocation5 + $0x58] sm:$0xf]
        %v4942 = vld [vmem:[#allocation5 + $0x5c] sm:$0xf]
        %v4943 = vld [vmem:[#allocation5 + $0x60] sm:$0xf]
        %v4944 = vld [vmem:[#allocation5 + $0x64] sm:$0xf]
        %v4945 = vld [vmem:[#allocation5 + $0x68] sm:$0xf]
        %v4946 = vld [vmem:[#allocation5 + $0x6c] sm:$0xf]
        %v4947 = vld [vmem:[#allocation5 + $0x70] sm:$0xf]
        %v4948 = vld [vmem:[#allocation5 + $0x74] sm:$0xf]
        %v4949 = vld [vmem:[#allocation5 + $0x78] sm:$0xf]
        %v4950 = vld [vmem:[#allocation5 + $0x7c] sm:$0xf]
        %v4951 = vld [vmem:[#allocation5 + $0x80] sm:$0xf]
        %v4952 = vld [vmem:[#allocation5 + $0x84] sm:$0xf]
        %v4953 = vld [vmem:[#allocation5 + $0x88] sm:$0xf]
        %v4954 = vld [vmem:[#allocation5 + $0x8c] sm:$0xf]
        %v4955 = vld [vmem:[#allocation5 + $0x90] sm:$0xf]
        %v4956 = vld [vmem:[#allocation5 + $0x94] sm:$0xf]
        %v4957 = vld [vmem:[#allocation5 + $0x98] sm:$0xf]
        %v4958 = vld [vmem:[#allocation5 + $0x9c] sm:$0xf]
        %v4959 = vld [vmem:[#allocation5 + $0xa0] sm:$0xf]
        %v4960 = vld [vmem:[#allocation5 + $0xa4] sm:$0xf]
        %v4961 = vld [vmem:[#allocation5 + $0xa8] sm:$0xf]
        %v4962 = vld [vmem:[#allocation5 + $0xac] sm:$0xf]
        %v4963 = vld [vmem:[#allocation5 + $0xb0] sm:$0xf]
        %v4964 = vld [vmem:[#allocation5 + $0xb4] sm:$0xf]
        %v4965 = vld [vmem:[#allocation5 + $0xb8] sm:$0xf]
        %v4966 = vld [vmem:[#allocation5 + $0xbc] sm:$0xf]
        %v4967 = vld [vmem:[#allocation5 + $0xc0] sm:$0xf]
        %v4968 = vld [vmem:[#allocation5 + $0xc4] sm:$0xf]
        %v4969 = vld [vmem:[#allocation5 + $0xc8] sm:$0xf]
        %v4970 = vld [vmem:[#allocation5 + $0xcc] sm:$0xf]
        %v4971 = vld [vmem:[#allocation5 + $0xd0] sm:$0xf]
        %v4972 = vld [vmem:[#allocation5 + $0xd4] sm:$0xf]
        %v4973 = vld [vmem:[#allocation5 + $0xd8] sm:$0xf]
        %v4974 = vld [vmem:[#allocation5 + $0xdc] sm:$0xf]
        %v4975 = vld [vmem:[#allocation5 + $0xe0] sm:$0xf]
        %v4976 = vld [vmem:[#allocation5 + $0xe4] sm:$0xf]
        %v4977 = vld [vmem:[#allocation5 + $0xe8] sm:$0xf]
        %v4978 = vld [vmem:[#allocation5 + $0xec] sm:$0xf]
        %v4979 = vld [vmem:[#allocation5 + $0xf0] sm:$0xf]
        %v4980 = vld [vmem:[#allocation5 + $0xf4] sm:$0xf]
        %v4981 = vld [vmem:[#allocation5 + $0xf8] sm:$0xf]
        %v4982 = vld [vmem:[#allocation5 + $0xfc] sm:$0xf]
        %v4983 = vld [vmem:[#allocation5 + $0x100] sm:$0xf]
        %v4984 = vld [vmem:[#allocation5 + $0x104] sm:$0xf]
        %v4985 = vld [vmem:[#allocation5 + $0x108] sm:$0xf]
        %v4986 = vld [vmem:[#allocation5 + $0x10c] sm:$0xf]
        %v4987 = vld [vmem:[#allocation5 + $0x110] sm:$0xf]
        %v4988 = vld [vmem:[#allocation5 + $0x114] sm:$0xf]
        %v4989 = vld [vmem:[#allocation5 + $0x118] sm:$0xf]
        %v4990 = vld [vmem:[#allocation5 + $0x11c] sm:$0xf]
        %v4992 = vperm.slane %v4096, 0
        %v5066 = vunpack.c.l.b16 %v4919
        %v5067 = vunpack.c.l.b16 %v4920
        %v5068 = vunpack.c.l.b16 %v4921
        %v5069 = vunpack.c.l.b16 %v4922
        %v5070 = vunpack.c.l.b16 %v4923
        %v5071 = vunpack.c.l.b16 %v4924
        %v5072 = vunpack.c.l.b16 %v4925
        %v5073 = vunpack.c.l.b16 %v4926
        %v5074 = vunpack.c.l.b16 %v4927
        %v5075 = vunpack.c.l.b16 %v4928
        %v5076 = vunpack.c.l.b16 %v4929
        %v5077 = vunpack.c.l.b16 %v4930
        %v5078 = vunpack.c.l.b16 %v4931
        %v5079 = vunpack.c.l.b16 %v4932
        %v5080 = vunpack.c.l.b16 %v4933
        %v5081 = vunpack.c.l.b16 %v4934
        %v5082 = vunpack.c.l.b16 %v4935
        %v5083 = vunpack.c.l.b16 %v4936
        %v5084 = vunpack.c.l.b16 %v4937
        %v5085 = vunpack.c.l.b16 %v4938
        %v5086 = vunpack.c.l.b16 %v4939
        %v5087 = vunpack.c.l.b16 %v4940
        %v5088 = vunpack.c.l.b16 %v4941
        %v5089 = vunpack.c.l.b16 %v4942
        %v5090 = vunpack.c.l.b16 %v4943
        %v5091 = vunpack.c.l.b16 %v4944
        %v5092 = vunpack.c.l.b16 %v4945
        %v5093 = vunpack.c.l.b16 %v4946
        %v5094 = vunpack.c.l.b16 %v4947
        %v5095 = vunpack.c.l.b16 %v4948
        %v5096 = vunpack.c.l.b16 %v4949
        %v5097 = vunpack.c.l.b16 %v4950
        %v5098 = vunpack.c.l.b16 %v4951
        %v5099 = vunpack.c.l.b16 %v4952
        %v5100 = vunpack.c.l.b16 %v4953
        %v5101 = vunpack.c.l.b16 %v4954
        %v5102 = vunpack.c.l.b16 %v4955
        %v5103 = vunpack.c.l.b16 %v4956
        %v5104 = vunpack.c.l.b16 %v4957
        %v5105 = vunpack.c.l.b16 %v4958
        %v5106 = vunpack.c.l.b16 %v4959
        %v5107 = vunpack.c.l.b16 %v4960
        %v5108 = vunpack.c.l.b16 %v4961
        %v5109 = vunpack.c.l.b16 %v4962
        %v5110 = vunpack.c.l.b16 %v4963
        %v5111 = vunpack.c.l.b16 %v4964
        %v5112 = vunpack.c.l.b16 %v4965
        %v5113 = vunpack.c.l.b16 %v4966
        %v5114 = vunpack.c.l.b16 %v4967
        %v5115 = vunpack.c.l.b16 %v4968
        %v5116 = vunpack.c.l.b16 %v4969
        %v5117 = vunpack.c.l.b16 %v4970
        %v5118 = vunpack.c.l.b16 %v4971
        %v5119 = vunpack.c.l.b16 %v4972
        %v5120 = vunpack.c.l.b16 %v4973
        %v5121 = vunpack.c.l.b16 %v4974
        %v5122 = vunpack.c.l.b16 %v4975
        %v5123 = vunpack.c.l.b16 %v4976
        %v5124 = vunpack.c.l.b16 %v4977
        %v5125 = vunpack.c.l.b16 %v4978
        %v5126 = vunpack.c.l.b16 %v4979
        %v5127 = vunpack.c.l.b16 %v4980
        %v5128 = vunpack.c.l.b16 %v4981
        %v5129 = vunpack.c.l.b16 %v4982
        %v5130 = vunpack.c.l.b16 %v4983
        %v5131 = vunpack.c.l.b16 %v4984
        %v5132 = vunpack.c.l.b16 %v4985
        %v5133 = vunpack.c.l.b16 %v4986
        %v5134 = vunpack.c.l.b16 %v4987
        %v5135 = vunpack.c.l.b16 %v4988
        %v5136 = vunpack.c.l.b16 %v4989
        %v5137 = vunpack.c.l.b16 %v4990
        %v5138 = vpack.c.b16 %v5067, %v5066
        %v5139 = vpack.c.b16 %v5069, %v5068
        %v5140 = vpack.c.b16 %v5071, %v5070
        %v5141 = vpack.c.b16 %v5073, %v5072
        %v5142 = vpack.c.b16 %v5075, %v5074
        %v5143 = vpack.c.b16 %v5077, %v5076
        %v5144 = vpack.c.b16 %v5079, %v5078
        %v5145 = vpack.c.b16 %v5081, %v5080
        %v5146 = vpack.c.b16 %v5083, %v5082
        %v5147 = vpack.c.b16 %v5085, %v5084
        %v5148 = vpack.c.b16 %v5087, %v5086
        %v5149 = vpack.c.b16 %v5089, %v5088
        %v5150 = vpack.c.b16 %v5091, %v5090
        %v5151 = vpack.c.b16 %v5093, %v5092
        %v5152 = vpack.c.b16 %v5095, %v5094
        %v5153 = vpack.c.b16 %v5097, %v5096
        %v5154 = vpack.c.b16 %v5099, %v5098
        %v5155 = vpack.c.b16 %v5101, %v5100
        %v5156 = vpack.c.b16 %v5103, %v5102
        %v5157 = vpack.c.b16 %v5105, %v5104
        %v5158 = vpack.c.b16 %v5107, %v5106
        %v5159 = vpack.c.b16 %v5109, %v5108
        %v5160 = vpack.c.b16 %v5111, %v5110
        %v5161 = vpack.c.b16 %v5113, %v5112
        %v5162 = vpack.c.b16 %v5115, %v5114
        %v5163 = vpack.c.b16 %v5117, %v5116
        %v5164 = vpack.c.b16 %v5119, %v5118
        %v5165 = vpack.c.b16 %v5121, %v5120
        %v5166 = vpack.c.b16 %v5123, %v5122
        %v5167 = vpack.c.b16 %v5125, %v5124
        %v5168 = vpack.c.b16 %v5127, %v5126
        %v5169 = vpack.c.b16 %v5129, %v5128
        %v5170 = vpack.c.b16 %v5131, %v5130
        %v5171 = vpack.c.b16 %v5133, %v5132
        %v5172 = vpack.c.b16 %v5135, %v5134
        %v5173 = vpack.c.b16 %v5137, %v5136
        %v5210 = vsel %vm2345, %v4632, 0
        %v5212 = vsel %vm2345, %v4635, 0
        %v5214 = vsel %vm2345, %v4638, 0
        %v5216 = vsel %vm2345, %v4641, 0
        %v5218 = vsel %vm2345, %v4644, 0
        %v5220 = vsel %vm2345, %v4647, 0
        %v5222 = vsel %vm2345, %v4650, 0
        %v5224 = vsel %vm2345, %v4653, 0
        %v5226 = vsel %vm2345, %v4656, 0
        %v5228 = vsel %vm2345, %v4659, 0
        %v5230 = vsel %vm2345, %v4662, 0
        %v5232 = vsel %vm2345, %v4665, 0
        %v5234 = vsel %vm2345, %v4668, 0
        %v5236 = vsel %vm2345, %v4671, 0
        %v5239 = vsel %vm2345, %v4738, 0
        %v5241 = vsel %vm2345, %v2235, 0
        %5243 = vmatpush.bf16.msra.mxu0 %v5145
        %5244 = vmatpush.bf16.msra.mxu0 %v5144
        %5245 = vmatpush.bf16.msra.mxu0 %v5143
        %5246 = vmatpush.bf16.msra.mxu0 %v5142
        %5247 = vmatpush.bf16.msra.mxu0 %v5141
        %5248 = vmatpush.bf16.msra.mxu0 %v5140
        %5249 = vmatpush.bf16.msra.mxu0 %v5139
        %5250 = vmatpush.bf16.msra.mxu0 %v5138
        %5251 = vmatmul.bf16.gmra.mxu0 %v4673
        %v5252 = vpop.f32.mrf.mxu0
        %v5253 = vadd.f32 %v4992, %v5252
        %v5254 = vpop.f32.mrf.mxu0
        %v5255 = vadd.f32 %v4992, %v5254
        %5256 = vmatmul.bf16.gmra.mxu0 %v4676
        %v5257 = vpop.f32.mrf.mxu0
        %v5258 = vadd.f32 %v4992, %v5257
        %v5259 = vpop.f32.mrf.mxu0
        %v5260 = vadd.f32 %v4992, %v5259
        %5261 = vmatmul.bf16.gmra.mxu0 %v4679
        %v5262 = vpop.f32.mrf.mxu0
        %v5263 = vadd.f32 %v4992, %v5262
        %v5264 = vpop.f32.mrf.mxu0
        %v5265 = vadd.f32 %v4992, %v5264
        %5266 = vmatmul.bf16.gmra.mxu0 %v4682
        %v5267 = vpop.f32.mrf.mxu0
        %v5268 = vadd.f32 %v4992, %v5267
        %v5269 = vpop.f32.mrf.mxu0
        %v5270 = vadd.f32 %v4992, %v5269
        %5271 = vmatmul.bf16.gmra.mxu0 %v4685
        %v5272 = vpop.f32.mrf.mxu0
        %v5273 = vadd.f32 %v4992, %v5272
        %v5274 = vpop.f32.mrf.mxu0
        %v5275 = vadd.f32 %v4992, %v5274
        %5276 = vmatmul.bf16.gmra.mxu0 %v4688
        %v5277 = vpop.f32.mrf.mxu0
        %v5278 = vadd.f32 %v4992, %v5277
        %v5279 = vpop.f32.mrf.mxu0
        %v5280 = vadd.f32 %v4992, %v5279
        %5281 = vmatmul.bf16.gmra.mxu0 %v4691
        %v5282 = vpop.f32.mrf.mxu0
        %v5283 = vadd.f32 %v4992, %v5282
        %v5284 = vpop.f32.mrf.mxu0
        %v5285 = vadd.f32 %v4992, %v5284
        %5286 = vmatmul.bf16.gmra.mxu0 %v4694
        %v5287 = vpop.f32.mrf.mxu0
        %v5288 = vadd.f32 %v4992, %v5287
        %v5289 = vpop.f32.mrf.mxu0
        %v5290 = vadd.f32 %v4992, %v5289
        %5291 = vmatmul.bf16.gmra.mxu0 %v4697
        %v5292 = vpop.f32.mrf.mxu0
        %v5293 = vadd.f32 %v4992, %v5292
        %v5294 = vpop.f32.mrf.mxu0
        %v5295 = vadd.f32 %v4992, %v5294
        %5296 = vmatmul.bf16.gmra.mxu0 %v4700
        %v5297 = vpop.f32.mrf.mxu0
        %v5298 = vadd.f32 %v4992, %v5297
        %v5299 = vpop.f32.mrf.mxu0
        %v5300 = vadd.f32 %v4992, %v5299
        %5301 = vmatmul.bf16.gmra.mxu0 %v4703
        %v5302 = vpop.f32.mrf.mxu0
        %v5303 = vadd.f32 %v4992, %v5302
        %v5304 = vpop.f32.mrf.mxu0
        %v5305 = vadd.f32 %v4992, %v5304
        %5306 = vmatmul.bf16.gmra.mxu0 %v4706
        %v5307 = vpop.f32.mrf.mxu0
        %v5308 = vadd.f32 %v4992, %v5307
        %v5309 = vpop.f32.mrf.mxu0
        %v5310 = vadd.f32 %v4992, %v5309
        %5311 = vmatmul.bf16.gmra.mxu0 %v4709
        %v5312 = vpop.f32.mrf.mxu0
        %v5313 = vadd.f32 %v4992, %v5312
        %v5314 = vpop.f32.mrf.mxu0
        %v5315 = vadd.f32 %v4992, %v5314
        %5316 = vmatmul.bf16.gmra.mxu0 %v4712
        %v5317 = vpop.f32.mrf.mxu0
        %v5318 = vadd.f32 %v4992, %v5317
        %v5319 = vpop.f32.mrf.mxu0
        %v5320 = vadd.f32 %v4992, %v5319
        %5321 = vmatmul.bf16.gmra.mxu0 %v4715
        %v5322 = vpop.f32.mrf.mxu0
        %v5323 = vadd.f32 %v4992, %v5322
        %v5324 = vpop.f32.mrf.mxu0
        %v5325 = vadd.f32 %v4992, %v5324
        %5326 = vmatmul.bf16.gmra.mxu0 %v4718
        %v5327 = vpop.f32.mrf.mxu0
        %v5328 = vadd.f32 %v4992, %v5327
        %v5329 = vpop.f32.mrf.mxu0
        %v5330 = vadd.f32 %v4992, %v5329
        %5331 = vdwg.mxu0
        %5332 = vmatpush.bf16.msra.mxu0 %v5153
        %5333 = vmatpush.bf16.msra.mxu0 %v5152
        %5334 = vmatpush.bf16.msra.mxu0 %v5151
        %5335 = vmatpush.bf16.msra.mxu0 %v5150
        %5336 = vmatpush.bf16.msra.mxu0 %v5149
        %5337 = vmatpush.bf16.msra.mxu0 %v5148
        %5338 = vmatpush.bf16.msra.mxu0 %v5147
        %5339 = vmatpush.bf16.msra.mxu0 %v5146
        %5340 = vmatmul.bf16.gmra.mxu0 %v4857
        %v5341 = vpop.f32.mrf.mxu0
        %v5342 = vadd.f32 %v5253, %v5341
        %v5343 = vpop.f32.mrf.mxu0
        %v5344 = vadd.f32 %v5255, %v5343
        %5345 = vmatmul.bf16.gmra.mxu0 %v4861
        %v5346 = vpop.f32.mrf.mxu0
        %v5347 = vadd.f32 %v5258, %v5346
        %v5348 = vpop.f32.mrf.mxu0
        %v5349 = vadd.f32 %v5260, %v5348
        %5350 = vmatmul.bf16.gmra.mxu0 %v4865
        %v5351 = vpop.f32.mrf.mxu0
        %v5352 = vadd.f32 %v5263, %v5351
        %v5353 = vpop.f32.mrf.mxu0
        %v5354 = vadd.f32 %v5265, %v5353
        %5355 = vmatmul.bf16.gmra.mxu0 %v4869
        %v5356 = vpop.f32.mrf.mxu0
        %v5357 = vadd.f32 %v5268, %v5356
        %v5358 = vpop.f32.mrf.mxu0
        %v5359 = vadd.f32 %v5270, %v5358
        %5360 = vmatmul.bf16.gmra.mxu0 %v4873
        %v5361 = vpop.f32.mrf.mxu0
        %v5362 = vadd.f32 %v5273, %v5361
        %v5363 = vpop.f32.mrf.mxu0
        %v5364 = vadd.f32 %v5275, %v5363
        %5365 = vmatmul.bf16.gmra.mxu0 %v4877
        %v5366 = vpop.f32.mrf.mxu0
        %v5367 = vadd.f32 %v5278, %v5366
        %v5368 = vpop.f32.mrf.mxu0
        %v5369 = vadd.f32 %v5280, %v5368
        %5370 = vmatmul.bf16.gmra.mxu0 %v4881
        %v5371 = vpop.f32.mrf.mxu0
        %v5372 = vadd.f32 %v5283, %v5371
        %v5373 = vpop.f32.mrf.mxu0
        %v5374 = vadd.f32 %v5285, %v5373
        %5375 = vmatmul.bf16.gmra.mxu0 %v4885
        %v5376 = vpop.f32.mrf.mxu0
        %v5377 = vadd.f32 %v5288, %v5376
        %v5378 = vpop.f32.mrf.mxu0
        %v5379 = vadd.f32 %v5290, %v5378
        %5380 = vmatmul.bf16.gmra.mxu0 %v4889
        %v5381 = vpop.f32.mrf.mxu0
        %v5382 = vadd.f32 %v5293, %v5381
        %v5383 = vpop.f32.mrf.mxu0
        %v5384 = vadd.f32 %v5295, %v5383
        %5385 = vmatmul.bf16.gmra.mxu0 %v4893
        %v5386 = vpop.f32.mrf.mxu0
        %v5387 = vadd.f32 %v5298, %v5386
        %v5388 = vpop.f32.mrf.mxu0
        %v5389 = vadd.f32 %v5300, %v5388
        %5390 = vmatmul.bf16.gmra.mxu0 %v4897
        %v5391 = vpop.f32.mrf.mxu0
        %v5392 = vadd.f32 %v5303, %v5391
        %v5393 = vpop.f32.mrf.mxu0
        %v5394 = vadd.f32 %v5305, %v5393
        %5395 = vmatmul.bf16.gmra.mxu0 %v4901
        %v5396 = vpop.f32.mrf.mxu0
        %v5397 = vadd.f32 %v5308, %v5396
        %v5398 = vpop.f32.mrf.mxu0
        %v5399 = vadd.f32 %v5310, %v5398
        %5400 = vmatmul.bf16.gmra.mxu0 %v4905
        %v5401 = vpop.f32.mrf.mxu0
        %v5402 = vadd.f32 %v5313, %v5401
        %v5403 = vpop.f32.mrf.mxu0
        %v5404 = vadd.f32 %v5315, %v5403
        %5405 = vmatmul.bf16.gmra.mxu0 %v4909
        %v5406 = vpop.f32.mrf.mxu0
        %v5407 = vadd.f32 %v5318, %v5406
        %v5408 = vpop.f32.mrf.mxu0
        %v5409 = vadd.f32 %v5320, %v5408
        %5410 = vmatmul.bf16.gmra.mxu0 %v4913
        %v5411 = vpop.f32.mrf.mxu0
        %v5412 = vadd.f32 %v5323, %v5411
        %v5413 = vpop.f32.mrf.mxu0
        %v5414 = vadd.f32 %v5325, %v5413
        %5415 = vmatmul.bf16.gmra.mxu0 %v4917
        %v5416 = vpop.f32.mrf.mxu0
        %v5417 = vadd.f32 %v5328, %v5416
        %v5418 = vpop.f32.mrf.mxu0
        %v5419 = vadd.f32 %v5330, %v5418
        %5420 = vdwg.mxu0
        %5421 = vmatpush.bf16.msra.mxu0 %v5161
        %5422 = vmatpush.bf16.msra.mxu0 %v5160
        %5423 = vmatpush.bf16.msra.mxu0 %v5159
        %5424 = vmatpush.bf16.msra.mxu0 %v5158
        %5425 = vmatpush.bf16.msra.mxu0 %v5157
        %5426 = vmatpush.bf16.msra.mxu0 %v5156
        %5427 = vmatpush.bf16.msra.mxu0 %v5155
        %5428 = vmatpush.bf16.msra.mxu0 %v5154
        %5429 = vmatmul.bf16.gmra.mxu0 %v4823
        %v5430 = vpop.f32.mrf.mxu0
        %v5431 = vadd.f32 %v5342, %v5430
        %v5432 = vpop.f32.mrf.mxu0
        %v5433 = vadd.f32 %v5344, %v5432
        %5434 = vmatmul.bf16.gmra.mxu0 %v4824
        %v5435 = vpop.f32.mrf.mxu0
        %v5436 = vadd.f32 %v5347, %v5435
        %v5437 = vpop.f32.mrf.mxu0
        %v5438 = vadd.f32 %v5349, %v5437
        %5439 = vmatmul.bf16.gmra.mxu0 %v4825
        %v5440 = vpop.f32.mrf.mxu0
        %v5441 = vadd.f32 %v5352, %v5440
        %v5442 = vpop.f32.mrf.mxu0
        %v5443 = vadd.f32 %v5354, %v5442
        %5444 = vmatmul.bf16.gmra.mxu0 %v4826
        %v5445 = vpop.f32.mrf.mxu0
        %v5446 = vadd.f32 %v5357, %v5445
        %v5447 = vpop.f32.mrf.mxu0
        %v5448 = vadd.f32 %v5359, %v5447
        %5449 = vmatmul.bf16.gmra.mxu0 %v4827
        %v5450 = vpop.f32.mrf.mxu0
        %v5451 = vadd.f32 %v5362, %v5450
        %v5452 = vpop.f32.mrf.mxu0
        %v5453 = vadd.f32 %v5364, %v5452
        %5454 = vmatmul.bf16.gmra.mxu0 %v4828
        %v5455 = vpop.f32.mrf.mxu0
        %v5456 = vadd.f32 %v5367, %v5455
        %v5457 = vpop.f32.mrf.mxu0
        %v5458 = vadd.f32 %v5369, %v5457
        %5459 = vmatmul.bf16.gmra.mxu0 %v4829
        %v5460 = vpop.f32.mrf.mxu0
        %v5461 = vadd.f32 %v5372, %v5460
        %v5462 = vpop.f32.mrf.mxu0
        %v5463 = vadd.f32 %v5374, %v5462
        %5464 = vmatmul.bf16.gmra.mxu0 %v4830
        %v5465 = vpop.f32.mrf.mxu0
        %v5466 = vadd.f32 %v5377, %v5465
        %v5467 = vpop.f32.mrf.mxu0
        %v5468 = vadd.f32 %v5379, %v5467
        %5469 = vmatmul.bf16.gmra.mxu0 %v4831
        %v5470 = vpop.f32.mrf.mxu0
        %v5471 = vadd.f32 %v5382, %v5470
        %v5472 = vpop.f32.mrf.mxu0
        %v5473 = vadd.f32 %v5384, %v5472
        %5474 = vmatmul.bf16.gmra.mxu0 %v4832
        %v5475 = vpop.f32.mrf.mxu0
        %v5476 = vadd.f32 %v5387, %v5475
        %v5477 = vpop.f32.mrf.mxu0
        %v5478 = vadd.f32 %v5389, %v5477
        %5479 = vmatmul.bf16.gmra.mxu0 %v4833
        %v5480 = vpop.f32.mrf.mxu0
        %v5481 = vadd.f32 %v5392, %v5480
        %v5482 = vpop.f32.mrf.mxu0
        %v5483 = vadd.f32 %v5394, %v5482
        %5484 = vmatmul.bf16.gmra.mxu0 %v4834
        %v5485 = vpop.f32.mrf.mxu0
        %v5486 = vadd.f32 %v5397, %v5485
        %v5487 = vpop.f32.mrf.mxu0
        %v5488 = vadd.f32 %v5399, %v5487
        %5489 = vmatmul.bf16.gmra.mxu0 %v4835
        %v5490 = vpop.f32.mrf.mxu0
        %v5491 = vadd.f32 %v5402, %v5490
        %v5492 = vpop.f32.mrf.mxu0
        %v5493 = vadd.f32 %v5404, %v5492
        %5494 = vmatmul.bf16.gmra.mxu0 %v4836
        %v5495 = vpop.f32.mrf.mxu0
        %v5496 = vadd.f32 %v5407, %v5495
        %v5497 = vpop.f32.mrf.mxu0
        %v5498 = vadd.f32 %v5409, %v5497
        %5499 = vmatmul.bf16.gmra.mxu0 %v4837
        %v5500 = vpop.f32.mrf.mxu0
        %v5501 = vadd.f32 %v5412, %v5500
        %v5502 = vpop.f32.mrf.mxu0
        %v5503 = vadd.f32 %v5414, %v5502
        %5504 = vmatmul.bf16.gmra.mxu0 %v4838
        %v5505 = vpop.f32.mrf.mxu0
        %v5506 = vadd.f32 %v5417, %v5505
        %v5507 = vpop.f32.mrf.mxu0
        %v5508 = vadd.f32 %v5419, %v5507
        %5509 = vdwg.mxu0
        %5510 = vmatpush.bf16.msra.mxu0 %v5169
        %5511 = vmatpush.bf16.msra.mxu0 %v5168
        %5512 = vmatpush.bf16.msra.mxu0 %v5167
        %5513 = vmatpush.bf16.msra.mxu0 %v5166
        %5514 = vmatpush.bf16.msra.mxu0 %v5165
        %5515 = vmatpush.bf16.msra.mxu0 %v5164
        %5516 = vmatpush.bf16.msra.mxu0 %v5163
        %5517 = vmatpush.bf16.msra.mxu0 %v5162
        %5518 = vmatmul.bf16.gmra.mxu0 %v4679
        %v5519 = vpop.f32.mrf.mxu0
        %v5520 = vadd.f32 %v5431, %v5519
        %v5521 = vpop.f32.mrf.mxu0
        %v5522 = vadd.f32 %v5433, %v5521
        %5523 = vmatmul.bf16.gmra.mxu0 %v4682
        %v5524 = vpop.f32.mrf.mxu0
        %v5525 = vadd.f32 %v5436, %v5524
        %v5526 = vpop.f32.mrf.mxu0
        %v5527 = vadd.f32 %v5438, %v5526
        %5528 = vmatmul.bf16.gmra.mxu0 %v4685
        %v5529 = vpop.f32.mrf.mxu0
        %v5530 = vadd.f32 %v5441, %v5529
        %v5531 = vpop.f32.mrf.mxu0
        %v5532 = vadd.f32 %v5443, %v5531
        %5533 = vmatmul.bf16.gmra.mxu0 %v4688
        %v5534 = vpop.f32.mrf.mxu0
        %v5535 = vadd.f32 %v5446, %v5534
        %v5536 = vpop.f32.mrf.mxu0
        %v5537 = vadd.f32 %v5448, %v5536
        %5538 = vmatmul.bf16.gmra.mxu0 %v4691
        %v5539 = vpop.f32.mrf.mxu0
        %v5540 = vadd.f32 %v5451, %v5539
        %v5541 = vpop.f32.mrf.mxu0
        %v5542 = vadd.f32 %v5453, %v5541
        %5543 = vmatmul.bf16.gmra.mxu0 %v4694
        %v5544 = vpop.f32.mrf.mxu0
        %v5545 = vadd.f32 %v5456, %v5544
        %v5546 = vpop.f32.mrf.mxu0
        %v5547 = vadd.f32 %v5458, %v5546
        %5548 = vmatmul.bf16.gmra.mxu0 %v4697
        %v5549 = vpop.f32.mrf.mxu0
        %v5550 = vadd.f32 %v5461, %v5549
        %v5551 = vpop.f32.mrf.mxu0
        %v5552 = vadd.f32 %v5463, %v5551
        %5553 = vmatmul.bf16.gmra.mxu0 %v4700
        %v5554 = vpop.f32.mrf.mxu0
        %v5555 = vadd.f32 %v5466, %v5554
        %v5556 = vpop.f32.mrf.mxu0
        %v5557 = vadd.f32 %v5468, %v5556
        %5558 = vmatmul.bf16.gmra.mxu0 %v4703
        %v5559 = vpop.f32.mrf.mxu0
        %v5560 = vadd.f32 %v5471, %v5559
        %v5561 = vpop.f32.mrf.mxu0
        %v5562 = vadd.f32 %v5473, %v5561
        %5563 = vmatmul.bf16.gmra.mxu0 %v4706
        %v5564 = vpop.f32.mrf.mxu0
        %v5565 = vadd.f32 %v5476, %v5564
        %v5566 = vpop.f32.mrf.mxu0
        %v5567 = vadd.f32 %v5478, %v5566
        %5568 = vmatmul.bf16.gmra.mxu0 %v4709
        %v5569 = vpop.f32.mrf.mxu0
        %v5570 = vadd.f32 %v5481, %v5569
        %v5571 = vpop.f32.mrf.mxu0
        %v5572 = vadd.f32 %v5483, %v5571
        %5573 = vmatmul.bf16.gmra.mxu0 %v4712
        %v5574 = vpop.f32.mrf.mxu0
        %v5575 = vadd.f32 %v5486, %v5574
        %v5576 = vpop.f32.mrf.mxu0
        %v5577 = vadd.f32 %v5488, %v5576
        %5578 = vmatmul.bf16.gmra.mxu0 %v4715
        %v5579 = vpop.f32.mrf.mxu0
        %v5580 = vadd.f32 %v5491, %v5579
        %v5581 = vpop.f32.mrf.mxu0
        %v5582 = vadd.f32 %v5493, %v5581
        %5583 = vmatmul.bf16.gmra.mxu0 %v4718
        %v5584 = vpop.f32.mrf.mxu0
        %v5585 = vadd.f32 %v5496, %v5584
        %v5586 = vpop.f32.mrf.mxu0
        %v5587 = vadd.f32 %v5498, %v5586
        %5588 = vmatmul.bf16.gmra.mxu0 %v4740
        %v5589 = vpop.f32.mrf.mxu0
        %v5590 = vadd.f32 %v5501, %v5589
        %v5591 = vpop.f32.mrf.mxu0
        %v5592 = vadd.f32 %v5503, %v5591
        %5593 = vmatmul.bf16.gmra.mxu0 %v4673
        %v5594 = vpop.f32.mrf.mxu0
        %v5595 = vadd.f32 %v5506, %v5594
        %v5596 = vpop.f32.mrf.mxu0
        %v5597 = vadd.f32 %v5508, %v5596
        %5598 = vdwg.mxu0
        %5599 = vmatpush.bf16.msra.mxu0 0
        %5600 = vmatpush.bf16.msra.mxu0 0
        %5601 = vmatpush.bf16.msra.mxu0 0
        %5602 = vmatpush.bf16.msra.mxu0 0
        %5603 = vmatpush.bf16.msra.mxu0 %v5173
        %5604 = vmatpush.bf16.msra.mxu0 %v5172
        %5605 = vmatpush.bf16.msra.mxu0 %v5171
        %5606 = vmatpush.bf16.msra.mxu0 %v5170
        %5607 = vmatmul.bf16.gmra.mxu0 %v5210
        %v5608 = vpop.f32.mrf.mxu0
        %v5609 = vadd.f32 %v5520, %v5608
        %v5610 = vpop.f32.mrf.mxu0
        %v5611 = vadd.f32 %v5522, %v5610
        %5612 = vmatmul.bf16.gmra.mxu0 %v5212
        %v5613 = vpop.f32.mrf.mxu0
        %v5614 = vadd.f32 %v5525, %v5613
        %v5615 = vpop.f32.mrf.mxu0
        %v5616 = vadd.f32 %v5527, %v5615
        %5617 = vmatmul.bf16.gmra.mxu0 %v5214
        %v5618 = vpop.f32.mrf.mxu0
        %v5619 = vadd.f32 %v5530, %v5618
        %v5620 = vpop.f32.mrf.mxu0
        %v5621 = vadd.f32 %v5532, %v5620
        %5622 = vmatmul.bf16.gmra.mxu0 %v5216
        %v5623 = vpop.f32.mrf.mxu0
        %v5624 = vadd.f32 %v5535, %v5623
        %v5625 = vpop.f32.mrf.mxu0
        %v5626 = vadd.f32 %v5537, %v5625
        %5627 = vmatmul.bf16.gmra.mxu0 %v5218
        %v5628 = vpop.f32.mrf.mxu0
        %v5629 = vadd.f32 %v5540, %v5628
        %v5630 = vpop.f32.mrf.mxu0
        %v5631 = vadd.f32 %v5542, %v5630
        %5632 = vmatmul.bf16.gmra.mxu0 %v5220
        %v5633 = vpop.f32.mrf.mxu0
        %v5634 = vadd.f32 %v5545, %v5633
        %v5635 = vpop.f32.mrf.mxu0
        %v5636 = vadd.f32 %v5547, %v5635
        %5637 = vmatmul.bf16.gmra.mxu0 %v5222
        %v5638 = vpop.f32.mrf.mxu0
        %v5639 = vadd.f32 %v5550, %v5638
        %v5640 = vpop.f32.mrf.mxu0
        %v5641 = vadd.f32 %v5552, %v5640
        %5642 = vmatmul.bf16.gmra.mxu0 %v5224
        %v5643 = vpop.f32.mrf.mxu0
        %v5644 = vadd.f32 %v5555, %v5643
        %v5645 = vpop.f32.mrf.mxu0
        %v5646 = vadd.f32 %v5557, %v5645
        %5647 = vmatmul.bf16.gmra.mxu0 %v5226
        %v5648 = vpop.f32.mrf.mxu0
        %v5649 = vadd.f32 %v5560, %v5648
        %v5650 = vpop.f32.mrf.mxu0
        %v5651 = vadd.f32 %v5562, %v5650
        %5652 = vmatmul.bf16.gmra.mxu0 %v5228
        %v5653 = vpop.f32.mrf.mxu0
        %v5654 = vadd.f32 %v5565, %v5653
        %v5655 = vpop.f32.mrf.mxu0
        %v5656 = vadd.f32 %v5567, %v5655
        %5657 = vmatmul.bf16.gmra.mxu0 %v5230
        %v5658 = vpop.f32.mrf.mxu0
        %v5659 = vadd.f32 %v5570, %v5658
        %v5660 = vpop.f32.mrf.mxu0
        %v5661 = vadd.f32 %v5572, %v5660
        %5662 = vmatmul.bf16.gmra.mxu0 %v5232
        %v5663 = vpop.f32.mrf.mxu0
        %v5664 = vadd.f32 %v5575, %v5663
        %v5665 = vpop.f32.mrf.mxu0
        %v5666 = vadd.f32 %v5577, %v5665
        %5667 = vmatmul.bf16.gmra.mxu0 %v5234
        %v5668 = vpop.f32.mrf.mxu0
        %v5669 = vadd.f32 %v5580, %v5668
        %v5670 = vpop.f32.mrf.mxu0
        %v5671 = vadd.f32 %v5582, %v5670
        %5672 = vmatmul.bf16.gmra.mxu0 %v5236
        %v5673 = vpop.f32.mrf.mxu0
        %v5674 = vadd.f32 %v5585, %v5673
        %v5675 = vpop.f32.mrf.mxu0
        %v5676 = vadd.f32 %v5587, %v5675
        %5677 = vmatmul.bf16.gmra.mxu0 %v5239
        %v5678 = vpop.f32.mrf.mxu0
        %v5679 = vadd.f32 %v5590, %v5678
        %v5680 = vpop.f32.mrf.mxu0
        %v5681 = vadd.f32 %v5592, %v5680
        %5682 = vmatmul.bf16.gmra.mxu0 %v5241
        %v5683 = vpop.f32.mrf.mxu0
        %v5684 = vadd.f32 %v5595, %v5683
        %v5685 = vpop.f32.mrf.mxu0
        %v5686 = vadd.f32 %v5597, %v5685
        %5687 = vdwg.mxu0
        %v5688 = vld [vmem:[%s14] sm:$0xf]
        %v5689 = vld [vmem:[%s14 + $0x4] sm:$0xf]
        %v5690 = vld [vmem:[%s14 + $0x8] sm:$0xf]
        %v5691 = vld [vmem:[%s14 + $0xc] sm:$0xf]
        %v5692 = vld [vmem:[%s15] sm:$0x1]
        %v5694 = vperm.slane %v5692, 0
        %v5728 = vunpack.c.l.b16 %v574
        %v5729 = vunpack.c.l.b16 %v575
        %v5730 = vunpack.c.l.b16 %v576
        %v5731 = vunpack.c.l.b16 %v577
        %v5732 = vunpack.c.l.b16 %v578
        %v5733 = vunpack.c.l.b16 %v579
        %v5734 = vunpack.c.l.b16 %v580
        %v5735 = vunpack.c.l.b16 %v581
        %v5736 = vunpack.c.l.b16 %v582
        %v5737 = vunpack.c.l.b16 %v583
        %v5738 = vunpack.c.l.b16 %v584
        %v5739 = vunpack.c.l.b16 %v585
        %v5740 = vunpack.c.l.b16 %v586
        %v5741 = vunpack.c.l.b16 %v587
        %v5742 = vunpack.c.l.b16 %v588
        %v5743 = vunpack.c.l.b16 %v589
        %v5744 = vunpack.c.l.b16 %v590
        %v5745 = vunpack.c.l.b16 %v591
        %v5746 = vunpack.c.l.b16 %v592
        %v5747 = vunpack.c.l.b16 %v593
        %v5748 = vunpack.c.l.b16 %v594
        %v5749 = vunpack.c.l.b16 %v595
        %v5750 = vunpack.c.l.b16 %v596
        %v5751 = vunpack.c.l.b16 %v597
        %v5752 = vunpack.c.l.b16 %v598
        %v5753 = vunpack.c.l.b16 %v599
        %v5754 = vunpack.c.l.b16 %v600
        %v5755 = vunpack.c.l.b16 %v601
        %v5756 = vunpack.c.l.b16 %v602
        %v5757 = vunpack.c.l.b16 %v603
        %v5758 = vunpack.c.l.b16 %v604
        %v5759 = vunpack.c.l.b16 %v605
        %v5760 = vpack.c.b16 %v5729, %v5728
        %v5761 = vpack.c.b16 %v5731, %v5730
        %v5762 = vpack.c.b16 %v5733, %v5732
        %v5763 = vpack.c.b16 %v5735, %v5734
        %v5764 = vpack.c.b16 %v5737, %v5736
        %v5765 = vpack.c.b16 %v5739, %v5738
        %v5766 = vpack.c.b16 %v5741, %v5740
        %v5767 = vpack.c.b16 %v5743, %v5742
        %v5768 = vpack.c.b16 %v5745, %v5744
        %v5769 = vpack.c.b16 %v5747, %v5746
        %v5770 = vpack.c.b16 %v5749, %v5748
        %v5771 = vpack.c.b16 %v5751, %v5750
        %v5772 = vpack.c.b16 %v5753, %v5752
        %v5773 = vpack.c.b16 %v5755, %v5754
        %v5774 = vpack.c.b16 %v5757, %v5756
        %v5775 = vpack.c.b16 %v5759, %v5758
        %v5780 = vunpack.c.l.b16 %v5688
        %v5781 = vunpack.c.l.b16 %v5689
        %v5782 = vunpack.c.l.b16 %v5690
        %v5783 = vunpack.c.l.b16 %v5691
        %v5784 = vpack.c.b16 %v5781, %v5780
        %v5785 = vpack.c.b16 %v5783, %v5782
        %v5789 = vsel %vm648, %v5760, 0
        %v5792 = vsel %vm648, %v5761, 0
        %v5795 = vsel %vm648, %v5762, 0
        %v5798 = vsel %vm648, %v5763, 0
        %v5801 = vsel %vm648, %v5764, 0
        %v5804 = vsel %vm648, %v5765, 0
        %v5807 = vsel %vm648, %v5766, 0
        %v5810 = vsel %vm648, %v5767, 0
        %v5813 = vsel %vm648, %v5768, 0
        %v5816 = vsel %vm648, %v5769, 0
        %v5819 = vsel %vm648, %v5770, 0
        %v5822 = vsel %vm648, %v5771, 0
        %v5825 = vsel %vm648, %v5772, 0
        %v5828 = vsel %vm648, %v5773, 0
        %v5831 = vsel %vm648, %v5774, 0
        %v5834 = vsel %vm648, %v5775, 0
        %5836 = vmatpush.bf16.msra.mxu0 0
        %5837 = vmatpush.bf16.msra.mxu0 0
        %5838 = vmatpush.bf16.msra.mxu0 0
        %5839 = vmatpush.bf16.msra.mxu0 0
        %5840 = vmatpush.bf16.msra.mxu0 0
        %5841 = vmatpush.bf16.msra.mxu0 0
        %5842 = vmatpush.bf16.msra.mxu0 %v5785
        %5843 = vmatpush.bf16.msra.mxu0 %v5784
        %5844 = vmatmul.bf16.gmra.mxu0 %v5789
        %v5845 = vpop.f32.mrf.mxu0
        %v5846 = vadd.f32 %v5694, %v5845
        %v5847 = vpop.f32.mrf.mxu0
        %v5848 = vadd.f32 %v5694, %v5847
        %5849 = vmatmul.bf16.gmra.mxu0 %v5792
        %v5850 = vpop.f32.mrf.mxu0
        %v5851 = vadd.f32 %v5694, %v5850
        %v5852 = vpop.f32.mrf.mxu0
        %v5853 = vadd.f32 %v5694, %v5852
        %5854 = vmatmul.bf16.gmra.mxu0 %v5795
        %v5855 = vpop.f32.mrf.mxu0
        %v5856 = vadd.f32 %v5694, %v5855
        %v5857 = vpop.f32.mrf.mxu0
        %v5858 = vadd.f32 %v5694, %v5857
        %5859 = vmatmul.bf16.gmra.mxu0 %v5798
        %v5860 = vpop.f32.mrf.mxu0
        %v5861 = vadd.f32 %v5694, %v5860
        %v5862 = vpop.f32.mrf.mxu0
        %v5863 = vadd.f32 %v5694, %v5862
        %5864 = vmatmul.bf16.gmra.mxu0 %v5801
        %v5865 = vpop.f32.mrf.mxu0
        %v5866 = vadd.f32 %v5694, %v5865
        %v5867 = vpop.f32.mrf.mxu0
        %v5868 = vadd.f32 %v5694, %v5867
        %5869 = vmatmul.bf16.gmra.mxu0 %v5804
        %v5870 = vpop.f32.mrf.mxu0
        %v5871 = vadd.f32 %v5694, %v5870
        %v5872 = vpop.f32.mrf.mxu0
        %v5873 = vadd.f32 %v5694, %v5872
        %5874 = vmatmul.bf16.gmra.mxu0 %v5807
        %v5875 = vpop.f32.mrf.mxu0
        %v5876 = vadd.f32 %v5694, %v5875
        %v5877 = vpop.f32.mrf.mxu0
        %v5878 = vadd.f32 %v5694, %v5877
        %5879 = vmatmul.bf16.gmra.mxu0 %v5810
        %v5880 = vpop.f32.mrf.mxu0
        %v5881 = vadd.f32 %v5694, %v5880
        %v5882 = vpop.f32.mrf.mxu0
        %v5883 = vadd.f32 %v5694, %v5882
        %5884 = vmatmul.bf16.gmra.mxu0 %v5813
        %v5885 = vpop.f32.mrf.mxu0
        %v5886 = vadd.f32 %v5694, %v5885
        %v5887 = vpop.f32.mrf.mxu0
        %v5888 = vadd.f32 %v5694, %v5887
        %5889 = vmatmul.bf16.gmra.mxu0 %v5816
        %v5890 = vpop.f32.mrf.mxu0
        %v5891 = vadd.f32 %v5694, %v5890
        %v5892 = vpop.f32.mrf.mxu0
        %v5893 = vadd.f32 %v5694, %v5892
        %5894 = vmatmul.bf16.gmra.mxu0 %v5819
        %v5895 = vpop.f32.mrf.mxu0
        %v5896 = vadd.f32 %v5694, %v5895
        %v5897 = vpop.f32.mrf.mxu0
        %v5898 = vadd.f32 %v5694, %v5897
        %5899 = vmatmul.bf16.gmra.mxu0 %v5822
        %v5900 = vpop.f32.mrf.mxu0
        %v5901 = vadd.f32 %v5694, %v5900
        %v5902 = vpop.f32.mrf.mxu0
        %v5903 = vadd.f32 %v5694, %v5902
        %5904 = vmatmul.bf16.gmra.mxu0 %v5825
        %v5905 = vpop.f32.mrf.mxu0
        %v5906 = vadd.f32 %v5694, %v5905
        %v5907 = vpop.f32.mrf.mxu0
        %v5908 = vadd.f32 %v5694, %v5907
        %5909 = vmatmul.bf16.gmra.mxu0 %v5828
        %v5910 = vpop.f32.mrf.mxu0
        %v5911 = vadd.f32 %v5694, %v5910
        %v5912 = vpop.f32.mrf.mxu0
        %v5913 = vadd.f32 %v5694, %v5912
        %5914 = vmatmul.bf16.gmra.mxu0 %v5831
        %v5915 = vpop.f32.mrf.mxu0
        %v5916 = vadd.f32 %v5694, %v5915
        %v5917 = vpop.f32.mrf.mxu0
        %v5918 = vadd.f32 %v5694, %v5917
        %5919 = vmatmul.bf16.gmra.mxu0 %v5834
        %v5920 = vpop.f32.mrf.mxu0
        %v5921 = vadd.f32 %v5694, %v5920
        %v5922 = vpop.f32.mrf.mxu0
        %v5923 = vadd.f32 %v5694, %v5922
        %5924 = vdwg.mxu0
        %v5925 = vadd.f32 %v5609, %v5846
        %v5926 = vadd.f32 %v5611, %v5848
        %v5927 = vadd.f32 %v5614, %v5851
        %v5928 = vadd.f32 %v5616, %v5853
        %v5929 = vadd.f32 %v5619, %v5856
        %v5930 = vadd.f32 %v5621, %v5858
        %v5931 = vadd.f32 %v5624, %v5861
        %v5932 = vadd.f32 %v5626, %v5863
        %v5933 = vadd.f32 %v5629, %v5866
        %v5934 = vadd.f32 %v5631, %v5868
        %v5935 = vadd.f32 %v5634, %v5871
        %v5936 = vadd.f32 %v5636, %v5873
        %v5937 = vadd.f32 %v5639, %v5876
        %v5938 = vadd.f32 %v5641, %v5878
        %v5939 = vadd.f32 %v5644, %v5881
        %v5940 = vadd.f32 %v5646, %v5883
        %v5941 = vadd.f32 %v5649, %v5886
        %v5942 = vadd.f32 %v5651, %v5888
        %v5943 = vadd.f32 %v5654, %v5891
        %v5944 = vadd.f32 %v5656, %v5893
        %v5945 = vadd.f32 %v5659, %v5896
        %v5946 = vadd.f32 %v5661, %v5898
        %v5947 = vadd.f32 %v5664, %v5901
        %v5948 = vadd.f32 %v5666, %v5903
        %v5949 = vadd.f32 %v5669, %v5906
        %v5950 = vadd.f32 %v5671, %v5908
        %v5951 = vadd.f32 %v5674, %v5911
        %v5952 = vadd.f32 %v5676, %v5913
        %v5953 = vadd.f32 %v5679, %v5916
        %v5954 = vadd.f32 %v5681, %v5918
        %v5955 = vadd.f32 %v5684, %v5921
        %v5956 = vadd.f32 %v5686, %v5923
        %v5957 = vpack.c.bf16 %v5925, %v5925
        %v5958 = vpack.c.bf16 %v5926, %v5926
        %v5959 = vpack.c.bf16 %v5927, %v5927
        %v5960 = vpack.c.bf16 %v5928, %v5928
        %v5961 = vpack.c.bf16 %v5929, %v5929
        %v5962 = vpack.c.bf16 %v5930, %v5930
        %v5963 = vpack.c.bf16 %v5931, %v5931
        %v5964 = vpack.c.bf16 %v5932, %v5932
        %v5965 = vpack.c.bf16 %v5933, %v5933
        %v5966 = vpack.c.bf16 %v5934, %v5934
        %v5967 = vpack.c.bf16 %v5935, %v5935
        %v5968 = vpack.c.bf16 %v5936, %v5936
        %v5969 = vpack.c.bf16 %v5937, %v5937
        %v5970 = vpack.c.bf16 %v5938, %v5938
        %v5971 = vpack.c.bf16 %v5939, %v5939
        %v5972 = vpack.c.bf16 %v5940, %v5940
        %v5973 = vpack.c.bf16 %v5941, %v5941
        %v5974 = vpack.c.bf16 %v5942, %v5942
        %v5975 = vpack.c.bf16 %v5943, %v5943
        %v5976 = vpack.c.bf16 %v5944, %v5944
        %v5977 = vpack.c.bf16 %v5945, %v5945
        %v5978 = vpack.c.bf16 %v5946, %v5946
        %v5979 = vpack.c.bf16 %v5947, %v5947
        %v5980 = vpack.c.bf16 %v5948, %v5948
        %v5981 = vpack.c.bf16 %v5949, %v5949
        %v5982 = vpack.c.bf16 %v5950, %v5950
        %v5983 = vpack.c.bf16 %v5951, %v5951
        %v5984 = vpack.c.bf16 %v5952, %v5952
        %v5985 = vpack.c.bf16 %v5953, %v5953
        %v5986 = vpack.c.bf16 %v5954, %v5954
        %v5987 = vpack.c.bf16 %v5955, %v5955
        %v5988 = vpack.c.bf16 %v5956, %v5956
        %5989 = vst [vmem:[%s569] sm:$0xf] %v5957
        %5990 = vst [vmem:[%s569 + $0x4] sm:$0xf] %v5958
        %5991 = vst [vmem:[%s569 + $0x8] sm:$0xf] %v5959
        %5992 = vst [vmem:[%s569 + $0xc] sm:$0xf] %v5960
        %5993 = vst [vmem:[%s569 + $0x10] sm:$0xf] %v5961
        %5994 = vst [vmem:[%s569 + $0x14] sm:$0xf] %v5962
        %5995 = vst [vmem:[%s569 + $0x18] sm:$0xf] %v5963
        %5996 = vst [vmem:[%s569 + $0x1c] sm:$0xf] %v5964
        %5997 = vst [vmem:[%s569 + $0x20] sm:$0xf] %v5965
        %5998 = vst [vmem:[%s569 + $0x24] sm:$0xf] %v5966
        %5999 = vst [vmem:[%s569 + $0x28] sm:$0xf] %v5967
        %6000 = vst [vmem:[%s569 + $0x2c] sm:$0xf] %v5968
        %6001 = vst [vmem:[%s569 + $0x30] sm:$0xf] %v5969
        %6002 = vst [vmem:[%s569 + $0x34] sm:$0xf] %v5970
        %6003 = vst [vmem:[%s569 + $0x38] sm:$0xf] %v5971
        %6004 = vst [vmem:[%s569 + $0x3c] sm:$0xf] %v5972
        %6005 = vst [vmem:[%s569 + $0x40] sm:$0xf] %v5973
        %6006 = vst [vmem:[%s569 + $0x44] sm:$0xf] %v5974
        %6007 = vst [vmem:[%s569 + $0x48] sm:$0xf] %v5975
        %6008 = vst [vmem:[%s569 + $0x4c] sm:$0xf] %v5976
        %6009 = vst [vmem:[%s569 + $0x50] sm:$0xf] %v5977
        %6010 = vst [vmem:[%s569 + $0x54] sm:$0xf] %v5978
        %6011 = vst [vmem:[%s569 + $0x58] sm:$0xf] %v5979
        %6012 = vst [vmem:[%s569 + $0x5c] sm:$0xf] %v5980
        %6013 = vst [vmem:[%s569 + $0x60] sm:$0xf] %v5981
        %6014 = vst [vmem:[%s569 + $0x64] sm:$0xf] %v5982
        %6015 = vst [vmem:[%s569 + $0x68] sm:$0xf] %v5983
        %6016 = vst [vmem:[%s569 + $0x6c] sm:$0xf] %v5984
        %6017 = vst [vmem:[%s569 + $0x70] sm:$0xf] %v5985
        %6018 = vst [vmem:[%s569 + $0x74] sm:$0xf] %v5986
        %6019 = vst [vmem:[%s569 + $0x78] sm:$0xf] %v5987
        %6020 = vst [vmem:[%s569 + $0x7c] sm:$0xf] %v5988
        %s6021 = sand.u32 %s388, 1
        %s6022 = scalar_lea.sflag [#allocation4], %s6021
        %s6023 = sand.u32 %s388, 1
        %s6024 = smul.addr %s6023, 128
        %s6025 = scalar_lea.vmem [#allocation7], %s6024
        // Predicated region
        $region93: #{tpu_custom_call.1} parent=83 // pred_check
          %p6026 = pneg %p398
        $region94: #{tpu_custom_call.1} parent=83 // pred_check_branch
          %6028 = sbr.rel (%p6026) target = $region96
        $region95: #{tpu_custom_call.1} parent=83 // pred_region
          %6030 = vsyncadd %s6022, 0
          %s6031 = smul.addr %s34, 32
          %s6032 = smul.addr %s6031, 4
          %s6033 = scalar_lea.hbm %s16, %s6032
          %s6034 = sshll.u32 %s6025, 4
          %s6035 = int_to_ptr.vmem [resolvable:$true] %s6034
          %s6036 = sshll.u32 %s6033, 4
          %s6037 = int_to_ptr.hbm [resolvable:$true] %s6036
          %6042 = dma.vmem_to_hbm [thread:$0]  %s6035, 2048, %s6037, %s6022, 64, 64, 4
        $region96: #{tpu_custom_call.1} parent=83 // pred_fallthru
          _
      $region84: #{tpu_custom_call.1} parent=5 // pred_fallthru
        _
      %p6043 = scmp.le.s32.totalorder 2, %s29
      // Predicated region
      $region97: #{tpu_custom_call.1} parent=5 // pred_check
        %p6044 = pneg %p6043
      $region98: #{tpu_custom_call.1} parent=5 // pred_check_branch
        %6046 = sbr.rel (%p6044) target = $region100
      $region99: #{tpu_custom_call.1} parent=5 // pred_region
        %s6047 = ssub.s32 %s29, 2
        // Predicated region
        $region101: #{tpu_custom_call.1} parent=99 // pred_check
          %p6048 = pneg %p404
        $region102: #{tpu_custom_call.1} parent=99 // pred_check_branch
          %6050 = sbr.rel (%p6048) target = $region104
        $region103: #{tpu_custom_call.1} parent=99 // pred_region
          %s6051 = sand.u32 %s389, 1
          %s6052 = scalar_lea.sflag [#allocation4], %s6051
          %s6053 = sand.u32 %s389, 1
          %s6054 = smul.addr %s6053, 128
          %s6055 = scalar_lea.vmem [#allocation7], %s6054
          %6057 = dma.done %s6052, 2048
        $region104: #{tpu_custom_call.1} parent=99 // pred_fallthru
          _
      $region100: #{tpu_custom_call.1} parent=5 // pred_fallthru
        _
    $region6: #{tpu_custom_call.1} parent=1 // loop_footer
      %s33 = sadd.s32 1, %s29
    $region7: #{tpu_custom_call.1} parent=1 // loop_footer_branch
      %28 = sbr.rel target = $region3
    $region8: #{tpu_custom_call.1} parent=1 // loop_exit
      _
    %6058 = vsyncpa [#allocation3], 1
    %s6059 = scalar_lea.sflag [#allocation3], 1
    %6060 = vsyncpa %s6059, 1
    %6061 = vsyncpa [#allocation6], 1
    %6062 = vsyncpa [#allocation4], 1
    %s6063 = scalar_lea.sflag [#allocation4], 1
    %6064 = vsyncpa %s6063, 1

</llo_original>
